<compile_context>
chip_gen: v7x
topology: tpu7x:2x2x1
jax: 0.10.0
libtpu: 0.0.40
codegen_flags: <defaults>
</compile_context>

<pallas_src>
import numpy as np
import jax
import jax.numpy as jnp
from jax import lax
from jax.experimental import pallas as pl
from jax.experimental.pallas import tpu as pltpu


# ----------------------------------------------------------------------------
# Fused ResnetBlock kernel (one image per grid step, everything in VMEM)
# ----------------------------------------------------------------------------
def _make_resnet_block_kernel(C, H, W):
    Hd, Wd = H // 2, W // 2                  # spatial after stride-2 Downsample
    Hp0, Wp0 = H + 2, W + 2                  # zero-padded full-res grid
    Hp1, Wp1 = Hd + 2, Wd + 2                # zero-padded half-res grid
    L0, L1 = Hp0 * Wp0, Hp1 * Wp1            # flattened padded sizes
    M0, M1 = Wp0 + 1, Wp1 + 1                # scratch margins = max |tap shift|
    S_out = Hd * Wd                          # lane-dense output width (multiple of 128)

    def conv3x3_flat(pad_ref, col_ref, w_flat, b, Wp, L, M):
        """3x3 'same' conv in padded-flat coords: im2col + ONE (C,9C)@(9C,L) matmul."""
        for kh in range(3):
            for kw in range(3):
                d = (kh - 1) * Wp + (kw - 1)
                tap = kh * 3 + kw
                # Unit-stride, lane-offset shifted view of the padded-flat activation.
                col_ref[tap * C:(tap + 1) * C, :L] = pad_ref[:, M + d:M + d + L]
        return jnp.dot(w_flat, col_ref[:, :L],
                       preferred_element_type=jnp.float32) + b

    def kernel(x_ref, w_ref, b_ref, sel_ref, crop_ref, mask_ref, o_ref,
               xpad, apad0, apad1, hpad, col):
        # Zero-init padded scratches (margins + padding rings must be exact zeros).
        xpad[...] = jnp.zeros_like(xpad)
        apad0[...] = jnp.zeros_like(apad0)
        apad1[...] = jnp.zeros_like(apad1)
        hpad[...] = jnp.zeros_like(hpad)

        # In-kernel zero padding: embed the raw (C, H, W) image into padded-flat coords.
        for row in range(H):
            base = M0 + (row + 1) * Wp0 + 1
            xpad[:, base:base + W] = x_ref[0, :, row, :]

        mask = mask_ref[...]                                  # (1, L1) interior mask

        # --- Downsample: 3x3 conv, stride 2.  Stride-1 conv in flat coords, then one
        #     selection matmul subsamples every other pixel AND re-embeds the result in
        #     the zero-padded half-res layout (zero columns build the next ring for free).
        full = conv3x3_flat(xpad, col, w_ref[0], b_ref[0], Wp0, L0, M0)        # (C, L0)
        a0 = jnp.dot(full, sel_ref[...], preferred_element_type=jnp.float32)   # (C, L1)
        apad0[:, M1:M1 + L1] = a0

        # --- in_conv (exists because sk == False) ---
        a1 = conv3x3_flat(apad0, col, w_ref[1], b_ref[1], Wp1, L1, M1) * mask
        apad1[:, M1:M1 + L1] = a1

        # --- block1 + fused ReLU ---
        h1 = conv3x3_flat(apad1, col, w_ref[2], b_ref[2], Wp1, L1, M1)
        h1 = jnp.maximum(h1, 0.0) * mask
        hpad[:, M1:M1 + L1] = h1

        # --- block2(h1) + skep(a1) residual (a1 is x-after-in_conv, as in PyTorch) ---
        h2 = conv3x3_flat(hpad, col, w_ref[3], b_ref[3], Wp1, L1, M1)
        sk = conv3x3_flat(apad1, col, w_ref[4], b_ref[4], Wp1, L1, M1)
        res = h2 + sk                                         # (C, L1); ring cropped below

        # --- crop the padding ring -> lane-dense (C, Hd*Wd) output slab ---
        o_ref[0] = jnp.dot(res, crop_ref[...],
                           preferred_element_type=jnp.float32).astype(o_ref.dtype)

    dims = dict(Hd=Hd, Wd=Wd, Wp0=Wp0, Wp1=Wp1, L0=L0, L1=L1, M0=M0, M1=M1, S_out=S_out)
    return kernel, dims


def _build_constants(dims):
    """0/1 selection matrices + interior mask (shape-only constants, built once)."""
    Hd, Wd = dims["Hd"], dims["Wd"]
    Wp0, Wp1, L0, L1 = dims["Wp0"], dims["Wp1"], dims["L0"], dims["L1"]

    sel = np.zeros((L0, L1), np.float32)        # stride-2 subsample + re-embed w/ zero ring
    crop = np.zeros((L1, Hd * Wd), np.float32)  # drop the padding ring (lane-dense output)
    mask = np.zeros((1, L1), np.float32)        # interior mask of the half-res padded grid
    for h in range(Hd):
        for w in range(Wd):
            q = (h + 1) * Wp1 + (w + 1)                         # padded half-res position
            sel[(2 * h + 1) * Wp0 + (2 * w + 1), q] = 1.0       # full-res even pixel
            crop[q, h * Wd + w] = 1.0
            mask[0, q] = 1.0
    return jnp.asarray(sel), jnp.asarray(crop), jnp.asarray(mask)


def resnet_block_forward(x_nchw, params):
    """Fused ResnetBlock forward (down=True, sk=False, use_conv=True, ksize=3).

    x_nchw: (N, C, H, W) f32 with H, W even. params: PyTorch-layout OIHW weights/biases
    {down,in,b1,b2,sk}_{w,b}. Returns (N, C, H//2, W//2).
    """
    N, C, H, W = x_nchw.shape
    assert H % 2 == 0 and W % 2 == 0
    kernel, d = _make_resnet_block_kernel(C, H, W)
    sel, crop, mask = _build_constants(d)

    def flat_w(w):  # OIHW (C,C,3,3) -> (C, 9C), tap-major / cin-minor (matches im2col rows)
        return jnp.transpose(w, (0, 2, 3, 1)).reshape(C, 9 * C)

    order = ("down", "in", "b1", "b2", "sk")
    w_all = jnp.stack([flat_w(params[k + "_w"]) for k in order])          # (5, C, 9C)
    b_all = jnp.stack([params[k + "_b"].reshape(C, 1) for k in order])    # (5, C, 1)

    L0, L1, M0, M1 = d["L0"], d["L1"], d["M0"], d["M1"]
    S_out, Hd, Wd = d["S_out"], d["Hd"], d["Wd"]

    out_flat = pl.pallas_call(
        kernel,
        out_shape=jax.ShapeDtypeStruct((N, C, S_out), x_nchw.dtype),
        grid=(N,),
        in_specs=[
            pl.BlockSpec((1, C, H, W), lambda n: (n, 0, 0, 0)),     # image n (NCHW native)
            pl.BlockSpec((5, C, 9 * C), lambda n: (0, 0, 0)),       # flattened conv weights
            pl.BlockSpec((5, C, 1), lambda n: (0, 0, 0)),           # biases
            pl.BlockSpec((L0, L1), lambda n: (0, 0)),               # stride-2 selector
            pl.BlockSpec((L1, S_out), lambda n: (0, 0)),            # ring-crop selector
            pl.BlockSpec((1, L1), lambda n: (0, 0)),                # interior mask
        ],
        out_specs=pl.BlockSpec((1, C, S_out), lambda n: (n, 0, 0)),  # lane-dense (C, 256)
        scratch_shapes=[
            pltpu.VMEM((C, M0 + L0 + M0), jnp.float32),   # padded-flat input image
            pltpu.VMEM((C, M1 + L1 + M1), jnp.float32),   # post-Downsample activation
            pltpu.VMEM((C, M1 + L1 + M1), jnp.float32),   # post-in_conv activation
            pltpu.VMEM((C, M1 + L1 + M1), jnp.float32),   # post-ReLU(block1) activation
            pltpu.VMEM((9 * C, L0), jnp.float32),         # shared im2col scratch
        ],
        compiler_params=pltpu.CompilerParams(dimension_semantics=("parallel",)),
    )(x_nchw, w_all, b_all, sel, crop, mask)

    # Free metadata reshape back to NCHW spatial layout.
    return out_flat.reshape(N, C, Hd, Wd)


# ----------------------------------------------------------------------------
# Pure-JAX reference (NCHW / OIHW, matches PyTorch semantics) for validation
# ----------------------------------------------------------------------------
def _conv_ref(x, w, b, *, stride=1, padding=1):
    out = lax.conv_general_dilated(
        x, w, (stride, stride), [(padding, padding)] * 2,
        dimension_numbers=("NCHW", "OIHW", "NCHW"),
        precision=lax.Precision.HIGHEST)
    return out + b.reshape(1, -1, 1, 1)


def resnet_block_ref(x, p):
    x = _conv_ref(x, p["down_w"], p["down_b"], stride=2)
    x = _conv_ref(x, p["in_w"], p["in_b"])
    h = _conv_ref(x, p["b1_w"], p["b1_b"])
    h = jnp.maximum(h, 0.0)
    h = _conv_ref(h, p["b2_w"], p["b2_b"])   # positional args (fixes previous TypeError)
    return h + _conv_ref(x, p["sk_w"], p["sk_b"])


# ----------------------------------------------------------------------------
# Deterministic parameter init (PyTorch Conv2d default-style uniform bounds)
# ----------------------------------------------------------------------------
def _init_conv(key, in_c, out_c, k):
    k1, k2 = jax.random.split(key)
    bound = 1.0 / (in_c * k * k) ** 0.5
    w = jax.random.uniform(k1, (out_c, in_c, k, k), jnp.float32, -bound, bound)
    b = jax.random.uniform(k2, (out_c,), jnp.float32, -bound, bound)
    return w, b


if __name__ == "__main__":
    C = 8                 # sk=False residual path requires in_c == out_c (see adapter.py)
    N, H, W = 2, 32, 32   # -> 16x16 output, Ho*Wo = 256 (lane-dense output slab)

    key = jax.random.PRNGKey(0)
    kx, kd, ki, k1, k2, ks = jax.random.split(key, 6)
    x = jax.random.normal(kx, (N, C, H, W), jnp.float32)

    params = {}
    params["down_w"], params["down_b"] = _init_conv(kd, C, C, 3)   # Downsample conv
    params["in_w"],   params["in_b"]   = _init_conv(ki, C, C, 3)
    params["b1_w"],   params["b1_b"]   = _init_conv(k1, C, C, 3)
    params["b2_w"],   params["b2_b"]   = _init_conv(k2, C, C, 3)
    params["sk_w"],   params["sk_b"]   = _init_conv(ks, C, C, 3)

    out = jax.block_until_ready(resnet_block_forward(x, params))
    ref = jax.block_until_ready(resnet_block_ref(x, params))

    assert out.shape == ref.shape == (N, C, H // 2, W // 2), out.shape
    max_err = float(jnp.max(jnp.abs(out - ref)))
    assert jnp.allclose(out, ref, atol=2e-4, rtol=2e-4), max_err
    print("KERNEL_OK")
</pallas_src>

<mosaic_0001>
module attributes {stable_mosaic.version = 11 : i64} {
  func.func @kernel(%arg0: i32, %arg1: memref<1x8x32x32xf32, #tpu.memory_space<vmem>>, %arg2: memref<5x8x72xf32, #tpu.memory_space<vmem>>, %arg3: memref<5x8x1xf32, #tpu.memory_space<vmem>>, %arg4: memref<1156x324xf32, #tpu.memory_space<vmem>>, %arg5: memref<324x256xf32, #tpu.memory_space<vmem>>, %arg6: memref<1x324xf32, #tpu.memory_space<vmem>>, %arg7: memref<1x8x256xf32, #tpu.memory_space<vmem>>, %arg8: memref<8x1226xf32, #tpu.memory_space<vmem>>, %arg9: memref<8x362xf32, #tpu.memory_space<vmem>>, %arg10: memref<8x362xf32, #tpu.memory_space<vmem>>, %arg11: memref<8x362xf32, #tpu.memory_space<vmem>>, %arg12: memref<72x1156xf32, #tpu.memory_space<vmem>>) attributes {dimension_semantics = [#tpu.dimension_semantics<parallel>], iteration_bounds = array<i64: 2>, scalar_prefetch = 0 : i64, scratch_operands = 5 : i64, tpu.core_type = #tpu.core_type<tc>, window_params = [{transform_indices = @transform_0, window_bounds = array<i64: 1, 8, 32, 32>}, {pipeline_mode = #tpu.pipeline_mode<synchronous>, transform_indices = @transform_1, window_bounds = array<i64: 5, 8, 72>}, {pipeline_mode = #tpu.pipeline_mode<synchronous>, transform_indices = @transform_2, window_bounds = array<i64: 5, 8, 1>}, {pipeline_mode = #tpu.pipeline_mode<synchronous>, transform_indices = @transform_3, window_bounds = array<i64: 1156, 324>}, {pipeline_mode = #tpu.pipeline_mode<synchronous>, transform_indices = @transform_4, window_bounds = array<i64: 324, 256>}, {pipeline_mode = #tpu.pipeline_mode<synchronous>, transform_indices = @transform_5, window_bounds = array<i64: 1, 324>}, {transform_indices = @transform_6, window_bounds = array<i64: 1, 8, 256>}]} {
    %cst = arith.constant 0.000000e+00 : f32
    %0 = vector.broadcast %cst : f32 to vector<8x1226xf32>
    %c0 = arith.constant 0 : index
    %c0_0 = arith.constant 0 : index
    %1 = vector.load %arg8[%c0, %c0_0] : memref<8x1226xf32, #tpu.memory_space<vmem>>, vector<8x1226xf32>
    tpu.vector_store %arg8[%c0, %c0_0], %0 {strides = array<i32>} : memref<8x1226xf32, #tpu.memory_space<vmem>>, vector<8x1226xf32>,
    %cst_1 = arith.constant 0.000000e+00 : f32
    %2 = vector.broadcast %cst_1 : f32 to vector<8x362xf32>
    %c0_2 = arith.constant 0 : index
    %c0_3 = arith.constant 0 : index
    %3 = vector.load %arg9[%c0_2, %c0_3] : memref<8x362xf32, #tpu.memory_space<vmem>>, vector<8x362xf32>
    tpu.vector_store %arg9[%c0_2, %c0_3], %2 {strides = array<i32>} : memref<8x362xf32, #tpu.memory_space<vmem>>, vector<8x362xf32>,
    %cst_4 = arith.constant 0.000000e+00 : f32
    %4 = vector.broadcast %cst_4 : f32 to vector<8x362xf32>
    %c0_5 = arith.constant 0 : index
    %c0_6 = arith.constant 0 : index
    %5 = vector.load %arg10[%c0_5, %c0_6] : memref<8x362xf32, #tpu.memory_space<vmem>>, vector<8x362xf32>
    tpu.vector_store %arg10[%c0_5, %c0_6], %4 {strides = array<i32>} : memref<8x362xf32, #tpu.memory_space<vmem>>, vector<8x362xf32>,
    %cst_7 = arith.constant 0.000000e+00 : f32
    %6 = vector.broadcast %cst_7 : f32 to vector<8x362xf32>
    %c0_8 = arith.constant 0 : index
    %c0_9 = arith.constant 0 : index
    %7 = vector.load %arg11[%c0_8, %c0_9] : memref<8x362xf32, #tpu.memory_space<vmem>>, vector<8x362xf32>
    tpu.vector_store %arg11[%c0_8, %c0_9], %6 {strides = array<i32>} : memref<8x362xf32, #tpu.memory_space<vmem>>, vector<8x362xf32>,
    %c0_10 = arith.constant 0 : index
    %c0_11 = arith.constant 0 : index
    %c0_12 = arith.constant 0 : index
    %c0_13 = arith.constant 0 : index
    %8 = vector.load %arg1[%c0_10, %c0_11, %c0_12, %c0_13] : memref<1x8x32x32xf32, #tpu.memory_space<vmem>>, vector<1x8x1x32xf32>
    %9 = vector.shape_cast %8 : vector<1x8x1x32xf32> to vector<8x32xf32>
    %c0_14 = arith.constant 0 : index
    %c70 = arith.constant 70 : index
    %10 = vector.load %arg8[%c0_14, %c70] : memref<8x1226xf32, #tpu.memory_space<vmem>>, vector<8x32xf32>
    tpu.vector_store %arg8[%c0_14, %c70], %9 {strides = array<i32>} : memref<8x1226xf32, #tpu.memory_space<vmem>>, vector<8x32xf32>,
    %c0_15 = arith.constant 0 : index
    %c0_16 = arith.constant 0 : index
    %c1 = arith.constant 1 : index
    %c0_17 = arith.constant 0 : index
    %11 = vector.load %arg1[%c0_15, %c0_16, %c1, %c0_17] : memref<1x8x32x32xf32, #tpu.memory_space<vmem>>, vector<1x8x1x32xf32>
    %12 = vector.shape_cast %11 : vector<1x8x1x32xf32> to vector<8x32xf32>
    %c0_18 = arith.constant 0 : index
    %c104 = arith.constant 104 : index
    %13 = vector.load %arg8[%c0_18, %c104] : memref<8x1226xf32, #tpu.memory_space<vmem>>, vector<8x32xf32>
    tpu.vector_store %arg8[%c0_18, %c104], %12 {strides = array<i32>} : memref<8x1226xf32, #tpu.memory_space<vmem>>, vector<8x32xf32>,
    %c0_19 = arith.constant 0 : index
    %c0_20 = arith.constant 0 : index
    %c2 = arith.constant 2 : index
    %c0_21 = arith.constant 0 : index
    %14 = vector.load %arg1[%c0_19, %c0_20, %c2, %c0_21] : memref<1x8x32x32xf32, #tpu.memory_space<vmem>>, vector<1x8x1x32xf32>
    %15 = vector.shape_cast %14 : vector<1x8x1x32xf32> to vector<8x32xf32>
    %c0_22 = arith.constant 0 : index
    %c138 = arith.constant 138 : index
    %16 = vector.load %arg8[%c0_22, %c138] : memref<8x1226xf32, #tpu.memory_space<vmem>>, vector<8x32xf32>
    tpu.vector_store %arg8[%c0_22, %c138], %15 {strides = array<i32>} : memref<8x1226xf32, #tpu.memory_space<vmem>>, vector<8x32xf32>,
    %c0_23 = arith.constant 0 : index
    %c0_24 = arith.constant 0 : index
    %c3 = arith.constant 3 : index
    %c0_25 = arith.constant 0 : index
    %17 = vector.load %arg1[%c0_23, %c0_24, %c3, %c0_25] : memref<1x8x32x32xf32, #tpu.memory_space<vmem>>, vector<1x8x1x32xf32>
    %18 = vector.shape_cast %17 : vector<1x8x1x32xf32> to vector<8x32xf32>
    %c0_26 = arith.constant 0 : index
    %c172 = arith.constant 172 : index
    %19 = vector.load %arg8[%c0_26, %c172] : memref<8x1226xf32, #tpu.memory_space<vmem>>, vector<8x32xf32>
    tpu.vector_store %arg8[%c0_26, %c172], %18 {strides = array<i32>} : memref<8x1226xf32, #tpu.memory_space<vmem>>, vector<8x32xf32>,
    %c0_27 = arith.constant 0 : index
    %c0_28 = arith.constant 0 : index
    %c4 = arith.constant 4 : index
    %c0_29 = arith.constant 0 : index
    %20 = vector.load %arg1[%c0_27, %c0_28, %c4, %c0_29] : memref<1x8x32x32xf32, #tpu.memory_space<vmem>>, vector<1x8x1x32xf32>
    %21 = vector.shape_cast %20 : vector<1x8x1x32xf32> to vector<8x32xf32>
    %c0_30 = arith.constant 0 : index
    %c206 = arith.constant 206 : index
    %22 = vector.load %arg8[%c0_30, %c206] : memref<8x1226xf32, #tpu.memory_space<vmem>>, vector<8x32xf32>
    tpu.vector_store %arg8[%c0_30, %c206], %21 {strides = array<i32>} : memref<8x1226xf32, #tpu.memory_space<vmem>>, vector<8x32xf32>,
    %c0_31 = arith.constant 0 : index
    %c0_32 = arith.constant 0 : index
    %c5 = arith.constant 5 : index
    %c0_33 = arith.constant 0 : index
    %23 = vector.load %arg1[%c0_31, %c0_32, %c5, %c0_33] : memref<1x8x32x32xf32, #tpu.memory_space<vmem>>, vector<1x8x1x32xf32>
    %24 = vector.shape_cast %23 : vector<1x8x1x32xf32> to vector<8x32xf32>
    %c0_34 = arith.constant 0 : index
    %c240 = arith.constant 240 : index
    %25 = vector.load %arg8[%c0_34, %c240] : memref<8x1226xf32, #tpu.memory_space<vmem>>, vector<8x32xf32>
    tpu.vector_store %arg8[%c0_34, %c240], %24 {strides = array<i32>} : memref<8x1226xf32, #tpu.memory_space<vmem>>, vector<8x32xf32>,
    %c0_35 = arith.constant 0 : index
    %c0_36 = arith.constant 0 : index
    %c6 = arith.constant 6 : index
    %c0_37 = arith.constant 0 : index
    %26 = vector.load %arg1[%c0_35, %c0_36, %c6, %c0_37] : memref<1x8x32x32xf32, #tpu.memory_space<vmem>>, vector<1x8x1x32xf32>
    %27 = vector.shape_cast %26 : vector<1x8x1x32xf32> to vector<8x32xf32>
    %c0_38 = arith.constant 0 : index
    %c274 = arith.constant 274 : index
    %28 = vector.load %arg8[%c0_38, %c274] : memref<8x1226xf32, #tpu.memory_space<vmem>>, vector<8x32xf32>
    tpu.vector_store %arg8[%c0_38, %c274], %27 {strides = array<i32>} : memref<8x1226xf32, #tpu.memory_space<vmem>>, vector<8x32xf32>,
    %c0_39 = arith.constant 0 : index
    %c0_40 = arith.constant 0 : index
    %c7 = arith.constant 7 : index
    %c0_41 = arith.constant 0 : index
    %29 = vector.load %arg1[%c0_39, %c0_40, %c7, %c0_41] : memref<1x8x32x32xf32, #tpu.memory_space<vmem>>, vector<1x8x1x32xf32>
    %30 = vector.shape_cast %29 : vector<1x8x1x32xf32> to vector<8x32xf32>
    %c0_42 = arith.constant 0 : index
    %c308 = arith.constant 308 : index
    %31 = vector.load %arg8[%c0_42, %c308] : memref<8x1226xf32, #tpu.memory_space<vmem>>, vector<8x32xf32>
    tpu.vector_store %arg8[%c0_42, %c308], %30 {strides = array<i32>} : memref<8x1226xf32, #tpu.memory_space<vmem>>, vector<8x32xf32>,
    %c0_43 = arith.constant 0 : index
    %c0_44 = arith.constant 0 : index
    %c8 = arith.constant 8 : index
    %c0_45 = arith.constant 0 : index
    %32 = vector.load %arg1[%c0_43, %c0_44, %c8, %c0_45] : memref<1x8x32x32xf32, #tpu.memory_space<vmem>>, vector<1x8x1x32xf32>
    %33 = vector.shape_cast %32 : vector<1x8x1x32xf32> to vector<8x32xf32>
    %c0_46 = arith.constant 0 : index
    %c342 = arith.constant 342 : index
    %34 = vector.load %arg8[%c0_46, %c342] : memref<8x1226xf32, #tpu.memory_space<vmem>>, vector<8x32xf32>
    tpu.vector_store %arg8[%c0_46, %c342], %33 {strides = array<i32>} : memref<8x1226xf32, #tpu.memory_space<vmem>>, vector<8x32xf32>,
    %c0_47 = arith.constant 0 : index
    %c0_48 = arith.constant 0 : index
    %c9 = arith.constant 9 : index
    %c0_49 = arith.constant 0 : index
    %35 = vector.load %arg1[%c0_47, %c0_48, %c9, %c0_49] : memref<1x8x32x32xf32, #tpu.memory_space<vmem>>, vector<1x8x1x32xf32>
    %36 = vector.shape_cast %35 : vector<1x8x1x32xf32> to vector<8x32xf32>
    %c0_50 = arith.constant 0 : index
    %c376 = arith.constant 376 : index
    %37 = vector.load %arg8[%c0_50, %c376] : memref<8x1226xf32, #tpu.memory_space<vmem>>, vector<8x32xf32>
    tpu.vector_store %arg8[%c0_50, %c376], %36 {strides = array<i32>} : memref<8x1226xf32, #tpu.memory_space<vmem>>, vector<8x32xf32>,
    %c0_51 = arith.constant 0 : index
    %c0_52 = arith.constant 0 : index
    %c10 = arith.constant 10 : index
    %c0_53 = arith.constant 0 : index
    %38 = vector.load %arg1[%c0_51, %c0_52, %c10, %c0_53] : memref<1x8x32x32xf32, #tpu.memory_space<vmem>>, vector<1x8x1x32xf32>
    %39 = vector.shape_cast %38 : vector<1x8x1x32xf32> to vector<8x32xf32>
    %c0_54 = arith.constant 0 : index
    %c410 = arith.constant 410 : index
    %40 = vector.load %arg8[%c0_54, %c410] : memref<8x1226xf32, #tpu.memory_space<vmem>>, vector<8x32xf32>
    tpu.vector_store %arg8[%c0_54, %c410], %39 {strides = array<i32>} : memref<8x1226xf32, #tpu.memory_space<vmem>>, vector<8x32xf32>,
    %c0_55 = arith.constant 0 : index
    %c0_56 = arith.constant 0 : index
    %c11 = arith.constant 11 : index
    %c0_57 = arith.constant 0 : index
    %41 = vector.load %arg1[%c0_55, %c0_56, %c11, %c0_57] : memref<1x8x32x32xf32, #tpu.memory_space<vmem>>, vector<1x8x1x32xf32>
    %42 = vector.shape_cast %41 : vector<1x8x1x32xf32> to vector<8x32xf32>
    %c0_58 = arith.constant 0 : index
    %c444 = arith.constant 444 : index
    %43 = vector.load %arg8[%c0_58, %c444] : memref<8x1226xf32, #tpu.memory_space<vmem>>, vector<8x32xf32>
    tpu.vector_store %arg8[%c0_58, %c444], %42 {strides = array<i32>} : memref<8x1226xf32, #tpu.memory_space<vmem>>, vector<8x32xf32>,
    %c0_59 = arith.constant 0 : index
    %c0_60 = arith.constant 0 : index
    %c12 = arith.constant 12 : index
    %c0_61 = arith.constant 0 : index
    %44 = vector.load %arg1[%c0_59, %c0_60, %c12, %c0_61] : memref<1x8x32x32xf32, #tpu.memory_space<vmem>>, vector<1x8x1x32xf32>
    %45 = vector.shape_cast %44 : vector<1x8x1x32xf32> to vector<8x32xf32>
    %c0_62 = arith.constant 0 : index
    %c478 = arith.constant 478 : index
    %46 = vector.load %arg8[%c0_62, %c478] : memref<8x1226xf32, #tpu.memory_space<vmem>>, vector<8x32xf32>
    tpu.vector_store %arg8[%c0_62, %c478], %45 {strides = array<i32>} : memref<8x1226xf32, #tpu.memory_space<vmem>>, vector<8x32xf32>,
    %c0_63 = arith.constant 0 : index
    %c0_64 = arith.constant 0 : index
    %c13 = arith.constant 13 : index
    %c0_65 = arith.constant 0 : index
    %47 = vector.load %arg1[%c0_63, %c0_64, %c13, %c0_65] : memref<1x8x32x32xf32, #tpu.memory_space<vmem>>, vector<1x8x1x32xf32>
    %48 = vector.shape_cast %47 : vector<1x8x1x32xf32> to vector<8x32xf32>
    %c0_66 = arith.constant 0 : index
    %c512 = arith.constant 512 : index
    %49 = vector.load %arg8[%c0_66, %c512] : memref<8x1226xf32, #tpu.memory_space<vmem>>, vector<8x32xf32>
    tpu.vector_store %arg8[%c0_66, %c512], %48 {strides = array<i32>} : memref<8x1226xf32, #tpu.memory_space<vmem>>, vector<8x32xf32>,
    %c0_67 = arith.constant 0 : index
    %c0_68 = arith.constant 0 : index
    %c14 = arith.constant 14 : index
    %c0_69 = arith.constant 0 : index
    %50 = vector.load %arg1[%c0_67, %c0_68, %c14, %c0_69] : memref<1x8x32x32xf32, #tpu.memory_space<vmem>>, vector<1x8x1x32xf32>
    %51 = vector.shape_cast %50 : vector<1x8x1x32xf32> to vector<8x32xf32>
    %c0_70 = arith.constant 0 : index
    %c546 = arith.constant 546 : index
    %52 = vector.load %arg8[%c0_70, %c546] : memref<8x1226xf32, #tpu.memory_space<vmem>>, vector<8x32xf32>
    tpu.vector_store %arg8[%c0_70, %c546], %51 {strides = array<i32>} : memref<8x1226xf32, #tpu.memory_space<vmem>>, vector<8x32xf32>,
    %c0_71 = arith.constant 0 : index
    %c0_72 = arith.constant 0 : index
    %c15 = arith.constant 15 : index
    %c0_73 = arith.constant 0 : index
    %53 = vector.load %arg1[%c0_71, %c0_72, %c15, %c0_73] : memref<1x8x32x32xf32, #tpu.memory_space<vmem>>, vector<1x8x1x32xf32>
    %54 = vector.shape_cast %53 : vector<1x8x1x32xf32> to vector<8x32xf32>
    %c0_74 = arith.constant 0 : index
    %c580 = arith.constant 580 : index
    %55 = vector.load %arg8[%c0_74, %c580] : memref<8x1226xf32, #tpu.memory_space<vmem>>, vector<8x32xf32>
    tpu.vector_store %arg8[%c0_74, %c580], %54 {strides = array<i32>} : memref<8x1226xf32, #tpu.memory_space<vmem>>, vector<8x32xf32>,
    %c0_75 = arith.constant 0 : index
    %c0_76 = arith.constant 0 : index
    %c16 = arith.constant 16 : index
    %c0_77 = arith.constant 0 : index
    %56 = vector.load %arg1[%c0_75, %c0_76, %c16, %c0_77] : memref<1x8x32x32xf32, #tpu.memory_space<vmem>>, vector<1x8x1x32xf32>
    %57 = vector.shape_cast %56 : vector<1x8x1x32xf32> to vector<8x32xf32>
    %c0_78 = arith.constant 0 : index
    %c614 = arith.constant 614 : index
    %58 = vector.load %arg8[%c0_78, %c614] : memref<8x1226xf32, #tpu.memory_space<vmem>>, vector<8x32xf32>
    tpu.vector_store %arg8[%c0_78, %c614], %57 {strides = array<i32>} : memref<8x1226xf32, #tpu.memory_space<vmem>>, vector<8x32xf32>,
    %c0_79 = arith.constant 0 : index
    %c0_80 = arith.constant 0 : index
    %c17 = arith.constant 17 : index
    %c0_81 = arith.constant 0 : index
    %59 = vector.load %arg1[%c0_79, %c0_80, %c17, %c0_81] : memref<1x8x32x32xf32, #tpu.memory_space<vmem>>, vector<1x8x1x32xf32>
    %60 = vector.shape_cast %59 : vector<1x8x1x32xf32> to vector<8x32xf32>
    %c0_82 = arith.constant 0 : index
    %c648 = arith.constant 648 : index
    %61 = vector.load %arg8[%c0_82, %c648] : memref<8x1226xf32, #tpu.memory_space<vmem>>, vector<8x32xf32>
    tpu.vector_store %arg8[%c0_82, %c648], %60 {strides = array<i32>} : memref<8x1226xf32, #tpu.memory_space<vmem>>, vector<8x32xf32>,
    %c0_83 = arith.constant 0 : index
    %c0_84 = arith.constant 0 : index
    %c18 = arith.constant 18 : index
    %c0_85 = arith.constant 0 : index
    %62 = vector.load %arg1[%c0_83, %c0_84, %c18, %c0_85] : memref<1x8x32x32xf32, #tpu.memory_space<vmem>>, vector<1x8x1x32xf32>
    %63 = vector.shape_cast %62 : vector<1x8x1x32xf32> to vector<8x32xf32>
    %c0_86 = arith.constant 0 : index
    %c682 = arith.constant 682 : index
    %64 = vector.load %arg8[%c0_86, %c682] : memref<8x1226xf32, #tpu.memory_space<vmem>>, vector<8x32xf32>
    tpu.vector_store %arg8[%c0_86, %c682], %63 {strides = array<i32>} : memref<8x1226xf32, #tpu.memory_space<vmem>>, vector<8x32xf32>,
    %c0_87 = arith.constant 0 : index
    %c0_88 = arith.constant 0 : index
    %c19 = arith.constant 19 : index
    %c0_89 = arith.constant 0 : index
    %65 = vector.load %arg1[%c0_87, %c0_88, %c19, %c0_89] : memref<1x8x32x32xf32, #tpu.memory_space<vmem>>, vector<1x8x1x32xf32>
    %66 = vector.shape_cast %65 : vector<1x8x1x32xf32> to vector<8x32xf32>
    %c0_90 = arith.constant 0 : index
    %c716 = arith.constant 716 : index
    %67 = vector.load %arg8[%c0_90, %c716] : memref<8x1226xf32, #tpu.memory_space<vmem>>, vector<8x32xf32>
    tpu.vector_store %arg8[%c0_90, %c716], %66 {strides = array<i32>} : memref<8x1226xf32, #tpu.memory_space<vmem>>, vector<8x32xf32>,
    %c0_91 = arith.constant 0 : index
    %c0_92 = arith.constant 0 : index
    %c20 = arith.constant 20 : index
    %c0_93 = arith.constant 0 : index
    %68 = vector.load %arg1[%c0_91, %c0_92, %c20, %c0_93] : memref<1x8x32x32xf32, #tpu.memory_space<vmem>>, vector<1x8x1x32xf32>
    %69 = vector.shape_cast %68 : vector<1x8x1x32xf32> to vector<8x32xf32>
    %c0_94 = arith.constant 0 : index
    %c750 = arith.constant 750 : index
    %70 = vector.load %arg8[%c0_94, %c750] : memref<8x1226xf32, #tpu.memory_space<vmem>>, vector<8x32xf32>
    tpu.vector_store %arg8[%c0_94, %c750], %69 {strides = array<i32>} : memref<8x1226xf32, #tpu.memory_space<vmem>>, vector<8x32xf32>,
    %c0_95 = arith.constant 0 : index
    %c0_96 = arith.constant 0 : index
    %c21 = arith.constant 21 : index
    %c0_97 = arith.constant 0 : index
    %71 = vector.load %arg1[%c0_95, %c0_96, %c21, %c0_97] : memref<1x8x32x32xf32, #tpu.memory_space<vmem>>, vector<1x8x1x32xf32>
    %72 = vector.shape_cast %71 : vector<1x8x1x32xf32> to vector<8x32xf32>
    %c0_98 = arith.constant 0 : index
    %c784 = arith.constant 784 : index
    %73 = vector.load %arg8[%c0_98, %c784] : memref<8x1226xf32, #tpu.memory_space<vmem>>, vector<8x32xf32>
    tpu.vector_store %arg8[%c0_98, %c784], %72 {strides = array<i32>} : memref<8x1226xf32, #tpu.memory_space<vmem>>, vector<8x32xf32>,
    %c0_99 = arith.constant 0 : index
    %c0_100 = arith.constant 0 : index
    %c22 = arith.constant 22 : index
    %c0_101 = arith.constant 0 : index
    %74 = vector.load %arg1[%c0_99, %c0_100, %c22, %c0_101] : memref<1x8x32x32xf32, #tpu.memory_space<vmem>>, vector<1x8x1x32xf32>
    %75 = vector.shape_cast %74 : vector<1x8x1x32xf32> to vector<8x32xf32>
    %c0_102 = arith.constant 0 : index
    %c818 = arith.constant 818 : index
    %76 = vector.load %arg8[%c0_102, %c818] : memref<8x1226xf32, #tpu.memory_space<vmem>>, vector<8x32xf32>
    tpu.vector_store %arg8[%c0_102, %c818], %75 {strides = array<i32>} : memref<8x1226xf32, #tpu.memory_space<vmem>>, vector<8x32xf32>,
    %c0_103 = arith.constant 0 : index
    %c0_104 = arith.constant 0 : index
    %c23 = arith.constant 23 : index
    %c0_105 = arith.constant 0 : index
    %77 = vector.load %arg1[%c0_103, %c0_104, %c23, %c0_105] : memref<1x8x32x32xf32, #tpu.memory_space<vmem>>, vector<1x8x1x32xf32>
    %78 = vector.shape_cast %77 : vector<1x8x1x32xf32> to vector<8x32xf32>
    %c0_106 = arith.constant 0 : index
    %c852 = arith.constant 852 : index
    %79 = vector.load %arg8[%c0_106, %c852] : memref<8x1226xf32, #tpu.memory_space<vmem>>, vector<8x32xf32>
    tpu.vector_store %arg8[%c0_106, %c852], %78 {strides = array<i32>} : memref<8x1226xf32, #tpu.memory_space<vmem>>, vector<8x32xf32>,
    %c0_107 = arith.constant 0 : index
    %c0_108 = arith.constant 0 : index
    %c24 = arith.constant 24 : index
    %c0_109 = arith.constant 0 : index
    %80 = vector.load %arg1[%c0_107, %c0_108, %c24, %c0_109] : memref<1x8x32x32xf32, #tpu.memory_space<vmem>>, vector<1x8x1x32xf32>
    %81 = vector.shape_cast %80 : vector<1x8x1x32xf32> to vector<8x32xf32>
    %c0_110 = arith.constant 0 : index
    %c886 = arith.constant 886 : index
    %82 = vector.load %arg8[%c0_110, %c886] : memref<8x1226xf32, #tpu.memory_space<vmem>>, vector<8x32xf32>
    tpu.vector_store %arg8[%c0_110, %c886], %81 {strides = array<i32>} : memref<8x1226xf32, #tpu.memory_space<vmem>>, vector<8x32xf32>,
    %c0_111 = arith.constant 0 : index
    %c0_112 = arith.constant 0 : index
    %c25 = arith.constant 25 : index
    %c0_113 = arith.constant 0 : index
    %83 = vector.load %arg1[%c0_111, %c0_112, %c25, %c0_113] : memref<1x8x32x32xf32, #tpu.memory_space<vmem>>, vector<1x8x1x32xf32>
    %84 = vector.shape_cast %83 : vector<1x8x1x32xf32> to vector<8x32xf32>
    %c0_114 = arith.constant 0 : index
    %c920 = arith.constant 920 : index
    %85 = vector.load %arg8[%c0_114, %c920] : memref<8x1226xf32, #tpu.memory_space<vmem>>, vector<8x32xf32>
    tpu.vector_store %arg8[%c0_114, %c920], %84 {strides = array<i32>} : memref<8x1226xf32, #tpu.memory_space<vmem>>, vector<8x32xf32>,
    %c0_115 = arith.constant 0 : index
    %c0_116 = arith.constant 0 : index
    %c26 = arith.constant 26 : index
    %c0_117 = arith.constant 0 : index
    %86 = vector.load %arg1[%c0_115, %c0_116, %c26, %c0_117] : memref<1x8x32x32xf32, #tpu.memory_space<vmem>>, vector<1x8x1x32xf32>
    %87 = vector.shape_cast %86 : vector<1x8x1x32xf32> to vector<8x32xf32>
    %c0_118 = arith.constant 0 : index
    %c954 = arith.constant 954 : index
    %88 = vector.load %arg8[%c0_118, %c954] : memref<8x1226xf32, #tpu.memory_space<vmem>>, vector<8x32xf32>
    tpu.vector_store %arg8[%c0_118, %c954], %87 {strides = array<i32>} : memref<8x1226xf32, #tpu.memory_space<vmem>>, vector<8x32xf32>,
    %c0_119 = arith.constant 0 : index
    %c0_120 = arith.constant 0 : index
    %c27 = arith.constant 27 : index
    %c0_121 = arith.constant 0 : index
    %89 = vector.load %arg1[%c0_119, %c0_120, %c27, %c0_121] : memref<1x8x32x32xf32, #tpu.memory_space<vmem>>, vector<1x8x1x32xf32>
    %90 = vector.shape_cast %89 : vector<1x8x1x32xf32> to vector<8x32xf32>
    %c0_122 = arith.constant 0 : index
    %c988 = arith.constant 988 : index
    %91 = vector.load %arg8[%c0_122, %c988] : memref<8x1226xf32, #tpu.memory_space<vmem>>, vector<8x32xf32>
    tpu.vector_store %arg8[%c0_122, %c988], %90 {strides = array<i32>} : memref<8x1226xf32, #tpu.memory_space<vmem>>, vector<8x32xf32>,
    %c0_123 = arith.constant 0 : index
    %c0_124 = arith.constant 0 : index
    %c28 = arith.constant 28 : index
    %c0_125 = arith.constant 0 : index
    %92 = vector.load %arg1[%c0_123, %c0_124, %c28, %c0_125] : memref<1x8x32x32xf32, #tpu.memory_space<vmem>>, vector<1x8x1x32xf32>
    %93 = vector.shape_cast %92 : vector<1x8x1x32xf32> to vector<8x32xf32>
    %c0_126 = arith.constant 0 : index
    %c1022 = arith.constant 1022 : index
    %94 = vector.load %arg8[%c0_126, %c1022] : memref<8x1226xf32, #tpu.memory_space<vmem>>, vector<8x32xf32>
    tpu.vector_store %arg8[%c0_126, %c1022], %93 {strides = array<i32>} : memref<8x1226xf32, #tpu.memory_space<vmem>>, vector<8x32xf32>,
    %c0_127 = arith.constant 0 : index
    %c0_128 = arith.constant 0 : index
    %c29 = arith.constant 29 : index
    %c0_129 = arith.constant 0 : index
    %95 = vector.load %arg1[%c0_127, %c0_128, %c29, %c0_129] : memref<1x8x32x32xf32, #tpu.memory_space<vmem>>, vector<1x8x1x32xf32>
    %96 = vector.shape_cast %95 : vector<1x8x1x32xf32> to vector<8x32xf32>
    %c0_130 = arith.constant 0 : index
    %c1056 = arith.constant 1056 : index
    %97 = vector.load %arg8[%c0_130, %c1056] : memref<8x1226xf32, #tpu.memory_space<vmem>>, vector<8x32xf32>
    tpu.vector_store %arg8[%c0_130, %c1056], %96 {strides = array<i32>} : memref<8x1226xf32, #tpu.memory_space<vmem>>, vector<8x32xf32>,
    %c0_131 = arith.constant 0 : index
    %c0_132 = arith.constant 0 : index
    %c30 = arith.constant 30 : index
    %c0_133 = arith.constant 0 : index
    %98 = vector.load %arg1[%c0_131, %c0_132, %c30, %c0_133] : memref<1x8x32x32xf32, #tpu.memory_space<vmem>>, vector<1x8x1x32xf32>
    %99 = vector.shape_cast %98 : vector<1x8x1x32xf32> to vector<8x32xf32>
    %c0_134 = arith.constant 0 : index
    %c1090 = arith.constant 1090 : index
    %100 = vector.load %arg8[%c0_134, %c1090] : memref<8x1226xf32, #tpu.memory_space<vmem>>, vector<8x32xf32>
    tpu.vector_store %arg8[%c0_134, %c1090], %99 {strides = array<i32>} : memref<8x1226xf32, #tpu.memory_space<vmem>>, vector<8x32xf32>,
    %c0_135 = arith.constant 0 : index
    %c0_136 = arith.constant 0 : index
    %c31 = arith.constant 31 : index
    %c0_137 = arith.constant 0 : index
    %101 = vector.load %arg1[%c0_135, %c0_136, %c31, %c0_137] : memref<1x8x32x32xf32, #tpu.memory_space<vmem>>, vector<1x8x1x32xf32>
    %102 = vector.shape_cast %101 : vector<1x8x1x32xf32> to vector<8x32xf32>
    %c0_138 = arith.constant 0 : index
    %c1124 = arith.constant 1124 : index
    %103 = vector.load %arg8[%c0_138, %c1124] : memref<8x1226xf32, #tpu.memory_space<vmem>>, vector<8x32xf32>
    tpu.vector_store %arg8[%c0_138, %c1124], %102 {strides = array<i32>} : memref<8x1226xf32, #tpu.memory_space<vmem>>, vector<8x32xf32>,
    %c0_139 = arith.constant 0 : index
    %c0_140 = arith.constant 0 : index
    %104 = vector.load %arg6[%c0_139, %c0_140] : memref<1x324xf32, #tpu.memory_space<vmem>>, vector<1x324xf32>
    %c0_141 = arith.constant 0 : index
    %c0_142 = arith.constant 0 : index
    %c0_143 = arith.constant 0 : index
    %105 = vector.load %arg2[%c0_141, %c0_142, %c0_143] : memref<5x8x72xf32, #tpu.memory_space<vmem>>, vector<1x8x72xf32>
    %106 = vector.shape_cast %105 : vector<1x8x72xf32> to vector<8x72xf32>
    %c0_144 = arith.constant 0 : index
    %c0_145 = arith.constant 0 : index
    %c0_146 = arith.constant 0 : index
    %107 = vector.load %arg3[%c0_144, %c0_145, %c0_146] : memref<5x8x1xf32, #tpu.memory_space<vmem>>, vector<1x8x1xf32>
    %108 = vector.shape_cast %107 : vector<1x8x1xf32> to vector<8x1xf32>
    %c0_147 = arith.constant 0 : index
    %c0_148 = arith.constant 0 : index
    %109 = vector.load %arg8[%c0_147, %c0_148] : memref<8x1226xf32, #tpu.memory_space<vmem>>, vector<8x1156xf32>
    %c0_149 = arith.constant 0 : index
    %c0_150 = arith.constant 0 : index
    %110 = vector.load %arg12[%c0_149, %c0_150] : memref<72x1156xf32, #tpu.memory_space<vmem>>, vector<8x1156xf32>
    tpu.vector_store %arg12[%c0_149, %c0_150], %109 {strides = array<i32>} : memref<72x1156xf32, #tpu.memory_space<vmem>>, vector<8x1156xf32>,
    %c0_151 = arith.constant 0 : index
    %c1_152 = arith.constant 1 : index
    %111 = vector.load %arg8[%c0_151, %c1_152] : memref<8x1226xf32, #tpu.memory_space<vmem>>, vector<8x1156xf32>
    %c8_153 = arith.constant 8 : index
    %c0_154 = arith.constant 0 : index
    %112 = vector.load %arg12[%c8_153, %c0_154] : memref<72x1156xf32, #tpu.memory_space<vmem>>, vector<8x1156xf32>
    tpu.vector_store %arg12[%c8_153, %c0_154], %111 {strides = array<i32>} : memref<72x1156xf32, #tpu.memory_space<vmem>>, vector<8x1156xf32>,
    %c0_155 = arith.constant 0 : index
    %c2_156 = arith.constant 2 : index
    %113 = vector.load %arg8[%c0_155, %c2_156] : memref<8x1226xf32, #tpu.memory_space<vmem>>, vector<8x1156xf32>
    %c16_157 = arith.constant 16 : index
    %c0_158 = arith.constant 0 : index
    %114 = vector.load %arg12[%c16_157, %c0_158] : memref<72x1156xf32, #tpu.memory_space<vmem>>, vector<8x1156xf32>
    tpu.vector_store %arg12[%c16_157, %c0_158], %113 {strides = array<i32>} : memref<72x1156xf32, #tpu.memory_space<vmem>>, vector<8x1156xf32>,
    %c0_159 = arith.constant 0 : index
    %c34 = arith.constant 34 : index
    %115 = vector.load %arg8[%c0_159, %c34] : memref<8x1226xf32, #tpu.memory_space<vmem>>, vector<8x1156xf32>
    %c24_160 = arith.constant 24 : index
    %c0_161 = arith.constant 0 : index
    %116 = vector.load %arg12[%c24_160, %c0_161] : memref<72x1156xf32, #tpu.memory_space<vmem>>, vector<8x1156xf32>
    tpu.vector_store %arg12[%c24_160, %c0_161], %115 {strides = array<i32>} : memref<72x1156xf32, #tpu.memory_space<vmem>>, vector<8x1156xf32>,
    %c0_162 = arith.constant 0 : index
    %c35 = arith.constant 35 : index
    %117 = vector.load %arg8[%c0_162, %c35] : memref<8x1226xf32, #tpu.memory_space<vmem>>, vector<8x1156xf32>
    %c32 = arith.constant 32 : index
    %c0_163 = arith.constant 0 : index
    %118 = vector.load %arg12[%c32, %c0_163] : memref<72x1156xf32, #tpu.memory_space<vmem>>, vector<8x1156xf32>
    tpu.vector_store %arg12[%c32, %c0_163], %117 {strides = array<i32>} : memref<72x1156xf32, #tpu.memory_space<vmem>>, vector<8x1156xf32>,
    %c0_164 = arith.constant 0 : index
    %c36 = arith.constant 36 : index
    %119 = vector.load %arg8[%c0_164, %c36] : memref<8x1226xf32, #tpu.memory_space<vmem>>, vector<8x1156xf32>
    %c40 = arith.constant 40 : index
    %c0_165 = arith.constant 0 : index
    %120 = vector.load %arg12[%c40, %c0_165] : memref<72x1156xf32, #tpu.memory_space<vmem>>, vector<8x1156xf32>
    tpu.vector_store %arg12[%c40, %c0_165], %119 {strides = array<i32>} : memref<72x1156xf32, #tpu.memory_space<vmem>>, vector<8x1156xf32>,
    %c0_166 = arith.constant 0 : index
    %c68 = arith.constant 68 : index
    %121 = vector.load %arg8[%c0_166, %c68] : memref<8x1226xf32, #tpu.memory_space<vmem>>, vector<8x1156xf32>
    %c48 = arith.constant 48 : index
    %c0_167 = arith.constant 0 : index
    %122 = vector.load %arg12[%c48, %c0_167] : memref<72x1156xf32, #tpu.memory_space<vmem>>, vector<8x1156xf32>
    tpu.vector_store %arg12[%c48, %c0_167], %121 {strides = array<i32>} : memref<72x1156xf32, #tpu.memory_space<vmem>>, vector<8x1156xf32>,
    %c0_168 = arith.constant 0 : index
    %c69 = arith.constant 69 : index
    %123 = vector.load %arg8[%c0_168, %c69] : memref<8x1226xf32, #tpu.memory_space<vmem>>, vector<8x1156xf32>
    %c56 = arith.constant 56 : index
    %c0_169 = arith.constant 0 : index
    %124 = vector.load %arg12[%c56, %c0_169] : memref<72x1156xf32, #tpu.memory_space<vmem>>, vector<8x1156xf32>
    tpu.vector_store %arg12[%c56, %c0_169], %123 {strides = array<i32>} : memref<72x1156xf32, #tpu.memory_space<vmem>>, vector<8x1156xf32>,
    %c0_170 = arith.constant 0 : index
    %c70_171 = arith.constant 70 : index
    %125 = vector.load %arg8[%c0_170, %c70_171] : memref<8x1226xf32, #tpu.memory_space<vmem>>, vector<8x1156xf32>
    %c64 = arith.constant 64 : index
    %c0_172 = arith.constant 0 : index
    %126 = vector.load %arg12[%c64, %c0_172] : memref<72x1156xf32, #tpu.memory_space<vmem>>, vector<8x1156xf32>
    tpu.vector_store %arg12[%c64, %c0_172], %125 {strides = array<i32>} : memref<72x1156xf32, #tpu.memory_space<vmem>>, vector<8x1156xf32>,
    %c0_173 = arith.constant 0 : index
    %c0_174 = arith.constant 0 : index
    %127 = vector.load %arg12[%c0_173, %c0_174] : memref<72x1156xf32, #tpu.memory_space<vmem>>, vector<72x1156xf32>
    %cst_175 = arith.constant dense<0.000000e+00> : vector<8x1156xf32>
    %128 = tpu.matmul %106, %127, %cst_175 {dimension_numbers = #tpu.dot_dimension_numbers<[1], [0], [0], [1], [0, 0, 1, 1], [], []>} : vector<8x72xf32>, vector<72x1156xf32>, vector<8x1156xf32> -> vector<8x1156xf32>
    %129 = vector.broadcast %108 : vector<8x1xf32> to vector<8x1156xf32>
    %130 = arith.addf %128, %129 : vector<8x1156xf32>
    %c0_176 = arith.constant 0 : index
    %c0_177 = arith.constant 0 : index
    %131 = vector.load %arg4[%c0_176, %c0_177] : memref<1156x324xf32, #tpu.memory_space<vmem>>, vector<1156x324xf32>
    %cst_178 = arith.constant dense<0.000000e+00> : vector<8x324xf32>
    %132 = tpu.matmul %130, %131, %cst_178 {dimension_numbers = #tpu.dot_dimension_numbers<[1], [0], [0], [1], [0, 0, 1, 1], [], []>} : vector<8x1156xf32>, vector<1156x324xf32>, vector<8x324xf32> -> vector<8x324xf32>
    %c0_179 = arith.constant 0 : index
    %c19_180 = arith.constant 19 : index
    %133 = vector.load %arg9[%c0_179, %c19_180] : memref<8x362xf32, #tpu.memory_space<vmem>>, vector<8x324xf32>
    tpu.vector_store %arg9[%c0_179, %c19_180], %132 {strides = array<i32>} : memref<8x362xf32, #tpu.memory_space<vmem>>, vector<8x324xf32>,
    %c1_181 = arith.constant 1 : index
    %c0_182 = arith.constant 0 : index
    %c0_183 = arith.constant 0 : index
    %134 = vector.load %arg2[%c1_181, %c0_182, %c0_183] : memref<5x8x72xf32, #tpu.memory_space<vmem>>, vector<1x8x72xf32>
    %135 = vector.shape_cast %134 : vector<1x8x72xf32> to vector<8x72xf32>
    %c1_184 = arith.constant 1 : index
    %c0_185 = arith.constant 0 : index
    %c0_186 = arith.constant 0 : index
    %136 = vector.load %arg3[%c1_184, %c0_185, %c0_186] : memref<5x8x1xf32, #tpu.memory_space<vmem>>, vector<1x8x1xf32>
    %137 = vector.shape_cast %136 : vector<1x8x1xf32> to vector<8x1xf32>
    %c0_187 = arith.constant 0 : index
    %c0_188 = arith.constant 0 : index
    %138 = vector.load %arg9[%c0_187, %c0_188] : memref<8x362xf32, #tpu.memory_space<vmem>>, vector<8x324xf32>
    %c0_189 = arith.constant 0 : index
    %c0_190 = arith.constant 0 : index
    %139 = vector.load %arg12[%c0_189, %c0_190] : memref<72x1156xf32, #tpu.memory_space<vmem>>, vector<8x324xf32>
    tpu.vector_store %arg12[%c0_189, %c0_190], %138 {strides = array<i32>} : memref<72x1156xf32, #tpu.memory_space<vmem>>, vector<8x324xf32>,
    %c0_191 = arith.constant 0 : index
    %c1_192 = arith.constant 1 : index
    %140 = vector.load %arg9[%c0_191, %c1_192] : memref<8x362xf32, #tpu.memory_space<vmem>>, vector<8x324xf32>
    %c8_193 = arith.constant 8 : index
    %c0_194 = arith.constant 0 : index
    %141 = vector.load %arg12[%c8_193, %c0_194] : memref<72x1156xf32, #tpu.memory_space<vmem>>, vector<8x324xf32>
    tpu.vector_store %arg12[%c8_193, %c0_194], %140 {strides = array<i32>} : memref<72x1156xf32, #tpu.memory_space<vmem>>, vector<8x324xf32>,
    %c0_195 = arith.constant 0 : index
    %c2_196 = arith.constant 2 : index
    %142 = vector.load %arg9[%c0_195, %c2_196] : memref<8x362xf32, #tpu.memory_space<vmem>>, vector<8x324xf32>
    %c16_197 = arith.constant 16 : index
    %c0_198 = arith.constant 0 : index
    %143 = vector.load %arg12[%c16_197, %c0_198] : memref<72x1156xf32, #tpu.memory_space<vmem>>, vector<8x324xf32>
    tpu.vector_store %arg12[%c16_197, %c0_198], %142 {strides = array<i32>} : memref<72x1156xf32, #tpu.memory_space<vmem>>, vector<8x324xf32>,
    %c0_199 = arith.constant 0 : index
    %c18_200 = arith.constant 18 : index
    %144 = vector.load %arg9[%c0_199, %c18_200] : memref<8x362xf32, #tpu.memory_space<vmem>>, vector<8x324xf32>
    %c24_201 = arith.constant 24 : index
    %c0_202 = arith.constant 0 : index
    %145 = vector.load %arg12[%c24_201, %c0_202] : memref<72x1156xf32, #tpu.memory_space<vmem>>, vector<8x324xf32>
    tpu.vector_store %arg12[%c24_201, %c0_202], %144 {strides = array<i32>} : memref<72x1156xf32, #tpu.memory_space<vmem>>, vector<8x324xf32>,
    %c0_203 = arith.constant 0 : index
    %c19_204 = arith.constant 19 : index
    %146 = vector.load %arg9[%c0_203, %c19_204] : memref<8x362xf32, #tpu.memory_space<vmem>>, vector<8x324xf32>
    %c32_205 = arith.constant 32 : index
    %c0_206 = arith.constant 0 : index
    %147 = vector.load %arg12[%c32_205, %c0_206] : memref<72x1156xf32, #tpu.memory_space<vmem>>, vector<8x324xf32>
    tpu.vector_store %arg12[%c32_205, %c0_206], %146 {strides = array<i32>} : memref<72x1156xf32, #tpu.memory_space<vmem>>, vector<8x324xf32>,
    %c0_207 = arith.constant 0 : index
    %c20_208 = arith.constant 20 : index
    %148 = vector.load %arg9[%c0_207, %c20_208] : memref<8x362xf32, #tpu.memory_space<vmem>>, vector<8x324xf32>
    %c40_209 = arith.constant 40 : index
    %c0_210 = arith.constant 0 : index
    %149 = vector.load %arg12[%c40_209, %c0_210] : memref<72x1156xf32, #tpu.memory_space<vmem>>, vector<8x324xf32>
    tpu.vector_store %arg12[%c40_209, %c0_210], %148 {strides = array<i32>} : memref<72x1156xf32, #tpu.memory_space<vmem>>, vector<8x324xf32>,
    %c0_211 = arith.constant 0 : index
    %c36_212 = arith.constant 36 : index
    %150 = vector.load %arg9[%c0_211, %c36_212] : memref<8x362xf32, #tpu.memory_space<vmem>>, vector<8x324xf32>
    %c48_213 = arith.constant 48 : index
    %c0_214 = arith.constant 0 : index
    %151 = vector.load %arg12[%c48_213, %c0_214] : memref<72x1156xf32, #tpu.memory_space<vmem>>, vector<8x324xf32>
    tpu.vector_store %arg12[%c48_213, %c0_214], %150 {strides = array<i32>} : memref<72x1156xf32, #tpu.memory_space<vmem>>, vector<8x324xf32>,
    %c0_215 = arith.constant 0 : index
    %c37 = arith.constant 37 : index
    %152 = vector.load %arg9[%c0_215, %c37] : memref<8x362xf32, #tpu.memory_space<vmem>>, vector<8x324xf32>
    %c56_216 = arith.constant 56 : index
    %c0_217 = arith.constant 0 : index
    %153 = vector.load %arg12[%c56_216, %c0_217] : memref<72x1156xf32, #tpu.memory_space<vmem>>, vector<8x324xf32>
    tpu.vector_store %arg12[%c56_216, %c0_217], %152 {strides = array<i32>} : memref<72x1156xf32, #tpu.memory_space<vmem>>, vector<8x324xf32>,
    %c0_218 = arith.constant 0 : index
    %c38 = arith.constant 38 : index
    %154 = vector.load %arg9[%c0_218, %c38] : memref<8x362xf32, #tpu.memory_space<vmem>>, vector<8x324xf32>
    %c64_219 = arith.constant 64 : index
    %c0_220 = arith.constant 0 : index
    %155 = vector.load %arg12[%c64_219, %c0_220] : memref<72x1156xf32, #tpu.memory_space<vmem>>, vector<8x324xf32>
    tpu.vector_store %arg12[%c64_219, %c0_220], %154 {strides = array<i32>} : memref<72x1156xf32, #tpu.memory_space<vmem>>, vector<8x324xf32>,
    %c0_221 = arith.constant 0 : index
    %c0_222 = arith.constant 0 : index
    %156 = vector.load %arg12[%c0_221, %c0_222] : memref<72x1156xf32, #tpu.memory_space<vmem>>, vector<72x324xf32>
    %cst_223 = arith.constant dense<0.000000e+00> : vector<8x324xf32>
    %157 = tpu.matmul %135, %156, %cst_223 {dimension_numbers = #tpu.dot_dimension_numbers<[1], [0], [0], [1], [0, 0, 1, 1], [], []>} : vector<8x72xf32>, vector<72x324xf32>, vector<8x324xf32> -> vector<8x324xf32>
    %158 = vector.broadcast %137 : vector<8x1xf32> to vector<8x324xf32>
    %159 = arith.addf %157, %158 : vector<8x324xf32>
    %160 = vector.broadcast %104 : vector<1x324xf32> to vector<8x324xf32>
    %161 = arith.mulf %159, %160 : vector<8x324xf32>
    %c0_224 = arith.constant 0 : index
    %c19_225 = arith.constant 19 : index
    %162 = vector.load %arg10[%c0_224, %c19_225] : memref<8x362xf32, #tpu.memory_space<vmem>>, vector<8x324xf32>
    tpu.vector_store %arg10[%c0_224, %c19_225], %161 {strides = array<i32>} : memref<8x362xf32, #tpu.memory_space<vmem>>, vector<8x324xf32>,
    %c2_226 = arith.constant 2 : index
    %c0_227 = arith.constant 0 : index
    %c0_228 = arith.constant 0 : index
    %163 = vector.load %arg2[%c2_226, %c0_227, %c0_228] : memref<5x8x72xf32, #tpu.memory_space<vmem>>, vector<1x8x72xf32>
    %164 = vector.shape_cast %163 : vector<1x8x72xf32> to vector<8x72xf32>
    %c2_229 = arith.constant 2 : index
    %c0_230 = arith.constant 0 : index
    %c0_231 = arith.constant 0 : index
    %165 = vector.load %arg3[%c2_229, %c0_230, %c0_231] : memref<5x8x1xf32, #tpu.memory_space<vmem>>, vector<1x8x1xf32>
    %166 = vector.shape_cast %165 : vector<1x8x1xf32> to vector<8x1xf32>
    %c0_232 = arith.constant 0 : index
    %c0_233 = arith.constant 0 : index
    %167 = vector.load %arg10[%c0_232, %c0_233] : memref<8x362xf32, #tpu.memory_space<vmem>>, vector<8x324xf32>
    %c0_234 = arith.constant 0 : index
    %c0_235 = arith.constant 0 : index
    %168 = vector.load %arg12[%c0_234, %c0_235] : memref<72x1156xf32, #tpu.memory_space<vmem>>, vector<8x324xf32>
    tpu.vector_store %arg12[%c0_234, %c0_235], %167 {strides = array<i32>} : memref<72x1156xf32, #tpu.memory_space<vmem>>, vector<8x324xf32>,
    %c0_236 = arith.constant 0 : index
    %c1_237 = arith.constant 1 : index
    %169 = vector.load %arg10[%c0_236, %c1_237] : memref<8x362xf32, #tpu.memory_space<vmem>>, vector<8x324xf32>
    %c8_238 = arith.constant 8 : index
    %c0_239 = arith.constant 0 : index
    %170 = vector.load %arg12[%c8_238, %c0_239] : memref<72x1156xf32, #tpu.memory_space<vmem>>, vector<8x324xf32>
    tpu.vector_store %arg12[%c8_238, %c0_239], %169 {strides = array<i32>} : memref<72x1156xf32, #tpu.memory_space<vmem>>, vector<8x324xf32>,
    %c0_240 = arith.constant 0 : index
    %c2_241 = arith.constant 2 : index
    %171 = vector.load %arg10[%c0_240, %c2_241] : memref<8x362xf32, #tpu.memory_space<vmem>>, vector<8x324xf32>
    %c16_242 = arith.constant 16 : index
    %c0_243 = arith.constant 0 : index
    %172 = vector.load %arg12[%c16_242, %c0_243] : memref<72x1156xf32, #tpu.memory_space<vmem>>, vector<8x324xf32>
    tpu.vector_store %arg12[%c16_242, %c0_243], %171 {strides = array<i32>} : memref<72x1156xf32, #tpu.memory_space<vmem>>, vector<8x324xf32>,
    %c0_244 = arith.constant 0 : index
    %c18_245 = arith.constant 18 : index
    %173 = vector.load %arg10[%c0_244, %c18_245] : memref<8x362xf32, #tpu.memory_space<vmem>>, vector<8x324xf32>
    %c24_246 = arith.constant 24 : index
    %c0_247 = arith.constant 0 : index
    %174 = vector.load %arg12[%c24_246, %c0_247] : memref<72x1156xf32, #tpu.memory_space<vmem>>, vector<8x324xf32>
    tpu.vector_store %arg12[%c24_246, %c0_247], %173 {strides = array<i32>} : memref<72x1156xf32, #tpu.memory_space<vmem>>, vector<8x324xf32>,
    %c0_248 = arith.constant 0 : index
    %c19_249 = arith.constant 19 : index
    %175 = vector.load %arg10[%c0_248, %c19_249] : memref<8x362xf32, #tpu.memory_space<vmem>>, vector<8x324xf32>
    %c32_250 = arith.constant 32 : index
    %c0_251 = arith.constant 0 : index
    %176 = vector.load %arg12[%c32_250, %c0_251] : memref<72x1156xf32, #tpu.memory_space<vmem>>, vector<8x324xf32>
    tpu.vector_store %arg12[%c32_250, %c0_251], %175 {strides = array<i32>} : memref<72x1156xf32, #tpu.memory_space<vmem>>, vector<8x324xf32>,
    %c0_252 = arith.constant 0 : index
    %c20_253 = arith.constant 20 : index
    %177 = vector.load %arg10[%c0_252, %c20_253] : memref<8x362xf32, #tpu.memory_space<vmem>>, vector<8x324xf32>
    %c40_254 = arith.constant 40 : index
    %c0_255 = arith.constant 0 : index
    %178 = vector.load %arg12[%c40_254, %c0_255] : memref<72x1156xf32, #tpu.memory_space<vmem>>, vector<8x324xf32>
    tpu.vector_store %arg12[%c40_254, %c0_255], %177 {strides = array<i32>} : memref<72x1156xf32, #tpu.memory_space<vmem>>, vector<8x324xf32>,
    %c0_256 = arith.constant 0 : index
    %c36_257 = arith.constant 36 : index
    %179 = vector.load %arg10[%c0_256, %c36_257] : memref<8x362xf32, #tpu.memory_space<vmem>>, vector<8x324xf32>
    %c48_258 = arith.constant 48 : index
    %c0_259 = arith.constant 0 : index
    %180 = vector.load %arg12[%c48_258, %c0_259] : memref<72x1156xf32, #tpu.memory_space<vmem>>, vector<8x324xf32>
    tpu.vector_store %arg12[%c48_258, %c0_259], %179 {strides = array<i32>} : memref<72x1156xf32, #tpu.memory_space<vmem>>, vector<8x324xf32>,
    %c0_260 = arith.constant 0 : index
    %c37_261 = arith.constant 37 : index
    %181 = vector.load %arg10[%c0_260, %c37_261] : memref<8x362xf32, #tpu.memory_space<vmem>>, vector<8x324xf32>
    %c56_262 = arith.constant 56 : index
    %c0_263 = arith.constant 0 : index
    %182 = vector.load %arg12[%c56_262, %c0_263] : memref<72x1156xf32, #tpu.memory_space<vmem>>, vector<8x324xf32>
    tpu.vector_store %arg12[%c56_262, %c0_263], %181 {strides = array<i32>} : memref<72x1156xf32, #tpu.memory_space<vmem>>, vector<8x324xf32>,
    %c0_264 = arith.constant 0 : index
    %c38_265 = arith.constant 38 : index
    %183 = vector.load %arg10[%c0_264, %c38_265] : memref<8x362xf32, #tpu.memory_space<vmem>>, vector<8x324xf32>
    %c64_266 = arith.constant 64 : index
    %c0_267 = arith.constant 0 : index
    %184 = vector.load %arg12[%c64_266, %c0_267] : memref<72x1156xf32, #tpu.memory_space<vmem>>, vector<8x324xf32>
    tpu.vector_store %arg12[%c64_266, %c0_267], %183 {strides = array<i32>} : memref<72x1156xf32, #tpu.memory_space<vmem>>, vector<8x324xf32>,
    %c0_268 = arith.constant 0 : index
    %c0_269 = arith.constant 0 : index
    %185 = vector.load %arg12[%c0_268, %c0_269] : memref<72x1156xf32, #tpu.memory_space<vmem>>, vector<72x324xf32>
    %cst_270 = arith.constant dense<0.000000e+00> : vector<8x324xf32>
    %186 = tpu.matmul %164, %185, %cst_270 {dimension_numbers = #tpu.dot_dimension_numbers<[1], [0], [0], [1], [0, 0, 1, 1], [], []>} : vector<8x72xf32>, vector<72x324xf32>, vector<8x324xf32> -> vector<8x324xf32>
    %187 = vector.broadcast %166 : vector<8x1xf32> to vector<8x324xf32>
    %188 = arith.addf %186, %187 : vector<8x324xf32>
    %cst_271 = arith.constant 0.000000e+00 : f32
    %189 = vector.broadcast %cst_271 : f32 to vector<8x324xf32>
    %190 = arith.maximumf %188, %189 : vector<8x324xf32>
    %191 = vector.broadcast %104 : vector<1x324xf32> to vector<8x324xf32>
    %192 = arith.mulf %190, %191 : vector<8x324xf32>
    %c0_272 = arith.constant 0 : index
    %c19_273 = arith.constant 19 : index
    %193 = vector.load %arg11[%c0_272, %c19_273] : memref<8x362xf32, #tpu.memory_space<vmem>>, vector<8x324xf32>
    tpu.vector_store %arg11[%c0_272, %c19_273], %192 {strides = array<i32>} : memref<8x362xf32, #tpu.memory_space<vmem>>, vector<8x324xf32>,
    %c3_274 = arith.constant 3 : index
    %c0_275 = arith.constant 0 : index
    %c0_276 = arith.constant 0 : index
    %194 = vector.load %arg2[%c3_274, %c0_275, %c0_276] : memref<5x8x72xf32, #tpu.memory_space<vmem>>, vector<1x8x72xf32>
    %195 = vector.shape_cast %194 : vector<1x8x72xf32> to vector<8x72xf32>
    %c3_277 = arith.constant 3 : index
    %c0_278 = arith.constant 0 : index
    %c0_279 = arith.constant 0 : index
    %196 = vector.load %arg3[%c3_277, %c0_278, %c0_279] : memref<5x8x1xf32, #tpu.memory_space<vmem>>, vector<1x8x1xf32>
    %197 = vector.shape_cast %196 : vector<1x8x1xf32> to vector<8x1xf32>
    %c0_280 = arith.constant 0 : index
    %c0_281 = arith.constant 0 : index
    %198 = vector.load %arg11[%c0_280, %c0_281] : memref<8x362xf32, #tpu.memory_space<vmem>>, vector<8x324xf32>
    %c0_282 = arith.constant 0 : index
    %c0_283 = arith.constant 0 : index
    %199 = vector.load %arg12[%c0_282, %c0_283] : memref<72x1156xf32, #tpu.memory_space<vmem>>, vector<8x324xf32>
    tpu.vector_store %arg12[%c0_282, %c0_283], %198 {strides = array<i32>} : memref<72x1156xf32, #tpu.memory_space<vmem>>, vector<8x324xf32>,
    %c0_284 = arith.constant 0 : index
    %c1_285 = arith.constant 1 : index
    %200 = vector.load %arg11[%c0_284, %c1_285] : memref<8x362xf32, #tpu.memory_space<vmem>>, vector<8x324xf32>
    %c8_286 = arith.constant 8 : index
    %c0_287 = arith.constant 0 : index
    %201 = vector.load %arg12[%c8_286, %c0_287] : memref<72x1156xf32, #tpu.memory_space<vmem>>, vector<8x324xf32>
    tpu.vector_store %arg12[%c8_286, %c0_287], %200 {strides = array<i32>} : memref<72x1156xf32, #tpu.memory_space<vmem>>, vector<8x324xf32>,
    %c0_288 = arith.constant 0 : index
    %c2_289 = arith.constant 2 : index
    %202 = vector.load %arg11[%c0_288, %c2_289] : memref<8x362xf32, #tpu.memory_space<vmem>>, vector<8x324xf32>
    %c16_290 = arith.constant 16 : index
    %c0_291 = arith.constant 0 : index
    %203 = vector.load %arg12[%c16_290, %c0_291] : memref<72x1156xf32, #tpu.memory_space<vmem>>, vector<8x324xf32>
    tpu.vector_store %arg12[%c16_290, %c0_291], %202 {strides = array<i32>} : memref<72x1156xf32, #tpu.memory_space<vmem>>, vector<8x324xf32>,
    %c0_292 = arith.constant 0 : index
    %c18_293 = arith.constant 18 : index
    %204 = vector.load %arg11[%c0_292, %c18_293] : memref<8x362xf32, #tpu.memory_space<vmem>>, vector<8x324xf32>
    %c24_294 = arith.constant 24 : index
    %c0_295 = arith.constant 0 : index
    %205 = vector.load %arg12[%c24_294, %c0_295] : memref<72x1156xf32, #tpu.memory_space<vmem>>, vector<8x324xf32>
    tpu.vector_store %arg12[%c24_294, %c0_295], %204 {strides = array<i32>} : memref<72x1156xf32, #tpu.memory_space<vmem>>, vector<8x324xf32>,
    %c0_296 = arith.constant 0 : index
    %c19_297 = arith.constant 19 : index
    %206 = vector.load %arg11[%c0_296, %c19_297] : memref<8x362xf32, #tpu.memory_space<vmem>>, vector<8x324xf32>
    %c32_298 = arith.constant 32 : index
    %c0_299 = arith.constant 0 : index
    %207 = vector.load %arg12[%c32_298, %c0_299] : memref<72x1156xf32, #tpu.memory_space<vmem>>, vector<8x324xf32>
    tpu.vector_store %arg12[%c32_298, %c0_299], %206 {strides = array<i32>} : memref<72x1156xf32, #tpu.memory_space<vmem>>, vector<8x324xf32>,
    %c0_300 = arith.constant 0 : index
    %c20_301 = arith.constant 20 : index
    %208 = vector.load %arg11[%c0_300, %c20_301] : memref<8x362xf32, #tpu.memory_space<vmem>>, vector<8x324xf32>
    %c40_302 = arith.constant 40 : index
    %c0_303 = arith.constant 0 : index
    %209 = vector.load %arg12[%c40_302, %c0_303] : memref<72x1156xf32, #tpu.memory_space<vmem>>, vector<8x324xf32>
    tpu.vector_store %arg12[%c40_302, %c0_303], %208 {strides = array<i32>} : memref<72x1156xf32, #tpu.memory_space<vmem>>, vector<8x324xf32>,
    %c0_304 = arith.constant 0 : index
    %c36_305 = arith.constant 36 : index
    %210 = vector.load %arg11[%c0_304, %c36_305] : memref<8x362xf32, #tpu.memory_space<vmem>>, vector<8x324xf32>
    %c48_306 = arith.constant 48 : index
    %c0_307 = arith.constant 0 : index
    %211 = vector.load %arg12[%c48_306, %c0_307] : memref<72x1156xf32, #tpu.memory_space<vmem>>, vector<8x324xf32>
    tpu.vector_store %arg12[%c48_306, %c0_307], %210 {strides = array<i32>} : memref<72x1156xf32, #tpu.memory_space<vmem>>, vector<8x324xf32>,
    %c0_308 = arith.constant 0 : index
    %c37_309 = arith.constant 37 : index
    %212 = vector.load %arg11[%c0_308, %c37_309] : memref<8x362xf32, #tpu.memory_space<vmem>>, vector<8x324xf32>
    %c56_310 = arith.constant 56 : index
    %c0_311 = arith.constant 0 : index
    %213 = vector.load %arg12[%c56_310, %c0_311] : memref<72x1156xf32, #tpu.memory_space<vmem>>, vector<8x324xf32>
    tpu.vector_store %arg12[%c56_310, %c0_311], %212 {strides = array<i32>} : memref<72x1156xf32, #tpu.memory_space<vmem>>, vector<8x324xf32>,
    %c0_312 = arith.constant 0 : index
    %c38_313 = arith.constant 38 : index
    %214 = vector.load %arg11[%c0_312, %c38_313] : memref<8x362xf32, #tpu.memory_space<vmem>>, vector<8x324xf32>
    %c64_314 = arith.constant 64 : index
    %c0_315 = arith.constant 0 : index
    %215 = vector.load %arg12[%c64_314, %c0_315] : memref<72x1156xf32, #tpu.memory_space<vmem>>, vector<8x324xf32>
    tpu.vector_store %arg12[%c64_314, %c0_315], %214 {strides = array<i32>} : memref<72x1156xf32, #tpu.memory_space<vmem>>, vector<8x324xf32>,
    %c0_316 = arith.constant 0 : index
    %c0_317 = arith.constant 0 : index
    %216 = vector.load %arg12[%c0_316, %c0_317] : memref<72x1156xf32, #tpu.memory_space<vmem>>, vector<72x324xf32>
    %cst_318 = arith.constant dense<0.000000e+00> : vector<8x324xf32>
    %217 = tpu.matmul %195, %216, %cst_318 {dimension_numbers = #tpu.dot_dimension_numbers<[1], [0], [0], [1], [0, 0, 1, 1], [], []>} : vector<8x72xf32>, vector<72x324xf32>, vector<8x324xf32> -> vector<8x324xf32>
    %218 = vector.broadcast %197 : vector<8x1xf32> to vector<8x324xf32>
    %219 = arith.addf %217, %218 : vector<8x324xf32>
    %c4_319 = arith.constant 4 : index
    %c0_320 = arith.constant 0 : index
    %c0_321 = arith.constant 0 : index
    %220 = vector.load %arg2[%c4_319, %c0_320, %c0_321] : memref<5x8x72xf32, #tpu.memory_space<vmem>>, vector<1x8x72xf32>
    %221 = vector.shape_cast %220 : vector<1x8x72xf32> to vector<8x72xf32>
    %c4_322 = arith.constant 4 : index
    %c0_323 = arith.constant 0 : index
    %c0_324 = arith.constant 0 : index
    %222 = vector.load %arg3[%c4_322, %c0_323, %c0_324] : memref<5x8x1xf32, #tpu.memory_space<vmem>>, vector<1x8x1xf32>
    %223 = vector.shape_cast %222 : vector<1x8x1xf32> to vector<8x1xf32>
    %c0_325 = arith.constant 0 : index
    %c0_326 = arith.constant 0 : index
    %224 = vector.load %arg10[%c0_325, %c0_326] : memref<8x362xf32, #tpu.memory_space<vmem>>, vector<8x324xf32>
    %c0_327 = arith.constant 0 : index
    %c0_328 = arith.constant 0 : index
    %225 = vector.load %arg12[%c0_327, %c0_328] : memref<72x1156xf32, #tpu.memory_space<vmem>>, vector<8x324xf32>
    tpu.vector_store %arg12[%c0_327, %c0_328], %224 {strides = array<i32>} : memref<72x1156xf32, #tpu.memory_space<vmem>>, vector<8x324xf32>,
    %c0_329 = arith.constant 0 : index
    %c1_330 = arith.constant 1 : index
    %226 = vector.load %arg10[%c0_329, %c1_330] : memref<8x362xf32, #tpu.memory_space<vmem>>, vector<8x324xf32>
    %c8_331 = arith.constant 8 : index
    %c0_332 = arith.constant 0 : index
    %227 = vector.load %arg12[%c8_331, %c0_332] : memref<72x1156xf32, #tpu.memory_space<vmem>>, vector<8x324xf32>
    tpu.vector_store %arg12[%c8_331, %c0_332], %226 {strides = array<i32>} : memref<72x1156xf32, #tpu.memory_space<vmem>>, vector<8x324xf32>,
    %c0_333 = arith.constant 0 : index
    %c2_334 = arith.constant 2 : index
    %228 = vector.load %arg10[%c0_333, %c2_334] : memref<8x362xf32, #tpu.memory_space<vmem>>, vector<8x324xf32>
    %c16_335 = arith.constant 16 : index
    %c0_336 = arith.constant 0 : index
    %229 = vector.load %arg12[%c16_335, %c0_336] : memref<72x1156xf32, #tpu.memory_space<vmem>>, vector<8x324xf32>
    tpu.vector_store %arg12[%c16_335, %c0_336], %228 {strides = array<i32>} : memref<72x1156xf32, #tpu.memory_space<vmem>>, vector<8x324xf32>,
    %c0_337 = arith.constant 0 : index
    %c18_338 = arith.constant 18 : index
    %230 = vector.load %arg10[%c0_337, %c18_338] : memref<8x362xf32, #tpu.memory_space<vmem>>, vector<8x324xf32>
    %c24_339 = arith.constant 24 : index
    %c0_340 = arith.constant 0 : index
    %231 = vector.load %arg12[%c24_339, %c0_340] : memref<72x1156xf32, #tpu.memory_space<vmem>>, vector<8x324xf32>
    tpu.vector_store %arg12[%c24_339, %c0_340], %230 {strides = array<i32>} : memref<72x1156xf32, #tpu.memory_space<vmem>>, vector<8x324xf32>,
    %c0_341 = arith.constant 0 : index
    %c19_342 = arith.constant 19 : index
    %232 = vector.load %arg10[%c0_341, %c19_342] : memref<8x362xf32, #tpu.memory_space<vmem>>, vector<8x324xf32>
    %c32_343 = arith.constant 32 : index
    %c0_344 = arith.constant 0 : index
    %233 = vector.load %arg12[%c32_343, %c0_344] : memref<72x1156xf32, #tpu.memory_space<vmem>>, vector<8x324xf32>
    tpu.vector_store %arg12[%c32_343, %c0_344], %232 {strides = array<i32>} : memref<72x1156xf32, #tpu.memory_space<vmem>>, vector<8x324xf32>,
    %c0_345 = arith.constant 0 : index
    %c20_346 = arith.constant 20 : index
    %234 = vector.load %arg10[%c0_345, %c20_346] : memref<8x362xf32, #tpu.memory_space<vmem>>, vector<8x324xf32>
    %c40_347 = arith.constant 40 : index
    %c0_348 = arith.constant 0 : index
    %235 = vector.load %arg12[%c40_347, %c0_348] : memref<72x1156xf32, #tpu.memory_space<vmem>>, vector<8x324xf32>
    tpu.vector_store %arg12[%c40_347, %c0_348], %234 {strides = array<i32>} : memref<72x1156xf32, #tpu.memory_space<vmem>>, vector<8x324xf32>,
    %c0_349 = arith.constant 0 : index
    %c36_350 = arith.constant 36 : index
    %236 = vector.load %arg10[%c0_349, %c36_350] : memref<8x362xf32, #tpu.memory_space<vmem>>, vector<8x324xf32>
    %c48_351 = arith.constant 48 : index
    %c0_352 = arith.constant 0 : index
    %237 = vector.load %arg12[%c48_351, %c0_352] : memref<72x1156xf32, #tpu.memory_space<vmem>>, vector<8x324xf32>
    tpu.vector_store %arg12[%c48_351, %c0_352], %236 {strides = array<i32>} : memref<72x1156xf32, #tpu.memory_space<vmem>>, vector<8x324xf32>,
    %c0_353 = arith.constant 0 : index
    %c37_354 = arith.constant 37 : index
    %238 = vector.load %arg10[%c0_353, %c37_354] : memref<8x362xf32, #tpu.memory_space<vmem>>, vector<8x324xf32>
    %c56_355 = arith.constant 56 : index
    %c0_356 = arith.constant 0 : index
    %239 = vector.load %arg12[%c56_355, %c0_356] : memref<72x1156xf32, #tpu.memory_space<vmem>>, vector<8x324xf32>
    tpu.vector_store %arg12[%c56_355, %c0_356], %238 {strides = array<i32>} : memref<72x1156xf32, #tpu.memory_space<vmem>>, vector<8x324xf32>,
    %c0_357 = arith.constant 0 : index
    %c38_358 = arith.constant 38 : index
    %240 = vector.load %arg10[%c0_357, %c38_358] : memref<8x362xf32, #tpu.memory_space<vmem>>, vector<8x324xf32>
    %c64_359 = arith.constant 64 : index
    %c0_360 = arith.constant 0 : index
    %241 = vector.load %arg12[%c64_359, %c0_360] : memref<72x1156xf32, #tpu.memory_space<vmem>>, vector<8x324xf32>
    tpu.vector_store %arg12[%c64_359, %c0_360], %240 {strides = array<i32>} : memref<72x1156xf32, #tpu.memory_space<vmem>>, vector<8x324xf32>,
    %c0_361 = arith.constant 0 : index
    %c0_362 = arith.constant 0 : index
    %242 = vector.load %arg12[%c0_361, %c0_362] : memref<72x1156xf32, #tpu.memory_space<vmem>>, vector<72x324xf32>
    %cst_363 = arith.constant dense<0.000000e+00> : vector<8x324xf32>
    %243 = tpu.matmul %221, %242, %cst_363 {dimension_numbers = #tpu.dot_dimension_numbers<[1], [0], [0], [1], [0, 0, 1, 1], [], []>} : vector<8x72xf32>, vector<72x324xf32>, vector<8x324xf32> -> vector<8x324xf32>
    %244 = vector.broadcast %223 : vector<8x1xf32> to vector<8x324xf32>
    %245 = arith.addf %243, %244 : vector<8x324xf32>
    %246 = arith.addf %219, %245 : vector<8x324xf32>
    %c0_364 = arith.constant 0 : index
    %c0_365 = arith.constant 0 : index
    %247 = vector.load %arg5[%c0_364, %c0_365] : memref<324x256xf32, #tpu.memory_space<vmem>>, vector<324x256xf32>
    %cst_366 = arith.constant dense<0.000000e+00> : vector<8x256xf32>
    %248 = tpu.matmul %246, %247, %cst_366 {dimension_numbers = #tpu.dot_dimension_numbers<[1], [0], [0], [1], [0, 0, 1, 1], [], []>} : vector<8x324xf32>, vector<324x256xf32>, vector<8x256xf32> -> vector<8x256xf32>
    %c0_367 = arith.constant 0 : index
    %c0_368 = arith.constant 0 : index
    %c0_369 = arith.constant 0 : index
    %249 = vector.load %arg7[%c0_367, %c0_368, %c0_369] : memref<1x8x256xf32, #tpu.memory_space<vmem>>, vector<1x8x256xf32>
    %250 = vector.shape_cast %249 : vector<1x8x256xf32> to vector<8x256xf32>
    %251 = vector.shape_cast %248 : vector<8x256xf32> to vector<1x8x256xf32>
    tpu.vector_store %arg7[%c0_367, %c0_368, %c0_369], %251 {strides = array<i32>} : memref<1x8x256xf32, #tpu.memory_space<vmem>>, vector<1x8x256xf32>,
    return
  }
  func.func @transform_0(%arg0: i32) -> (i32, i32, i32, i32) {
    %c0_i32 = arith.constant 0 : i32
    %c0_i32_0 = arith.constant 0 : i32
    %c0_i32_1 = arith.constant 0 : i32
    %c0_i32_2 = arith.constant 0 : i32
    return %arg0, %c0_i32, %c0_i32_0, %c0_i32_1 : i32, i32, i32, i32
  }
  func.func @transform_1(%arg0: i32) -> (i32, i32, i32) {
    %c0_i32 = arith.constant 0 : i32
    %c0_i32_0 = arith.constant 0 : i32
    %c0_i32_1 = arith.constant 0 : i32
    %c0_i32_2 = arith.constant 0 : i32
    return %c0_i32, %c0_i32_0, %c0_i32_1 : i32, i32, i32
  }
  func.func @transform_2(%arg0: i32) -> (i32, i32, i32) {
    %c0_i32 = arith.constant 0 : i32
    %c0_i32_0 = arith.constant 0 : i32
    %c0_i32_1 = arith.constant 0 : i32
    %c0_i32_2 = arith.constant 0 : i32
    return %c0_i32, %c0_i32_0, %c0_i32_1 : i32, i32, i32
  }
  func.func @transform_3(%arg0: i32) -> (i32, i32) {
    %c0_i32 = arith.constant 0 : i32
    %c0_i32_0 = arith.constant 0 : i32
    %c0_i32_1 = arith.constant 0 : i32
    return %c0_i32, %c0_i32_0 : i32, i32
  }
  func.func @transform_4(%arg0: i32) -> (i32, i32) {
    %c0_i32 = arith.constant 0 : i32
    %c0_i32_0 = arith.constant 0 : i32
    %c0_i32_1 = arith.constant 0 : i32
    return %c0_i32, %c0_i32_0 : i32, i32
  }
  func.func @transform_5(%arg0: i32) -> (i32, i32) {
    %c0_i32 = arith.constant 0 : i32
    %c0_i32_0 = arith.constant 0 : i32
    %c0_i32_1 = arith.constant 0 : i32
    return %c0_i32, %c0_i32_0 : i32, i32
  }
  func.func @transform_6(%arg0: i32) -> (i32, i32, i32) {
    %c0_i32 = arith.constant 0 : i32
    %c0_i32_0 = arith.constant 0 : i32
    %c0_i32_1 = arith.constant 0 : i32
    return %arg0, %c0_i32, %c0_i32_0 : i32, i32, i32
  }
}

</mosaic_0001>

<llo_original>
// kernel: tpu_custom_call.1
$region0: #{tpu_custom_call.1}
  #allocation0 [shape = 'u32[]', space=smem, size = 0x4, offset = 0x4, fixed_abs, tag = 'smem constant byte address 0x4 - core index']
  #allocation1 [shape = 'u32[144,128]{1,0:T(1,128)}', space=vmem, size = 0x12000, scoped, tag = 'internal scratch']
  #allocation2 [shape = 'f32[8,1226]{1,0:T(8,128)}', space=vmem, size = 0xa000, scoped, tag = 'scratch operand']
  #allocation3 [shape = 'f32[8,362]{1,0:T(8,128)}', space=vmem, size = 0x3000, scoped, tag = 'scratch operand']
  #allocation4 [shape = 'f32[8,362]{1,0:T(8,128)}', space=vmem, size = 0x3000, scoped, tag = 'scratch operand']
  #allocation5 [shape = 'f32[8,362]{1,0:T(8,128)}', space=vmem, size = 0x3000, scoped, tag = 'scratch operand']
  #allocation6 [shape = 'f32[72,1156]{1,0:T(8,128)}', space=vmem, size = 0x5a000, scoped, tag = 'scratch operand']
  %s0 = inlined_call_operand.vmem [shape: f32[2,8,32,32], index: 0, kind: input, shape index: {}]
  %s1 = inlined_call_operand.vmem [shape: f32[5,8,72], index: 1, kind: input, shape index: {}]
  %s2 = inlined_call_operand.vmem [shape: f32[5,8,1], index: 2, kind: input, shape index: {}]
  %s3 = inlined_call_operand.vmem [shape: f32[1156,324], index: 3, kind: input, shape index: {}]
  %s4 = inlined_call_operand.vmem [shape: f32[324,256], index: 4, kind: input, shape index: {}]
  %s5 = inlined_call_operand.vmem [shape: f32[1,324], index: 5, kind: input, shape index: {}]
  %s6 = inlined_call_operand.hbm [shape: f32[2,8,256], index: 6, kind: output, shape index: {}]
  %s7 = sld [smem:[#allocation0]]
  $region57: #{tpu_custom_call.1} parent=0
    _
  %s9 = ssub.s32 1, %s7
  %s10 = scalar_select 0, %s9, %s7
  $region1: #{tpu_custom_call.1} parent=0
    #allocation7 [shape = 'u8[16384]{0}', space=vmem, size = 0x4000, scoped, tag = 'output window, operand 0']
    #allocation8 [shape = 's32[2]{0}', space=sflag, size = 0x8, scoped, tag = 'scoped memory for tpu_custom_call.1']
    %11 = vsyncpa [#allocation8], 0
    %s12 = scalar_lea.sflag [#allocation8], 1
    %13 = vsyncpa %s12, 0
    loop: start=0, step=1, limit=4
    $region2: #{tpu_custom_call.1} parent=1 // loop_pre_header
      _
    $region3: #{tpu_custom_call.1} parent=1 // loop_header
      %s15 = sphi 0, %s19
      %p16 = scmp.ge.s32.totalorder %s15, 4
      %s25 = sphi 0, %s27
      %s28 = sphi 0, %s25
      %s29 = sphi 0, %s28
      %s45 = sphi 0, %s29
      %s49 = sphi 0, %s49
      %s51 = sphi 0, %s49
      %s52 = sphi 0, %s51
      %s66 = sphi 0, %s52
      %s70 = sphi 0, %s70
      %s72 = sphi 0, %s70
      %s73 = sphi 0, %s72
      %s87 = sphi 0, %s73
      %s91 = sphi 0, %s91
      %s93 = sphi 0, %s91
      %s94 = sphi 0, %s93
      %s108 = sphi 0, %s94
      %s112 = sphi 0, %s112
      %s114 = sphi 0, %s112
      %s115 = sphi 0, %s114
      %s129 = sphi 0, %s115
      %s133 = sphi 0, %s133
      %s135 = sphi 0, %s133
      %s136 = sphi 0, %s135
      %s150 = sphi 0, %s136
      %s156 = sphi 0, %s158
      %s159 = sphi 0, %s156
      %s160 = sphi 0, %s159
      %s176 = sphi 0, %s160
    $region4: #{tpu_custom_call.1} parent=1 // loop_header_branch
      %18 = sbr.rel (%p16) target = $region8
    $region5: #{tpu_custom_call.1} parent=1 // loop_body
      %s20 = ssub.s32 %s15, 1
      %s21 = ssub.s32 %s15, 2
      %s22 = sadd.s32 %s15, 1
      %s23 = ssub.s32 %s15, %s22
      %p24 = scmp.eq.s32.totalorder %s23, 0
      %s26 = sadd.s32 %s25, 1
      %s27 = scalar_select %p24, %s25, %s26
      %p30 = pneg %p24
      %p31 = scmp.eq.s32.totalorder %s15, 1
      %p32 = por %p30, %p31
      %p33 = scmp.ne.s32.totalorder %s25, %s28
      %p34 = scmp.eq.s32.totalorder %s15, 0
      %p35 = por %p33, %p34
      %p36 = scmp.ne.s32.totalorder %s25, %s28
      %p37 = scmp.eq.s32.totalorder %s20, 1
      %p38 = por %p36, %p37
      %p39 = scmp.ne.s32.totalorder %s28, %s29
      %p40 = scmp.eq.s32.totalorder %s20, 0
      %p41 = por %p39, %p40
      %p42 = scmp.ne.s32.totalorder %s28, %s29
      %p43 = scmp.eq.s32.totalorder %s21, 1
      %p44 = por %p42, %p43
      %p46 = scmp.ne.s32.totalorder %s29, %s45
      %p47 = scmp.eq.s32.totalorder %s21, 0
      %p48 = por %p46, %p47
      %s50 = sadd.s32 %s49, 1
      %p53 = scmp.eq.s32.totalorder %s15, 1
      %p54 = scmp.ne.s32.totalorder %s49, %s51
      %p55 = scmp.eq.s32.totalorder %s15, 0
      %p56 = por %p54, %p55
      %p57 = scmp.ne.s32.totalorder %s49, %s51
      %p58 = scmp.eq.s32.totalorder %s20, 1
      %p59 = por %p57, %p58
      %p60 = scmp.ne.s32.totalorder %s51, %s52
      %p61 = scmp.eq.s32.totalorder %s20, 0
      %p62 = por %p60, %p61
      %p63 = scmp.ne.s32.totalorder %s51, %s52
      %p64 = scmp.eq.s32.totalorder %s21, 1
      %p65 = por %p63, %p64
      %p67 = scmp.ne.s32.totalorder %s52, %s66
      %p68 = scmp.eq.s32.totalorder %s21, 0
      %p69 = por %p67, %p68
      %s71 = sadd.s32 %s70, 1
      %p74 = scmp.eq.s32.totalorder %s15, 1
      %p75 = scmp.ne.s32.totalorder %s70, %s72
      %p76 = scmp.eq.s32.totalorder %s15, 0
      %p77 = por %p75, %p76
      %p78 = scmp.ne.s32.totalorder %s70, %s72
      %p79 = scmp.eq.s32.totalorder %s20, 1
      %p80 = por %p78, %p79
      %p81 = scmp.ne.s32.totalorder %s72, %s73
      %p82 = scmp.eq.s32.totalorder %s20, 0
      %p83 = por %p81, %p82
      %p84 = scmp.ne.s32.totalorder %s72, %s73
      %p85 = scmp.eq.s32.totalorder %s21, 1
      %p86 = por %p84, %p85
      %p88 = scmp.ne.s32.totalorder %s73, %s87
      %p89 = scmp.eq.s32.totalorder %s21, 0
      %p90 = por %p88, %p89
      %s92 = sadd.s32 %s91, 1
      %p95 = scmp.eq.s32.totalorder %s15, 1
      %p96 = scmp.ne.s32.totalorder %s91, %s93
      %p97 = scmp.eq.s32.totalorder %s15, 0
      %p98 = por %p96, %p97
      %p99 = scmp.ne.s32.totalorder %s91, %s93
      %p100 = scmp.eq.s32.totalorder %s20, 1
      %p101 = por %p99, %p100
      %p102 = scmp.ne.s32.totalorder %s93, %s94
      %p103 = scmp.eq.s32.totalorder %s20, 0
      %p104 = por %p102, %p103
      %p105 = scmp.ne.s32.totalorder %s93, %s94
      %p106 = scmp.eq.s32.totalorder %s21, 1
      %p107 = por %p105, %p106
      %p109 = scmp.ne.s32.totalorder %s94, %s108
      %p110 = scmp.eq.s32.totalorder %s21, 0
      %p111 = por %p109, %p110
      %s113 = sadd.s32 %s112, 1
      %p116 = scmp.eq.s32.totalorder %s15, 1
      %p117 = scmp.ne.s32.totalorder %s112, %s114
      %p118 = scmp.eq.s32.totalorder %s15, 0
      %p119 = por %p117, %p118
      %p120 = scmp.ne.s32.totalorder %s112, %s114
      %p121 = scmp.eq.s32.totalorder %s20, 1
      %p122 = por %p120, %p121
      %p123 = scmp.ne.s32.totalorder %s114, %s115
      %p124 = scmp.eq.s32.totalorder %s20, 0
      %p125 = por %p123, %p124
      %p126 = scmp.ne.s32.totalorder %s114, %s115
      %p127 = scmp.eq.s32.totalorder %s21, 1
      %p128 = por %p126, %p127
      %p130 = scmp.ne.s32.totalorder %s115, %s129
      %p131 = scmp.eq.s32.totalorder %s21, 0
      %p132 = por %p130, %p131
      %s134 = sadd.s32 %s133, 1
      %p137 = scmp.eq.s32.totalorder %s15, 1
      %p138 = scmp.ne.s32.totalorder %s133, %s135
      %p139 = scmp.eq.s32.totalorder %s15, 0
      %p140 = por %p138, %p139
      %p141 = scmp.ne.s32.totalorder %s133, %s135
      %p142 = scmp.eq.s32.totalorder %s20, 1
      %p143 = por %p141, %p142
      %p144 = scmp.ne.s32.totalorder %s135, %s136
      %p145 = scmp.eq.s32.totalorder %s20, 0
      %p146 = por %p144, %p145
      %p147 = scmp.ne.s32.totalorder %s135, %s136
      %p148 = scmp.eq.s32.totalorder %s21, 1
      %p149 = por %p147, %p148
      %p151 = scmp.ne.s32.totalorder %s136, %s150
      %p152 = scmp.eq.s32.totalorder %s21, 0
      %p153 = por %p151, %p152
      %s154 = ssub.s32 %s15, %s22
      %p155 = scmp.eq.s32.totalorder %s154, 0
      %s157 = sadd.s32 %s156, 1
      %s158 = scalar_select %p155, %s156, %s157
      %p161 = pneg %p155
      %p162 = scmp.eq.s32.totalorder %s15, 1
      %p163 = por %p161, %p162
      %p164 = scmp.ne.s32.totalorder %s156, %s159
      %p165 = scmp.eq.s32.totalorder %s15, 0
      %p166 = por %p164, %p165
      %p167 = scmp.ne.s32.totalorder %s156, %s159
      %p168 = scmp.eq.s32.totalorder %s20, 1
      %p169 = por %p167, %p168
      %p170 = scmp.ne.s32.totalorder %s159, %s160
      %p171 = scmp.eq.s32.totalorder %s20, 0
      %p172 = por %p170, %p171
      %p173 = scmp.ne.s32.totalorder %s159, %s160
      %p174 = scmp.eq.s32.totalorder %s21, 1
      %p175 = por %p173, %p174
      %p177 = scmp.ne.s32.totalorder %s160, %s176
      %p178 = scmp.eq.s32.totalorder %s21, 0
      %p179 = por %p177, %p178
      %p180 = scmp.le.s32.totalorder 1, %s15
      %p181 = scmp.lt.s32.totalorder %s15, 3
      %p182 = pnand %p180, %p181
      %p183 = pneg %p182
      // Predicated region
      $region9: #{tpu_custom_call.1} parent=5 // pred_check
        _
      $region10: #{tpu_custom_call.1} parent=5 // pred_check_branch
        %185 = sbr.rel (%p182) target = $region12
      $region11: #{tpu_custom_call.1} parent=5 // pred_region
        %s186 = ssub.s32 %s15, 1
        // Predicated region
        $region13: #{tpu_custom_call.1} parent=11 // pred_check
          %p187 = pneg %p62
        $region14: #{tpu_custom_call.1} parent=11 // pred_check_branch
          %189 = sbr.rel (%p187) target = $region16
        $region15: #{tpu_custom_call.1} parent=11 // pred_region
          _
        $region16: #{tpu_custom_call.1} parent=11 // pred_fallthru
          _
        // Predicated region
        $region17: #{tpu_custom_call.1} parent=11 // pred_check
          %p190 = pneg %p83
        $region18: #{tpu_custom_call.1} parent=11 // pred_check_branch
          %192 = sbr.rel (%p190) target = $region20
        $region19: #{tpu_custom_call.1} parent=11 // pred_region
          _
        $region20: #{tpu_custom_call.1} parent=11 // pred_fallthru
          _
        // Predicated region
        $region21: #{tpu_custom_call.1} parent=11 // pred_check
          %p193 = pneg %p104
        $region22: #{tpu_custom_call.1} parent=11 // pred_check_branch
          %195 = sbr.rel (%p193) target = $region24
        $region23: #{tpu_custom_call.1} parent=11 // pred_region
          _
        $region24: #{tpu_custom_call.1} parent=11 // pred_fallthru
          _
        // Predicated region
        $region25: #{tpu_custom_call.1} parent=11 // pred_check
          %p196 = pneg %p125
        $region26: #{tpu_custom_call.1} parent=11 // pred_check_branch
          %198 = sbr.rel (%p196) target = $region28
        $region27: #{tpu_custom_call.1} parent=11 // pred_region
          _
        $region28: #{tpu_custom_call.1} parent=11 // pred_fallthru
          _
        // Predicated region
        $region29: #{tpu_custom_call.1} parent=11 // pred_check
          %p199 = pneg %p146
        $region30: #{tpu_custom_call.1} parent=11 // pred_check_branch
          %201 = sbr.rel (%p199) target = $region32
        $region31: #{tpu_custom_call.1} parent=11 // pred_region
          _
        $region32: #{tpu_custom_call.1} parent=11 // pred_fallthru
          _
      $region12: #{tpu_custom_call.1} parent=5 // pred_fallthru
        _
      %p202 = scmp.lt.s32.totalorder %s15, 2
      // Predicated region
      $region33: #{tpu_custom_call.1} parent=5 // pred_check
        %p203 = pneg %p202
      $region34: #{tpu_custom_call.1} parent=5 // pred_check_branch
        %205 = sbr.rel (%p203) target = $region36
      $region35: #{tpu_custom_call.1} parent=5 // pred_region
        // Predicated region
        $region37: #{tpu_custom_call.1} parent=35 // pred_check
          %p206 = pneg %p35
        $region38: #{tpu_custom_call.1} parent=35 // pred_check_branch
          %208 = sbr.rel (%p206) target = $region40
        $region39: #{tpu_custom_call.1} parent=35 // pred_region
          %p209 = scmp.lt.s32.totalorder %s15, 1
          %s210 = scalar_select %p209, %s15, 1
          %s211 = smul.addr %s210, 32
          %s212 = smul.addr %s211, 8
          %s213 = scalar_lea.vmem %s0, %s212
        $region40: #{tpu_custom_call.1} parent=35 // pred_fallthru
          _
      $region36: #{tpu_custom_call.1} parent=5 // pred_fallthru
        _
      %p214 = scmp.le.s32.totalorder 1, %s15
      %p215 = scmp.lt.s32.totalorder %s15, 3
      %p216 = pnand %p214, %p215
      %p217 = pneg %p216
      // Predicated region
      $region41: #{tpu_custom_call.1} parent=5 // pred_check
        _
      $region42: #{tpu_custom_call.1} parent=5 // pred_check_branch
        %219 = sbr.rel (%p216) target = $region44
      $region43: #{tpu_custom_call.1} parent=5 // pred_region
        %s220 = ssub.s32 %s15, 1
        %p221 = scmp.lt.s32.totalorder %s20, 1
        %s222 = scalar_select %p221, %s20, 1
        %s223 = smul.addr %s222, 32
        %s224 = smul.addr %s223, 8
        %s225 = scalar_lea.vmem %s0, %s224
        %p226 = pneg %p41
        %p227 = pneg %p38
        %p228 = pneg %p62
        %p229 = pneg %p59
        %p230 = pneg %p83
        %p231 = pneg %p80
        %p232 = pneg %p104
        %p233 = pneg %p101
        %p234 = pneg %p125
        %p235 = pneg %p122
        %p236 = pneg %p146
        %p237 = pneg %p143
        %p238 = pneg %p172
        %p239 = pneg %p169
        %s240 = sand.u32 %s159, 1
        %s241 = scalar_lea.sflag [#allocation8], %s240
        %s242 = sand.u32 %s159, 1
        %s243 = smul.addr %s242, 16
        %s244 = scalar_lea.vmem [#allocation7], %s243
        %p245 = scmp.lt.s32.totalorder %s20, 1
        %s246 = scalar_select %p245, %s20, 1
        %s247 = smul.addr %s246, 32
        %s248 = smul.addr %s247, 8
        %s249 = scalar_lea.vmem %s0, %s248
        %250 = vst [vmem:[#allocation2] sm:$0xff] 0.0
        %251 = vst [vmem:[#allocation2 + $0x8] sm:$0xff] 0.0
        %252 = vst [vmem:[#allocation2 + $0x10] sm:$0xff] 0.0
        %253 = vst [vmem:[#allocation2 + $0x18] sm:$0xff] 0.0
        %254 = vst [vmem:[#allocation2 + $0x20] sm:$0xff] 0.0
        %255 = vst [vmem:[#allocation2 + $0x28] sm:$0xff] 0.0
        %256 = vst [vmem:[#allocation2 + $0x30] sm:$0xff] 0.0
        %257 = vst [vmem:[#allocation2 + $0x38] sm:$0xff] 0.0
        %258 = vst [vmem:[#allocation2 + $0x40] sm:$0xff] 0.0
        %vm259 = vcmask 605184
        %260 = vst.msk [vmem:[#allocation2 + $0x48] sm:$0xff] %vm259, 0.0
        %261 = vst [vmem:[#allocation3] sm:$0xff] 0.0
        %262 = vst [vmem:[#allocation3 + $0x8] sm:$0xff] 0.0
        %vm263 = vcmask 867328
        %264 = vst.msk [vmem:[#allocation3 + $0x10] sm:$0xff] %vm263, 0.0
        %265 = vst [vmem:[#allocation4] sm:$0xff] 0.0
        %266 = vst [vmem:[#allocation4 + $0x8] sm:$0xff] 0.0
        %267 = vst.msk [vmem:[#allocation4 + $0x10] sm:$0xff] %vm263, 0.0
        %268 = vst [vmem:[#allocation5] sm:$0xff] 0.0
        %269 = vst [vmem:[#allocation5 + $0x8] sm:$0xff] 0.0
        %270 = vst.msk [vmem:[#allocation5 + $0x10] sm:$0xff] %vm263, 0.0
        %v271 = vld [vmem:[%s249] sm:$0x1]
        %v272 = vld [vmem:[%s249 + $0x20] sm:$0x1]
        %v273 = vld [vmem:[%s249 + $0x40] sm:$0x1]
        %v274 = vld [vmem:[%s249 + $0x60] sm:$0x1]
        %v275 = vld [vmem:[%s249 + $0x80] sm:$0x1]
        %v276 = vld [vmem:[%s249 + $0xa0] sm:$0x1]
        %v277 = vld [vmem:[%s249 + $0xc0] sm:$0x1]
        %v278 = vld [vmem:[%s249 + $0xe0] sm:$0x1]
        %v287 = vrot.slane %v272, 7
        %vm288 = vcmask 1041409
        %v289 = vsel %vm288, %v287, %v271
        %v290 = vrot.slane %v273, 6
        %vm291 = vcmask 1042434
        %v292 = vsel %vm291, %v290, %v289
        %v293 = vrot.slane %v274, 5
        %vm294 = vcmask 1043459
        %v295 = vsel %vm294, %v293, %v292
        %v296 = vrot.slane %v275, 4
        %vm297 = vcmask 1044484
        %v298 = vsel %vm297, %v296, %v295
        %v299 = vrot.slane %v276, 3
        %vm300 = vcmask 1045509
        %v301 = vsel %vm300, %v299, %v298
        %v302 = vrot.slane %v277, 2
        %vm303 = vcmask 1046534
        %v304 = vsel %vm303, %v302, %v301
        %v305 = vrot.slane %v278, 1
        %vm306 = vcmask 1047559
        %v307 = vsel %vm306, %v305, %v304
        %308 = vrot.lane.b32.xlu0 %v307, 70
        %v309 = vpop.permute.xlu0 %308
        %vm311 = vcmask 835120
        %312 = vst.msk [vmem:[#allocation2] sm:$0xff] %vm311, %v309
        %v313 = vld [vmem:[%s249 + $0x1] sm:$0x1]
        %v314 = vld [vmem:[%s249 + $0x21] sm:$0x1]
        %v315 = vld [vmem:[%s249 + $0x41] sm:$0x1]
        %v316 = vld [vmem:[%s249 + $0x61] sm:$0x1]
        %v317 = vld [vmem:[%s249 + $0x81] sm:$0x1]
        %v318 = vld [vmem:[%s249 + $0xa1] sm:$0x1]
        %v319 = vld [vmem:[%s249 + $0xc1] sm:$0x1]
        %v320 = vld [vmem:[%s249 + $0xe1] sm:$0x1]
        %v329 = vrot.slane %v314, 7
        %v330 = vsel %vm288, %v329, %v313
        %v331 = vrot.slane %v315, 6
        %v332 = vsel %vm291, %v331, %v330
        %v333 = vrot.slane %v316, 5
        %v334 = vsel %vm294, %v333, %v332
        %v335 = vrot.slane %v317, 4
        %v336 = vsel %vm297, %v335, %v334
        %v337 = vrot.slane %v318, 3
        %v338 = vsel %vm300, %v337, %v336
        %v339 = vrot.slane %v319, 2
        %v340 = vsel %vm303, %v339, %v338
        %v341 = vrot.slane %v320, 1
        %v342 = vsel %vm306, %v341, %v340
        %343 = vrot.lane.b32.xlu0 %v342, 104
        %v344 = vpop.permute.xlu0 %343
        %vm346 = vcmask 1048384
        %347 = vst.msk [vmem:[#allocation2] sm:$0xff] %vm346, %v344
        %vm348 = vcmask 64512
        %349 = vst.msk [vmem:[#allocation2 + $0x8] sm:$0xff] %vm348, %v344
        %v350 = vld [vmem:[%s249 + $0x2] sm:$0x1]
        %v351 = vld [vmem:[%s249 + $0x22] sm:$0x1]
        %v352 = vld [vmem:[%s249 + $0x42] sm:$0x1]
        %v353 = vld [vmem:[%s249 + $0x62] sm:$0x1]
        %v354 = vld [vmem:[%s249 + $0x82] sm:$0x1]
        %v355 = vld [vmem:[%s249 + $0xa2] sm:$0x1]
        %v356 = vld [vmem:[%s249 + $0xc2] sm:$0x1]
        %v357 = vld [vmem:[%s249 + $0xe2] sm:$0x1]
        %v366 = vrot.slane %v351, 7
        %v367 = vsel %vm288, %v366, %v350
        %v368 = vrot.slane %v352, 6
        %v369 = vsel %vm291, %v368, %v367
        %v370 = vrot.slane %v353, 5
        %v371 = vsel %vm294, %v370, %v369
        %v372 = vrot.slane %v354, 4
        %v373 = vsel %vm297, %v372, %v371
        %v374 = vrot.slane %v355, 3
        %v375 = vsel %vm300, %v374, %v373
        %v376 = vrot.slane %v356, 2
        %v377 = vsel %vm303, %v376, %v375
        %v378 = vrot.slane %v357, 1
        %v379 = vsel %vm306, %v378, %v377
        %380 = vrot.lane.b32.xlu0 %v379, 10
        %v381 = vpop.permute.xlu0 %380
        %vm383 = vcmask 343120
        %384 = vst.msk [vmem:[#allocation2 + $0x8] sm:$0xff] %vm383, %v381
        %v385 = vld [vmem:[%s249 + $0x3] sm:$0x1]
        %v386 = vld [vmem:[%s249 + $0x23] sm:$0x1]
        %v387 = vld [vmem:[%s249 + $0x43] sm:$0x1]
        %v388 = vld [vmem:[%s249 + $0x63] sm:$0x1]
        %v389 = vld [vmem:[%s249 + $0x83] sm:$0x1]
        %v390 = vld [vmem:[%s249 + $0xa3] sm:$0x1]
        %v391 = vld [vmem:[%s249 + $0xc3] sm:$0x1]
        %v392 = vld [vmem:[%s249 + $0xe3] sm:$0x1]
        %v401 = vrot.slane %v386, 7
        %v402 = vsel %vm288, %v401, %v385
        %v403 = vrot.slane %v387, 6
        %v404 = vsel %vm291, %v403, %v402
        %v405 = vrot.slane %v388, 5
        %v406 = vsel %vm294, %v405, %v404
        %v407 = vrot.slane %v389, 4
        %v408 = vsel %vm297, %v407, %v406
        %v409 = vrot.slane %v390, 3
        %v410 = vsel %vm300, %v409, %v408
        %v411 = vrot.slane %v391, 2
        %v412 = vsel %vm303, %v411, %v410
        %v413 = vrot.slane %v392, 1
        %v414 = vsel %vm306, %v413, %v412
        %415 = vrot.lane.b32.xlu0 %v414, 44
        %v416 = vpop.permute.xlu0 %415
        %vm418 = vcmask 621920
        %419 = vst.msk [vmem:[#allocation2 + $0x8] sm:$0xff] %vm418, %v416
        %v420 = vld [vmem:[%s249 + $0x4] sm:$0x1]
        %v421 = vld [vmem:[%s249 + $0x24] sm:$0x1]
        %v422 = vld [vmem:[%s249 + $0x44] sm:$0x1]
        %v423 = vld [vmem:[%s249 + $0x64] sm:$0x1]
        %v424 = vld [vmem:[%s249 + $0x84] sm:$0x1]
        %v425 = vld [vmem:[%s249 + $0xa4] sm:$0x1]
        %v426 = vld [vmem:[%s249 + $0xc4] sm:$0x1]
        %v427 = vld [vmem:[%s249 + $0xe4] sm:$0x1]
        %v436 = vrot.slane %v421, 7
        %v437 = vsel %vm288, %v436, %v420
        %v438 = vrot.slane %v422, 6
        %v439 = vsel %vm291, %v438, %v437
        %v440 = vrot.slane %v423, 5
        %v441 = vsel %vm294, %v440, %v439
        %v442 = vrot.slane %v424, 4
        %v443 = vsel %vm297, %v442, %v441
        %v444 = vrot.slane %v425, 3
        %v445 = vsel %vm300, %v444, %v443
        %v446 = vrot.slane %v426, 2
        %v447 = vsel %vm303, %v446, %v445
        %v448 = vrot.slane %v427, 1
        %v449 = vsel %vm306, %v448, %v447
        %450 = vrot.lane.b32.xlu0 %v449, 78
        %v451 = vpop.permute.xlu0 %450
        %vm453 = vcmask 900720
        %454 = vst.msk [vmem:[#allocation2 + $0x8] sm:$0xff] %vm453, %v451
        %v455 = vld [vmem:[%s249 + $0x5] sm:$0x1]
        %v456 = vld [vmem:[%s249 + $0x25] sm:$0x1]
        %v457 = vld [vmem:[%s249 + $0x45] sm:$0x1]
        %v458 = vld [vmem:[%s249 + $0x65] sm:$0x1]
        %v459 = vld [vmem:[%s249 + $0x85] sm:$0x1]
        %v460 = vld [vmem:[%s249 + $0xa5] sm:$0x1]
        %v461 = vld [vmem:[%s249 + $0xc5] sm:$0x1]
        %v462 = vld [vmem:[%s249 + $0xe5] sm:$0x1]
        %v471 = vrot.slane %v456, 7
        %v472 = vsel %vm288, %v471, %v455
        %v473 = vrot.slane %v457, 6
        %v474 = vsel %vm291, %v473, %v472
        %v475 = vrot.slane %v458, 5
        %v476 = vsel %vm294, %v475, %v474
        %v477 = vrot.slane %v459, 4
        %v478 = vsel %vm297, %v477, %v476
        %v479 = vrot.slane %v460, 3
        %v480 = vsel %vm300, %v479, %v478
        %v481 = vrot.slane %v461, 2
        %v482 = vsel %vm303, %v481, %v480
        %v483 = vrot.slane %v462, 1
        %v484 = vsel %vm306, %v483, %v482
        %485 = vrot.lane.b32.xlu0 %v484, 112
        %v486 = vpop.permute.xlu0 %485
        %vm488 = vcmask 1048448
        %489 = vst.msk [vmem:[#allocation2 + $0x8] sm:$0xff] %vm488, %v486
        %vm490 = vcmask 130048
        %491 = vst.msk [vmem:[#allocation2 + $0x10] sm:$0xff] %vm490, %v486
        %v492 = vld [vmem:[%s249 + $0x6] sm:$0x1]
        %v493 = vld [vmem:[%s249 + $0x26] sm:$0x1]
        %v494 = vld [vmem:[%s249 + $0x46] sm:$0x1]
        %v495 = vld [vmem:[%s249 + $0x66] sm:$0x1]
        %v496 = vld [vmem:[%s249 + $0x86] sm:$0x1]
        %v497 = vld [vmem:[%s249 + $0xa6] sm:$0x1]
        %v498 = vld [vmem:[%s249 + $0xc6] sm:$0x1]
        %v499 = vld [vmem:[%s249 + $0xe6] sm:$0x1]
        %v508 = vrot.slane %v493, 7
        %v509 = vsel %vm288, %v508, %v492
        %v510 = vrot.slane %v494, 6
        %v511 = vsel %vm291, %v510, %v509
        %v512 = vrot.slane %v495, 5
        %v513 = vsel %vm294, %v512, %v511
        %v514 = vrot.slane %v496, 4
        %v515 = vsel %vm297, %v514, %v513
        %v516 = vrot.slane %v497, 3
        %v517 = vsel %vm300, %v516, %v515
        %v518 = vrot.slane %v498, 2
        %v519 = vsel %vm303, %v518, %v517
        %v520 = vrot.slane %v499, 1
        %v521 = vsel %vm306, %v520, %v519
        %522 = vrot.lane.b32.xlu0 %v521, 18
        %v523 = vpop.permute.xlu0 %522
        %vm525 = vcmask 408720
        %526 = vst.msk [vmem:[#allocation2 + $0x10] sm:$0xff] %vm525, %v523
        %v527 = vld [vmem:[%s249 + $0x7] sm:$0x1]
        %v528 = vld [vmem:[%s249 + $0x27] sm:$0x1]
        %v529 = vld [vmem:[%s249 + $0x47] sm:$0x1]
        %v530 = vld [vmem:[%s249 + $0x67] sm:$0x1]
        %v531 = vld [vmem:[%s249 + $0x87] sm:$0x1]
        %v532 = vld [vmem:[%s249 + $0xa7] sm:$0x1]
        %v533 = vld [vmem:[%s249 + $0xc7] sm:$0x1]
        %v534 = vld [vmem:[%s249 + $0xe7] sm:$0x1]
        %v543 = vrot.slane %v528, 7
        %v544 = vsel %vm288, %v543, %v527
        %v545 = vrot.slane %v529, 6
        %v546 = vsel %vm291, %v545, %v544
        %v547 = vrot.slane %v530, 5
        %v548 = vsel %vm294, %v547, %v546
        %v549 = vrot.slane %v531, 4
        %v550 = vsel %vm297, %v549, %v548
        %v551 = vrot.slane %v532, 3
        %v552 = vsel %vm300, %v551, %v550
        %v553 = vrot.slane %v533, 2
        %v554 = vsel %vm303, %v553, %v552
        %v555 = vrot.slane %v534, 1
        %v556 = vsel %vm306, %v555, %v554
        %557 = vrot.lane.b32.xlu0 %v556, 52
        %v558 = vpop.permute.xlu0 %557
        %vm560 = vcmask 687520
        %561 = vst.msk [vmem:[#allocation2 + $0x10] sm:$0xff] %vm560, %v558
        %v562 = vld [vmem:[%s249 + $0x8] sm:$0x1]
        %v563 = vld [vmem:[%s249 + $0x28] sm:$0x1]
        %v564 = vld [vmem:[%s249 + $0x48] sm:$0x1]
        %v565 = vld [vmem:[%s249 + $0x68] sm:$0x1]
        %v566 = vld [vmem:[%s249 + $0x88] sm:$0x1]
        %v567 = vld [vmem:[%s249 + $0xa8] sm:$0x1]
        %v568 = vld [vmem:[%s249 + $0xc8] sm:$0x1]
        %v569 = vld [vmem:[%s249 + $0xe8] sm:$0x1]
        %v578 = vrot.slane %v563, 7
        %v579 = vsel %vm288, %v578, %v562
        %v580 = vrot.slane %v564, 6
        %v581 = vsel %vm291, %v580, %v579
        %v582 = vrot.slane %v565, 5
        %v583 = vsel %vm294, %v582, %v581
        %v584 = vrot.slane %v566, 4
        %v585 = vsel %vm297, %v584, %v583
        %v586 = vrot.slane %v567, 3
        %v587 = vsel %vm300, %v586, %v585
        %v588 = vrot.slane %v568, 2
        %v589 = vsel %vm303, %v588, %v587
        %v590 = vrot.slane %v569, 1
        %v591 = vsel %vm306, %v590, %v589
        %592 = vrot.lane.b32.xlu0 %v591, 86
        %v593 = vpop.permute.xlu0 %592
        %vm595 = vcmask 966320
        %596 = vst.msk [vmem:[#allocation2 + $0x10] sm:$0xff] %vm595, %v593
        %v597 = vld [vmem:[%s249 + $0x9] sm:$0x1]
        %v598 = vld [vmem:[%s249 + $0x29] sm:$0x1]
        %v599 = vld [vmem:[%s249 + $0x49] sm:$0x1]
        %v600 = vld [vmem:[%s249 + $0x69] sm:$0x1]
        %v601 = vld [vmem:[%s249 + $0x89] sm:$0x1]
        %v602 = vld [vmem:[%s249 + $0xa9] sm:$0x1]
        %v603 = vld [vmem:[%s249 + $0xc9] sm:$0x1]
        %v604 = vld [vmem:[%s249 + $0xe9] sm:$0x1]
        %v613 = vrot.slane %v598, 7
        %v614 = vsel %vm288, %v613, %v597
        %v615 = vrot.slane %v599, 6
        %v616 = vsel %vm291, %v615, %v614
        %v617 = vrot.slane %v600, 5
        %v618 = vsel %vm294, %v617, %v616
        %v619 = vrot.slane %v601, 4
        %v620 = vsel %vm297, %v619, %v618
        %v621 = vrot.slane %v602, 3
        %v622 = vsel %vm300, %v621, %v620
        %v623 = vrot.slane %v603, 2
        %v624 = vsel %vm303, %v623, %v622
        %v625 = vrot.slane %v604, 1
        %v626 = vsel %vm306, %v625, %v624
        %627 = vrot.lane.b32.xlu0 %v626, 120
        %v628 = vpop.permute.xlu0 %627
        %vm630 = vcmask 1048512
        %631 = vst.msk [vmem:[#allocation2 + $0x10] sm:$0xff] %vm630, %v628
        %vm632 = vcmask 195584
        %633 = vst.msk [vmem:[#allocation2 + $0x18] sm:$0xff] %vm632, %v628
        %v634 = vld [vmem:[%s249 + $0xa] sm:$0x1]
        %v635 = vld [vmem:[%s249 + $0x2a] sm:$0x1]
        %v636 = vld [vmem:[%s249 + $0x4a] sm:$0x1]
        %v637 = vld [vmem:[%s249 + $0x6a] sm:$0x1]
        %v638 = vld [vmem:[%s249 + $0x8a] sm:$0x1]
        %v639 = vld [vmem:[%s249 + $0xaa] sm:$0x1]
        %v640 = vld [vmem:[%s249 + $0xca] sm:$0x1]
        %v641 = vld [vmem:[%s249 + $0xea] sm:$0x1]
        %v650 = vrot.slane %v635, 7
        %v651 = vsel %vm288, %v650, %v634
        %v652 = vrot.slane %v636, 6
        %v653 = vsel %vm291, %v652, %v651
        %v654 = vrot.slane %v637, 5
        %v655 = vsel %vm294, %v654, %v653
        %v656 = vrot.slane %v638, 4
        %v657 = vsel %vm297, %v656, %v655
        %v658 = vrot.slane %v639, 3
        %v659 = vsel %vm300, %v658, %v657
        %v660 = vrot.slane %v640, 2
        %v661 = vsel %vm303, %v660, %v659
        %v662 = vrot.slane %v641, 1
        %v663 = vsel %vm306, %v662, %v661
        %664 = vrot.lane.b32.xlu0 %v663, 26
        %v665 = vpop.permute.xlu0 %664
        %vm667 = vcmask 474320
        %668 = vst.msk [vmem:[#allocation2 + $0x18] sm:$0xff] %vm667, %v665
        %v669 = vld [vmem:[%s249 + $0xb] sm:$0x1]
        %v670 = vld [vmem:[%s249 + $0x2b] sm:$0x1]
        %v671 = vld [vmem:[%s249 + $0x4b] sm:$0x1]
        %v672 = vld [vmem:[%s249 + $0x6b] sm:$0x1]
        %v673 = vld [vmem:[%s249 + $0x8b] sm:$0x1]
        %v674 = vld [vmem:[%s249 + $0xab] sm:$0x1]
        %v675 = vld [vmem:[%s249 + $0xcb] sm:$0x1]
        %v676 = vld [vmem:[%s249 + $0xeb] sm:$0x1]
        %v685 = vrot.slane %v670, 7
        %v686 = vsel %vm288, %v685, %v669
        %v687 = vrot.slane %v671, 6
        %v688 = vsel %vm291, %v687, %v686
        %v689 = vrot.slane %v672, 5
        %v690 = vsel %vm294, %v689, %v688
        %v691 = vrot.slane %v673, 4
        %v692 = vsel %vm297, %v691, %v690
        %v693 = vrot.slane %v674, 3
        %v694 = vsel %vm300, %v693, %v692
        %v695 = vrot.slane %v675, 2
        %v696 = vsel %vm303, %v695, %v694
        %v697 = vrot.slane %v676, 1
        %v698 = vsel %vm306, %v697, %v696
        %699 = vrot.lane.b32.xlu0 %v698, 60
        %v700 = vpop.permute.xlu0 %699
        %vm702 = vcmask 753120
        %703 = vst.msk [vmem:[#allocation2 + $0x18] sm:$0xff] %vm702, %v700
        %v704 = vld [vmem:[%s249 + $0xc] sm:$0x1]
        %v705 = vld [vmem:[%s249 + $0x2c] sm:$0x1]
        %v706 = vld [vmem:[%s249 + $0x4c] sm:$0x1]
        %v707 = vld [vmem:[%s249 + $0x6c] sm:$0x1]
        %v708 = vld [vmem:[%s249 + $0x8c] sm:$0x1]
        %v709 = vld [vmem:[%s249 + $0xac] sm:$0x1]
        %v710 = vld [vmem:[%s249 + $0xcc] sm:$0x1]
        %v711 = vld [vmem:[%s249 + $0xec] sm:$0x1]
        %v720 = vrot.slane %v705, 7
        %v721 = vsel %vm288, %v720, %v704
        %v722 = vrot.slane %v706, 6
        %v723 = vsel %vm291, %v722, %v721
        %v724 = vrot.slane %v707, 5
        %v725 = vsel %vm294, %v724, %v723
        %v726 = vrot.slane %v708, 4
        %v727 = vsel %vm297, %v726, %v725
        %v728 = vrot.slane %v709, 3
        %v729 = vsel %vm300, %v728, %v727
        %v730 = vrot.slane %v710, 2
        %v731 = vsel %vm303, %v730, %v729
        %v732 = vrot.slane %v711, 1
        %v733 = vsel %vm306, %v732, %v731
        %734 = vrot.lane.b32.xlu0 %v733, 94
        %v735 = vpop.permute.xlu0 %734
        %vm737 = vcmask 1031920
        %738 = vst.msk [vmem:[#allocation2 + $0x18] sm:$0xff] %vm737, %v735
        %v739 = vld [vmem:[%s249 + $0xd] sm:$0x1]
        %v740 = vld [vmem:[%s249 + $0x2d] sm:$0x1]
        %v741 = vld [vmem:[%s249 + $0x4d] sm:$0x1]
        %v742 = vld [vmem:[%s249 + $0x6d] sm:$0x1]
        %v743 = vld [vmem:[%s249 + $0x8d] sm:$0x1]
        %v744 = vld [vmem:[%s249 + $0xad] sm:$0x1]
        %v745 = vld [vmem:[%s249 + $0xcd] sm:$0x1]
        %v746 = vld [vmem:[%s249 + $0xed] sm:$0x1]
        %v755 = vrot.slane %v740, 7
        %v756 = vsel %vm288, %v755, %v739
        %v757 = vrot.slane %v741, 6
        %v758 = vsel %vm291, %v757, %v756
        %v759 = vrot.slane %v742, 5
        %v760 = vsel %vm294, %v759, %v758
        %v761 = vrot.slane %v743, 4
        %v762 = vsel %vm297, %v761, %v760
        %v763 = vrot.slane %v744, 3
        %v764 = vsel %vm300, %v763, %v762
        %v765 = vrot.slane %v745, 2
        %v766 = vsel %vm303, %v765, %v764
        %v767 = vrot.slane %v746, 1
        %v768 = vsel %vm306, %v767, %v766
        %vm770 = vcmask 261120
        %771 = vst.msk [vmem:[#allocation2 + $0x20] sm:$0xff] %vm770, %v768
        %v772 = vld [vmem:[%s249 + $0xe] sm:$0x1]
        %v773 = vld [vmem:[%s249 + $0x2e] sm:$0x1]
        %v774 = vld [vmem:[%s249 + $0x4e] sm:$0x1]
        %v775 = vld [vmem:[%s249 + $0x6e] sm:$0x1]
        %v776 = vld [vmem:[%s249 + $0x8e] sm:$0x1]
        %v777 = vld [vmem:[%s249 + $0xae] sm:$0x1]
        %v778 = vld [vmem:[%s249 + $0xce] sm:$0x1]
        %v779 = vld [vmem:[%s249 + $0xee] sm:$0x1]
        %v788 = vrot.slane %v773, 7
        %v789 = vsel %vm288, %v788, %v772
        %v790 = vrot.slane %v774, 6
        %v791 = vsel %vm291, %v790, %v789
        %v792 = vrot.slane %v775, 5
        %v793 = vsel %vm294, %v792, %v791
        %v794 = vrot.slane %v776, 4
        %v795 = vsel %vm297, %v794, %v793
        %v796 = vrot.slane %v777, 3
        %v797 = vsel %vm300, %v796, %v795
        %v798 = vrot.slane %v778, 2
        %v799 = vsel %vm303, %v798, %v797
        %v800 = vrot.slane %v779, 1
        %v801 = vsel %vm306, %v800, %v799
        %802 = vrot.lane.b32.xlu0 %v801, 34
        %v803 = vpop.permute.xlu0 %802
        %vm805 = vcmask 539920
        %806 = vst.msk [vmem:[#allocation2 + $0x20] sm:$0xff] %vm805, %v803
        %v807 = vld [vmem:[%s249 + $0xf] sm:$0x1]
        %v808 = vld [vmem:[%s249 + $0x2f] sm:$0x1]
        %v809 = vld [vmem:[%s249 + $0x4f] sm:$0x1]
        %v810 = vld [vmem:[%s249 + $0x6f] sm:$0x1]
        %v811 = vld [vmem:[%s249 + $0x8f] sm:$0x1]
        %v812 = vld [vmem:[%s249 + $0xaf] sm:$0x1]
        %v813 = vld [vmem:[%s249 + $0xcf] sm:$0x1]
        %v814 = vld [vmem:[%s249 + $0xef] sm:$0x1]
        %v823 = vrot.slane %v808, 7
        %v824 = vsel %vm288, %v823, %v807
        %v825 = vrot.slane %v809, 6
        %v826 = vsel %vm291, %v825, %v824
        %v827 = vrot.slane %v810, 5
        %v828 = vsel %vm294, %v827, %v826
        %v829 = vrot.slane %v811, 4
        %v830 = vsel %vm297, %v829, %v828
        %v831 = vrot.slane %v812, 3
        %v832 = vsel %vm300, %v831, %v830
        %v833 = vrot.slane %v813, 2
        %v834 = vsel %vm303, %v833, %v832
        %v835 = vrot.slane %v814, 1
        %v836 = vsel %vm306, %v835, %v834
        %837 = vrot.lane.b32.xlu0 %v836, 68
        %v838 = vpop.permute.xlu0 %837
        %vm840 = vcmask 818720
        %841 = vst.msk [vmem:[#allocation2 + $0x20] sm:$0xff] %vm840, %v838
        %v842 = vld [vmem:[%s249 + $0x10] sm:$0x1]
        %v843 = vld [vmem:[%s249 + $0x30] sm:$0x1]
        %v844 = vld [vmem:[%s249 + $0x50] sm:$0x1]
        %v845 = vld [vmem:[%s249 + $0x70] sm:$0x1]
        %v846 = vld [vmem:[%s249 + $0x90] sm:$0x1]
        %v847 = vld [vmem:[%s249 + $0xb0] sm:$0x1]
        %v848 = vld [vmem:[%s249 + $0xd0] sm:$0x1]
        %v849 = vld [vmem:[%s249 + $0xf0] sm:$0x1]
        %v858 = vrot.slane %v843, 7
        %v859 = vsel %vm288, %v858, %v842
        %v860 = vrot.slane %v844, 6
        %v861 = vsel %vm291, %v860, %v859
        %v862 = vrot.slane %v845, 5
        %v863 = vsel %vm294, %v862, %v861
        %v864 = vrot.slane %v846, 4
        %v865 = vsel %vm297, %v864, %v863
        %v866 = vrot.slane %v847, 3
        %v867 = vsel %vm300, %v866, %v865
        %v868 = vrot.slane %v848, 2
        %v869 = vsel %vm303, %v868, %v867
        %v870 = vrot.slane %v849, 1
        %v871 = vsel %vm306, %v870, %v869
        %872 = vrot.lane.b32.xlu0 %v871, 102
        %v873 = vpop.permute.xlu0 %872
        %vm875 = vcmask 1048368
        %876 = vst.msk [vmem:[#allocation2 + $0x20] sm:$0xff] %vm875, %v873
        %vm877 = vcmask 48128
        %878 = vst.msk [vmem:[#allocation2 + $0x28] sm:$0xff] %vm877, %v873
        %v879 = vld [vmem:[%s249 + $0x11] sm:$0x1]
        %v880 = vld [vmem:[%s249 + $0x31] sm:$0x1]
        %v881 = vld [vmem:[%s249 + $0x51] sm:$0x1]
        %v882 = vld [vmem:[%s249 + $0x71] sm:$0x1]
        %v883 = vld [vmem:[%s249 + $0x91] sm:$0x1]
        %v884 = vld [vmem:[%s249 + $0xb1] sm:$0x1]
        %v885 = vld [vmem:[%s249 + $0xd1] sm:$0x1]
        %v886 = vld [vmem:[%s249 + $0xf1] sm:$0x1]
        %v895 = vrot.slane %v880, 7
        %v896 = vsel %vm288, %v895, %v879
        %v897 = vrot.slane %v881, 6
        %v898 = vsel %vm291, %v897, %v896
        %v899 = vrot.slane %v882, 5
        %v900 = vsel %vm294, %v899, %v898
        %v901 = vrot.slane %v883, 4
        %v902 = vsel %vm297, %v901, %v900
        %v903 = vrot.slane %v884, 3
        %v904 = vsel %vm300, %v903, %v902
        %v905 = vrot.slane %v885, 2
        %v906 = vsel %vm303, %v905, %v904
        %v907 = vrot.slane %v886, 1
        %v908 = vsel %vm306, %v907, %v906
        %909 = vrot.lane.b32.xlu0 %v908, 8
        %v910 = vpop.permute.xlu0 %909
        %vm912 = vcmask 326720
        %913 = vst.msk [vmem:[#allocation2 + $0x28] sm:$0xff] %vm912, %v910
        %v914 = vld [vmem:[%s249 + $0x12] sm:$0x1]
        %v915 = vld [vmem:[%s249 + $0x32] sm:$0x1]
        %v916 = vld [vmem:[%s249 + $0x52] sm:$0x1]
        %v917 = vld [vmem:[%s249 + $0x72] sm:$0x1]
        %v918 = vld [vmem:[%s249 + $0x92] sm:$0x1]
        %v919 = vld [vmem:[%s249 + $0xb2] sm:$0x1]
        %v920 = vld [vmem:[%s249 + $0xd2] sm:$0x1]
        %v921 = vld [vmem:[%s249 + $0xf2] sm:$0x1]
        %v930 = vrot.slane %v915, 7
        %v931 = vsel %vm288, %v930, %v914
        %v932 = vrot.slane %v916, 6
        %v933 = vsel %vm291, %v932, %v931
        %v934 = vrot.slane %v917, 5
        %v935 = vsel %vm294, %v934, %v933
        %v936 = vrot.slane %v918, 4
        %v937 = vsel %vm297, %v936, %v935
        %v938 = vrot.slane %v919, 3
        %v939 = vsel %vm300, %v938, %v937
        %v940 = vrot.slane %v920, 2
        %v941 = vsel %vm303, %v940, %v939
        %v942 = vrot.slane %v921, 1
        %v943 = vsel %vm306, %v942, %v941
        %944 = vrot.lane.b32.xlu0 %v943, 42
        %v945 = vpop.permute.xlu0 %944
        %vm947 = vcmask 605520
        %948 = vst.msk [vmem:[#allocation2 + $0x28] sm:$0xff] %vm947, %v945
        %v949 = vld [vmem:[%s249 + $0x13] sm:$0x1]
        %v950 = vld [vmem:[%s249 + $0x33] sm:$0x1]
        %v951 = vld [vmem:[%s249 + $0x53] sm:$0x1]
        %v952 = vld [vmem:[%s249 + $0x73] sm:$0x1]
        %v953 = vld [vmem:[%s249 + $0x93] sm:$0x1]
        %v954 = vld [vmem:[%s249 + $0xb3] sm:$0x1]
        %v955 = vld [vmem:[%s249 + $0xd3] sm:$0x1]
        %v956 = vld [vmem:[%s249 + $0xf3] sm:$0x1]
        %v965 = vrot.slane %v950, 7
        %v966 = vsel %vm288, %v965, %v949
        %v967 = vrot.slane %v951, 6
        %v968 = vsel %vm291, %v967, %v966
        %v969 = vrot.slane %v952, 5
        %v970 = vsel %vm294, %v969, %v968
        %v971 = vrot.slane %v953, 4
        %v972 = vsel %vm297, %v971, %v970
        %v973 = vrot.slane %v954, 3
        %v974 = vsel %vm300, %v973, %v972
        %v975 = vrot.slane %v955, 2
        %v976 = vsel %vm303, %v975, %v974
        %v977 = vrot.slane %v956, 1
        %v978 = vsel %vm306, %v977, %v976
        %979 = vrot.lane.b32.xlu0 %v978, 76
        %v980 = vpop.permute.xlu0 %979
        %vm982 = vcmask 884320
        %983 = vst.msk [vmem:[#allocation2 + $0x28] sm:$0xff] %vm982, %v980
        %v984 = vld [vmem:[%s249 + $0x14] sm:$0x1]
        %v985 = vld [vmem:[%s249 + $0x34] sm:$0x1]
        %v986 = vld [vmem:[%s249 + $0x54] sm:$0x1]
        %v987 = vld [vmem:[%s249 + $0x74] sm:$0x1]
        %v988 = vld [vmem:[%s249 + $0x94] sm:$0x1]
        %v989 = vld [vmem:[%s249 + $0xb4] sm:$0x1]
        %v990 = vld [vmem:[%s249 + $0xd4] sm:$0x1]
        %v991 = vld [vmem:[%s249 + $0xf4] sm:$0x1]
        %v1000 = vrot.slane %v985, 7
        %v1001 = vsel %vm288, %v1000, %v984
        %v1002 = vrot.slane %v986, 6
        %v1003 = vsel %vm291, %v1002, %v1001
        %v1004 = vrot.slane %v987, 5
        %v1005 = vsel %vm294, %v1004, %v1003
        %v1006 = vrot.slane %v988, 4
        %v1007 = vsel %vm297, %v1006, %v1005
        %v1008 = vrot.slane %v989, 3
        %v1009 = vsel %vm300, %v1008, %v1007
        %v1010 = vrot.slane %v990, 2
        %v1011 = vsel %vm303, %v1010, %v1009
        %v1012 = vrot.slane %v991, 1
        %v1013 = vsel %vm306, %v1012, %v1011
        %1014 = vrot.lane.b32.xlu0 %v1013, 110
        %v1015 = vpop.permute.xlu0 %1014
        %vm1017 = vcmask 1048432
        %1018 = vst.msk [vmem:[#allocation2 + $0x28] sm:$0xff] %vm1017, %v1015
        %vm1019 = vcmask 113664
        %1020 = vst.msk [vmem:[#allocation2 + $0x30] sm:$0xff] %vm1019, %v1015
        %v1021 = vld [vmem:[%s249 + $0x15] sm:$0x1]
        %v1022 = vld [vmem:[%s249 + $0x35] sm:$0x1]
        %v1023 = vld [vmem:[%s249 + $0x55] sm:$0x1]
        %v1024 = vld [vmem:[%s249 + $0x75] sm:$0x1]
        %v1025 = vld [vmem:[%s249 + $0x95] sm:$0x1]
        %v1026 = vld [vmem:[%s249 + $0xb5] sm:$0x1]
        %v1027 = vld [vmem:[%s249 + $0xd5] sm:$0x1]
        %v1028 = vld [vmem:[%s249 + $0xf5] sm:$0x1]
        %v1037 = vrot.slane %v1022, 7
        %v1038 = vsel %vm288, %v1037, %v1021
        %v1039 = vrot.slane %v1023, 6
        %v1040 = vsel %vm291, %v1039, %v1038
        %v1041 = vrot.slane %v1024, 5
        %v1042 = vsel %vm294, %v1041, %v1040
        %v1043 = vrot.slane %v1025, 4
        %v1044 = vsel %vm297, %v1043, %v1042
        %v1045 = vrot.slane %v1026, 3
        %v1046 = vsel %vm300, %v1045, %v1044
        %v1047 = vrot.slane %v1027, 2
        %v1048 = vsel %vm303, %v1047, %v1046
        %v1049 = vrot.slane %v1028, 1
        %v1050 = vsel %vm306, %v1049, %v1048
        %1051 = vrot.lane.b32.xlu0 %v1050, 16
        %v1052 = vpop.permute.xlu0 %1051
        %vm1054 = vcmask 392320
        %1055 = vst.msk [vmem:[#allocation2 + $0x30] sm:$0xff] %vm1054, %v1052
        %v1056 = vld [vmem:[%s249 + $0x16] sm:$0x1]
        %v1057 = vld [vmem:[%s249 + $0x36] sm:$0x1]
        %v1058 = vld [vmem:[%s249 + $0x56] sm:$0x1]
        %v1059 = vld [vmem:[%s249 + $0x76] sm:$0x1]
        %v1060 = vld [vmem:[%s249 + $0x96] sm:$0x1]
        %v1061 = vld [vmem:[%s249 + $0xb6] sm:$0x1]
        %v1062 = vld [vmem:[%s249 + $0xd6] sm:$0x1]
        %v1063 = vld [vmem:[%s249 + $0xf6] sm:$0x1]
        %v1072 = vrot.slane %v1057, 7
        %v1073 = vsel %vm288, %v1072, %v1056
        %v1074 = vrot.slane %v1058, 6
        %v1075 = vsel %vm291, %v1074, %v1073
        %v1076 = vrot.slane %v1059, 5
        %v1077 = vsel %vm294, %v1076, %v1075
        %v1078 = vrot.slane %v1060, 4
        %v1079 = vsel %vm297, %v1078, %v1077
        %v1080 = vrot.slane %v1061, 3
        %v1081 = vsel %vm300, %v1080, %v1079
        %v1082 = vrot.slane %v1062, 2
        %v1083 = vsel %vm303, %v1082, %v1081
        %v1084 = vrot.slane %v1063, 1
        %v1085 = vsel %vm306, %v1084, %v1083
        %1086 = vrot.lane.b32.xlu0 %v1085, 50
        %v1087 = vpop.permute.xlu0 %1086
        %vm1089 = vcmask 671120
        %1090 = vst.msk [vmem:[#allocation2 + $0x30] sm:$0xff] %vm1089, %v1087
        %v1091 = vld [vmem:[%s249 + $0x17] sm:$0x1]
        %v1092 = vld [vmem:[%s249 + $0x37] sm:$0x1]
        %v1093 = vld [vmem:[%s249 + $0x57] sm:$0x1]
        %v1094 = vld [vmem:[%s249 + $0x77] sm:$0x1]
        %v1095 = vld [vmem:[%s249 + $0x97] sm:$0x1]
        %v1096 = vld [vmem:[%s249 + $0xb7] sm:$0x1]
        %v1097 = vld [vmem:[%s249 + $0xd7] sm:$0x1]
        %v1098 = vld [vmem:[%s249 + $0xf7] sm:$0x1]
        %v1107 = vrot.slane %v1092, 7
        %v1108 = vsel %vm288, %v1107, %v1091
        %v1109 = vrot.slane %v1093, 6
        %v1110 = vsel %vm291, %v1109, %v1108
        %v1111 = vrot.slane %v1094, 5
        %v1112 = vsel %vm294, %v1111, %v1110
        %v1113 = vrot.slane %v1095, 4
        %v1114 = vsel %vm297, %v1113, %v1112
        %v1115 = vrot.slane %v1096, 3
        %v1116 = vsel %vm300, %v1115, %v1114
        %v1117 = vrot.slane %v1097, 2
        %v1118 = vsel %vm303, %v1117, %v1116
        %v1119 = vrot.slane %v1098, 1
        %v1120 = vsel %vm306, %v1119, %v1118
        %1121 = vrot.lane.b32.xlu0 %v1120, 84
        %v1122 = vpop.permute.xlu0 %1121
        %vm1124 = vcmask 949920
        %1125 = vst.msk [vmem:[#allocation2 + $0x30] sm:$0xff] %vm1124, %v1122
        %v1126 = vld [vmem:[%s249 + $0x18] sm:$0x1]
        %v1127 = vld [vmem:[%s249 + $0x38] sm:$0x1]
        %v1128 = vld [vmem:[%s249 + $0x58] sm:$0x1]
        %v1129 = vld [vmem:[%s249 + $0x78] sm:$0x1]
        %v1130 = vld [vmem:[%s249 + $0x98] sm:$0x1]
        %v1131 = vld [vmem:[%s249 + $0xb8] sm:$0x1]
        %v1132 = vld [vmem:[%s249 + $0xd8] sm:$0x1]
        %v1133 = vld [vmem:[%s249 + $0xf8] sm:$0x1]
        %v1142 = vrot.slane %v1127, 7
        %v1143 = vsel %vm288, %v1142, %v1126
        %v1144 = vrot.slane %v1128, 6
        %v1145 = vsel %vm291, %v1144, %v1143
        %v1146 = vrot.slane %v1129, 5
        %v1147 = vsel %vm294, %v1146, %v1145
        %v1148 = vrot.slane %v1130, 4
        %v1149 = vsel %vm297, %v1148, %v1147
        %v1150 = vrot.slane %v1131, 3
        %v1151 = vsel %vm300, %v1150, %v1149
        %v1152 = vrot.slane %v1132, 2
        %v1153 = vsel %vm303, %v1152, %v1151
        %v1154 = vrot.slane %v1133, 1
        %v1155 = vsel %vm306, %v1154, %v1153
        %1156 = vrot.lane.b32.xlu0 %v1155, 118
        %v1157 = vpop.permute.xlu0 %1156
        %vm1159 = vcmask 1048496
        %1160 = vst.msk [vmem:[#allocation2 + $0x30] sm:$0xff] %vm1159, %v1157
        %vm1161 = vcmask 179200
        %1162 = vst.msk [vmem:[#allocation2 + $0x38] sm:$0xff] %vm1161, %v1157
        %v1163 = vld [vmem:[%s249 + $0x19] sm:$0x1]
        %v1164 = vld [vmem:[%s249 + $0x39] sm:$0x1]
        %v1165 = vld [vmem:[%s249 + $0x59] sm:$0x1]
        %v1166 = vld [vmem:[%s249 + $0x79] sm:$0x1]
        %v1167 = vld [vmem:[%s249 + $0x99] sm:$0x1]
        %v1168 = vld [vmem:[%s249 + $0xb9] sm:$0x1]
        %v1169 = vld [vmem:[%s249 + $0xd9] sm:$0x1]
        %v1170 = vld [vmem:[%s249 + $0xf9] sm:$0x1]
        %v1179 = vrot.slane %v1164, 7
        %v1180 = vsel %vm288, %v1179, %v1163
        %v1181 = vrot.slane %v1165, 6
        %v1182 = vsel %vm291, %v1181, %v1180
        %v1183 = vrot.slane %v1166, 5
        %v1184 = vsel %vm294, %v1183, %v1182
        %v1185 = vrot.slane %v1167, 4
        %v1186 = vsel %vm297, %v1185, %v1184
        %v1187 = vrot.slane %v1168, 3
        %v1188 = vsel %vm300, %v1187, %v1186
        %v1189 = vrot.slane %v1169, 2
        %v1190 = vsel %vm303, %v1189, %v1188
        %v1191 = vrot.slane %v1170, 1
        %v1192 = vsel %vm306, %v1191, %v1190
        %1193 = vrot.lane.b32.xlu0 %v1192, 24
        %v1194 = vpop.permute.xlu0 %1193
        %vm1196 = vcmask 457920
        %1197 = vst.msk [vmem:[#allocation2 + $0x38] sm:$0xff] %vm1196, %v1194
        %v1198 = vld [vmem:[%s249 + $0x1a] sm:$0x1]
        %v1199 = vld [vmem:[%s249 + $0x3a] sm:$0x1]
        %v1200 = vld [vmem:[%s249 + $0x5a] sm:$0x1]
        %v1201 = vld [vmem:[%s249 + $0x7a] sm:$0x1]
        %v1202 = vld [vmem:[%s249 + $0x9a] sm:$0x1]
        %v1203 = vld [vmem:[%s249 + $0xba] sm:$0x1]
        %v1204 = vld [vmem:[%s249 + $0xda] sm:$0x1]
        %v1205 = vld [vmem:[%s249 + $0xfa] sm:$0x1]
        %v1214 = vrot.slane %v1199, 7
        %v1215 = vsel %vm288, %v1214, %v1198
        %v1216 = vrot.slane %v1200, 6
        %v1217 = vsel %vm291, %v1216, %v1215
        %v1218 = vrot.slane %v1201, 5
        %v1219 = vsel %vm294, %v1218, %v1217
        %v1220 = vrot.slane %v1202, 4
        %v1221 = vsel %vm297, %v1220, %v1219
        %v1222 = vrot.slane %v1203, 3
        %v1223 = vsel %vm300, %v1222, %v1221
        %v1224 = vrot.slane %v1204, 2
        %v1225 = vsel %vm303, %v1224, %v1223
        %v1226 = vrot.slane %v1205, 1
        %v1227 = vsel %vm306, %v1226, %v1225
        %1228 = vrot.lane.b32.xlu0 %v1227, 58
        %v1229 = vpop.permute.xlu0 %1228
        %vm1231 = vcmask 736720
        %1232 = vst.msk [vmem:[#allocation2 + $0x38] sm:$0xff] %vm1231, %v1229
        %v1233 = vld [vmem:[%s249 + $0x1b] sm:$0x1]
        %v1234 = vld [vmem:[%s249 + $0x3b] sm:$0x1]
        %v1235 = vld [vmem:[%s249 + $0x5b] sm:$0x1]
        %v1236 = vld [vmem:[%s249 + $0x7b] sm:$0x1]
        %v1237 = vld [vmem:[%s249 + $0x9b] sm:$0x1]
        %v1238 = vld [vmem:[%s249 + $0xbb] sm:$0x1]
        %v1239 = vld [vmem:[%s249 + $0xdb] sm:$0x1]
        %v1240 = vld [vmem:[%s249 + $0xfb] sm:$0x1]
        %v1249 = vrot.slane %v1234, 7
        %v1250 = vsel %vm288, %v1249, %v1233
        %v1251 = vrot.slane %v1235, 6
        %v1252 = vsel %vm291, %v1251, %v1250
        %v1253 = vrot.slane %v1236, 5
        %v1254 = vsel %vm294, %v1253, %v1252
        %v1255 = vrot.slane %v1237, 4
        %v1256 = vsel %vm297, %v1255, %v1254
        %v1257 = vrot.slane %v1238, 3
        %v1258 = vsel %vm300, %v1257, %v1256
        %v1259 = vrot.slane %v1239, 2
        %v1260 = vsel %vm303, %v1259, %v1258
        %v1261 = vrot.slane %v1240, 1
        %v1262 = vsel %vm306, %v1261, %v1260
        %1263 = vrot.lane.b32.xlu0 %v1262, 92
        %v1264 = vpop.permute.xlu0 %1263
        %vm1266 = vcmask 1015520
        %1267 = vst.msk [vmem:[#allocation2 + $0x38] sm:$0xff] %vm1266, %v1264
        %v1268 = vld [vmem:[%s249 + $0x1c] sm:$0x1]
        %v1269 = vld [vmem:[%s249 + $0x3c] sm:$0x1]
        %v1270 = vld [vmem:[%s249 + $0x5c] sm:$0x1]
        %v1271 = vld [vmem:[%s249 + $0x7c] sm:$0x1]
        %v1272 = vld [vmem:[%s249 + $0x9c] sm:$0x1]
        %v1273 = vld [vmem:[%s249 + $0xbc] sm:$0x1]
        %v1274 = vld [vmem:[%s249 + $0xdc] sm:$0x1]
        %v1275 = vld [vmem:[%s249 + $0xfc] sm:$0x1]
        %v1284 = vrot.slane %v1269, 7
        %v1285 = vsel %vm288, %v1284, %v1268
        %v1286 = vrot.slane %v1270, 6
        %v1287 = vsel %vm291, %v1286, %v1285
        %v1288 = vrot.slane %v1271, 5
        %v1289 = vsel %vm294, %v1288, %v1287
        %v1290 = vrot.slane %v1272, 4
        %v1291 = vsel %vm297, %v1290, %v1289
        %v1292 = vrot.slane %v1273, 3
        %v1293 = vsel %vm300, %v1292, %v1291
        %v1294 = vrot.slane %v1274, 2
        %v1295 = vsel %vm303, %v1294, %v1293
        %v1296 = vrot.slane %v1275, 1
        %v1297 = vsel %vm306, %v1296, %v1295
        %1298 = vrot.lane.b32.xlu0 %v1297, 126
        %v1299 = vpop.permute.xlu0 %1298
        %vm1301 = vcmask 1048560
        %1302 = vst.msk [vmem:[#allocation2 + $0x38] sm:$0xff] %vm1301, %v1299
        %vm1303 = vcmask 244736
        %1304 = vst.msk [vmem:[#allocation2 + $0x40] sm:$0xff] %vm1303, %v1299
        %v1305 = vld [vmem:[%s249 + $0x1d] sm:$0x1]
        %v1306 = vld [vmem:[%s249 + $0x3d] sm:$0x1]
        %v1307 = vld [vmem:[%s249 + $0x5d] sm:$0x1]
        %v1308 = vld [vmem:[%s249 + $0x7d] sm:$0x1]
        %v1309 = vld [vmem:[%s249 + $0x9d] sm:$0x1]
        %v1310 = vld [vmem:[%s249 + $0xbd] sm:$0x1]
        %v1311 = vld [vmem:[%s249 + $0xdd] sm:$0x1]
        %v1312 = vld [vmem:[%s249 + $0xfd] sm:$0x1]
        %v1321 = vrot.slane %v1306, 7
        %v1322 = vsel %vm288, %v1321, %v1305
        %v1323 = vrot.slane %v1307, 6
        %v1324 = vsel %vm291, %v1323, %v1322
        %v1325 = vrot.slane %v1308, 5
        %v1326 = vsel %vm294, %v1325, %v1324
        %v1327 = vrot.slane %v1309, 4
        %v1328 = vsel %vm297, %v1327, %v1326
        %v1329 = vrot.slane %v1310, 3
        %v1330 = vsel %vm300, %v1329, %v1328
        %v1331 = vrot.slane %v1311, 2
        %v1332 = vsel %vm303, %v1331, %v1330
        %v1333 = vrot.slane %v1312, 1
        %v1334 = vsel %vm306, %v1333, %v1332
        %1335 = vrot.lane.b32.xlu0 %v1334, 32
        %v1336 = vpop.permute.xlu0 %1335
        %vm1338 = vcmask 523520
        %1339 = vst.msk [vmem:[#allocation2 + $0x40] sm:$0xff] %vm1338, %v1336
        %v1340 = vld [vmem:[%s249 + $0x1e] sm:$0x1]
        %v1341 = vld [vmem:[%s249 + $0x3e] sm:$0x1]
        %v1342 = vld [vmem:[%s249 + $0x5e] sm:$0x1]
        %v1343 = vld [vmem:[%s249 + $0x7e] sm:$0x1]
        %v1344 = vld [vmem:[%s249 + $0x9e] sm:$0x1]
        %v1345 = vld [vmem:[%s249 + $0xbe] sm:$0x1]
        %v1346 = vld [vmem:[%s249 + $0xde] sm:$0x1]
        %v1347 = vld [vmem:[%s249 + $0xfe] sm:$0x1]
        %v1356 = vrot.slane %v1341, 7
        %v1357 = vsel %vm288, %v1356, %v1340
        %v1358 = vrot.slane %v1342, 6
        %v1359 = vsel %vm291, %v1358, %v1357
        %v1360 = vrot.slane %v1343, 5
        %v1361 = vsel %vm294, %v1360, %v1359
        %v1362 = vrot.slane %v1344, 4
        %v1363 = vsel %vm297, %v1362, %v1361
        %v1364 = vrot.slane %v1345, 3
        %v1365 = vsel %vm300, %v1364, %v1363
        %v1366 = vrot.slane %v1346, 2
        %v1367 = vsel %vm303, %v1366, %v1365
        %v1368 = vrot.slane %v1347, 1
        %v1369 = vsel %vm306, %v1368, %v1367
        %1370 = vrot.lane.b32.xlu0 %v1369, 66
        %v1371 = vpop.permute.xlu0 %1370
        %vm1373 = vcmask 802320
        %1374 = vst.msk [vmem:[#allocation2 + $0x40] sm:$0xff] %vm1373, %v1371
        %v1375 = vld [vmem:[%s249 + $0x1f] sm:$0x1]
        %v1376 = vld [vmem:[%s249 + $0x3f] sm:$0x1]
        %v1377 = vld [vmem:[%s249 + $0x5f] sm:$0x1]
        %v1378 = vld [vmem:[%s249 + $0x7f] sm:$0x1]
        %v1379 = vld [vmem:[%s249 + $0x9f] sm:$0x1]
        %v1380 = vld [vmem:[%s249 + $0xbf] sm:$0x1]
        %v1381 = vld [vmem:[%s249 + $0xdf] sm:$0x1]
        %v1382 = vld [vmem:[%s249 + $0xff] sm:$0x1]
        %v1391 = vrot.slane %v1376, 7
        %v1392 = vsel %vm288, %v1391, %v1375
        %v1393 = vrot.slane %v1377, 6
        %v1394 = vsel %vm291, %v1393, %v1392
        %v1395 = vrot.slane %v1378, 5
        %v1396 = vsel %vm294, %v1395, %v1394
        %v1397 = vrot.slane %v1379, 4
        %v1398 = vsel %vm297, %v1397, %v1396
        %v1399 = vrot.slane %v1380, 3
        %v1400 = vsel %vm300, %v1399, %v1398
        %v1401 = vrot.slane %v1381, 2
        %v1402 = vsel %vm303, %v1401, %v1400
        %v1403 = vrot.slane %v1382, 1
        %v1404 = vsel %vm306, %v1403, %v1402
        %1405 = vrot.lane.b32.xlu0 %v1404, 100
        %v1406 = vpop.permute.xlu0 %1405
        %vm1408 = vcmask 1048352
        %1409 = vst.msk [vmem:[#allocation2 + $0x40] sm:$0xff] %vm1408, %v1406
        %vm1410 = vcmask 31744
        %1411 = vst.msk [vmem:[#allocation2 + $0x48] sm:$0xff] %vm1410, %v1406
        %v1412 = vld [vmem:[%s5] sm:$0x7]
        %v1413 = vld [vmem:[%s1] sm:$0xff]
        %v1414 = vld [vmem:[%s2] sm:$0xff]
        %v1415 = vld [vmem:[#allocation2] sm:$0xff]
        %v1416 = vld [vmem:[#allocation2 + $0x8] sm:$0xff]
        %v1417 = vld [vmem:[#allocation2 + $0x10] sm:$0xff]
        %v1418 = vld [vmem:[#allocation2 + $0x18] sm:$0xff]
        %v1419 = vld [vmem:[#allocation2 + $0x20] sm:$0xff]
        %v1420 = vld [vmem:[#allocation2 + $0x28] sm:$0xff]
        %v1421 = vld [vmem:[#allocation2 + $0x30] sm:$0xff]
        %v1422 = vld [vmem:[#allocation2 + $0x38] sm:$0xff]
        %v1423 = vld [vmem:[#allocation2 + $0x40] sm:$0xff]
        %v1424 = vld [vmem:[#allocation2 + $0x48] sm:$0xff]
        %1425 = vst [vmem:[#allocation6] sm:$0xff] %v1415
        %1426 = vst [vmem:[#allocation6 + $0x8] sm:$0xff] %v1416
        %1427 = vst [vmem:[#allocation6 + $0x10] sm:$0xff] %v1417
        %1428 = vst [vmem:[#allocation6 + $0x18] sm:$0xff] %v1418
        %1429 = vst [vmem:[#allocation6 + $0x20] sm:$0xff] %v1419
        %1430 = vst [vmem:[#allocation6 + $0x28] sm:$0xff] %v1420
        %1431 = vst [vmem:[#allocation6 + $0x30] sm:$0xff] %v1421
        %1432 = vst [vmem:[#allocation6 + $0x38] sm:$0xff] %v1422
        %1433 = vst [vmem:[#allocation6 + $0x40] sm:$0xff] %v1423
        %1434 = vst.msk [vmem:[#allocation6 + $0x48] sm:$0xff] %vm1410, %v1424
        %v1435 = vld [vmem:[#allocation2] sm:$0xff]
        %v1436 = vld [vmem:[#allocation2 + $0x8] sm:$0xff]
        %v1437 = vld [vmem:[#allocation2 + $0x10] sm:$0xff]
        %v1438 = vld [vmem:[#allocation2 + $0x18] sm:$0xff]
        %v1439 = vld [vmem:[#allocation2 + $0x20] sm:$0xff]
        %v1440 = vld [vmem:[#allocation2 + $0x28] sm:$0xff]
        %v1441 = vld [vmem:[#allocation2 + $0x30] sm:$0xff]
        %v1442 = vld [vmem:[#allocation2 + $0x38] sm:$0xff]
        %v1443 = vld [vmem:[#allocation2 + $0x40] sm:$0xff]
        %v1444 = vld [vmem:[#allocation2 + $0x48] sm:$0xff]
        %1455 = vrot.lane.b32.xlu0 %v1435, 127
        %v1456 = vpop.permute.xlu0 %1455
        %1457 = vrot.lane.b32.xlu0 %v1436, 127
        %v1458 = vpop.permute.xlu0 %1457
        %1459 = vrot.lane.b32.xlu0 %v1437, 127
        %v1460 = vpop.permute.xlu0 %1459
        %1461 = vrot.lane.b32.xlu0 %v1438, 127
        %v1462 = vpop.permute.xlu0 %1461
        %1463 = vrot.lane.b32.xlu0 %v1439, 127
        %v1464 = vpop.permute.xlu0 %1463
        %1465 = vrot.lane.b32.xlu0 %v1440, 127
        %v1466 = vpop.permute.xlu0 %1465
        %1467 = vrot.lane.b32.xlu0 %v1441, 127
        %v1468 = vpop.permute.xlu0 %1467
        %1469 = vrot.lane.b32.xlu0 %v1442, 127
        %v1470 = vpop.permute.xlu0 %1469
        %1471 = vrot.lane.b32.xlu0 %v1443, 127
        %v1472 = vpop.permute.xlu0 %1471
        %1473 = vrot.lane.b32.xlu0 %v1444, 127
        %v1474 = vpop.permute.xlu0 %1473
        %vm1475 = vcmask 1039360
        %v1476 = vsel %vm1475, %v1456, %v1458
        %v1477 = vsel %vm1475, %v1458, %v1460
        %v1478 = vsel %vm1475, %v1460, %v1462
        %v1479 = vsel %vm1475, %v1462, %v1464
        %v1480 = vsel %vm1475, %v1464, %v1466
        %v1481 = vsel %vm1475, %v1466, %v1468
        %v1482 = vsel %vm1475, %v1468, %v1470
        %v1483 = vsel %vm1475, %v1470, %v1472
        %v1484 = vsel %vm1475, %v1472, %v1474
        %1495 = vst [vmem:[#allocation6 + $0x50] sm:$0xff] %v1476
        %1496 = vst [vmem:[#allocation6 + $0x58] sm:$0xff] %v1477
        %1497 = vst [vmem:[#allocation6 + $0x60] sm:$0xff] %v1478
        %1498 = vst [vmem:[#allocation6 + $0x68] sm:$0xff] %v1479
        %1499 = vst [vmem:[#allocation6 + $0x70] sm:$0xff] %v1480
        %1500 = vst [vmem:[#allocation6 + $0x78] sm:$0xff] %v1481
        %1501 = vst [vmem:[#allocation6 + $0x80] sm:$0xff] %v1482
        %1502 = vst [vmem:[#allocation6 + $0x88] sm:$0xff] %v1483
        %1503 = vst [vmem:[#allocation6 + $0x90] sm:$0xff] %v1484
        %1504 = vst.msk [vmem:[#allocation6 + $0x98] sm:$0xff] %vm1410, %v1474
        %v1505 = vld [vmem:[#allocation2] sm:$0xff]
        %v1506 = vld [vmem:[#allocation2 + $0x8] sm:$0xff]
        %v1507 = vld [vmem:[#allocation2 + $0x10] sm:$0xff]
        %v1508 = vld [vmem:[#allocation2 + $0x18] sm:$0xff]
        %v1509 = vld [vmem:[#allocation2 + $0x20] sm:$0xff]
        %v1510 = vld [vmem:[#allocation2 + $0x28] sm:$0xff]
        %v1511 = vld [vmem:[#allocation2 + $0x30] sm:$0xff]
        %v1512 = vld [vmem:[#allocation2 + $0x38] sm:$0xff]
        %v1513 = vld [vmem:[#allocation2 + $0x40] sm:$0xff]
        %v1514 = vld [vmem:[#allocation2 + $0x48] sm:$0xff]
        %1525 = vrot.lane.b32.xlu0 %v1505, 126
        %v1526 = vpop.permute.xlu0 %1525
        %1527 = vrot.lane.b32.xlu0 %v1506, 126
        %v1528 = vpop.permute.xlu0 %1527
        %1529 = vrot.lane.b32.xlu0 %v1507, 126
        %v1530 = vpop.permute.xlu0 %1529
        %1531 = vrot.lane.b32.xlu0 %v1508, 126
        %v1532 = vpop.permute.xlu0 %1531
        %1533 = vrot.lane.b32.xlu0 %v1509, 126
        %v1534 = vpop.permute.xlu0 %1533
        %1535 = vrot.lane.b32.xlu0 %v1510, 126
        %v1536 = vpop.permute.xlu0 %1535
        %1537 = vrot.lane.b32.xlu0 %v1511, 126
        %v1538 = vpop.permute.xlu0 %1537
        %1539 = vrot.lane.b32.xlu0 %v1512, 126
        %v1540 = vpop.permute.xlu0 %1539
        %1541 = vrot.lane.b32.xlu0 %v1513, 126
        %v1542 = vpop.permute.xlu0 %1541
        %1543 = vrot.lane.b32.xlu0 %v1514, 126
        %v1544 = vpop.permute.xlu0 %1543
        %vm1545 = vcmask 1031168
        %v1546 = vsel %vm1545, %v1526, %v1528
        %v1547 = vsel %vm1545, %v1528, %v1530
        %v1548 = vsel %vm1545, %v1530, %v1532
        %v1549 = vsel %vm1545, %v1532, %v1534
        %v1550 = vsel %vm1545, %v1534, %v1536
        %v1551 = vsel %vm1545, %v1536, %v1538
        %v1552 = vsel %vm1545, %v1538, %v1540
        %v1553 = vsel %vm1545, %v1540, %v1542
        %v1554 = vsel %vm1545, %v1542, %v1544
        %1565 = vst [vmem:[#allocation6 + $0xa0] sm:$0xff] %v1546
        %1566 = vst [vmem:[#allocation6 + $0xa8] sm:$0xff] %v1547
        %1567 = vst [vmem:[#allocation6 + $0xb0] sm:$0xff] %v1548
        %1568 = vst [vmem:[#allocation6 + $0xb8] sm:$0xff] %v1549
        %1569 = vst [vmem:[#allocation6 + $0xc0] sm:$0xff] %v1550
        %1570 = vst [vmem:[#allocation6 + $0xc8] sm:$0xff] %v1551
        %1571 = vst [vmem:[#allocation6 + $0xd0] sm:$0xff] %v1552
        %1572 = vst [vmem:[#allocation6 + $0xd8] sm:$0xff] %v1553
        %1573 = vst [vmem:[#allocation6 + $0xe0] sm:$0xff] %v1554
        %1574 = vst.msk [vmem:[#allocation6 + $0xe8] sm:$0xff] %vm1410, %v1544
        %v1575 = vld [vmem:[#allocation2] sm:$0xff]
        %v1576 = vld [vmem:[#allocation2 + $0x8] sm:$0xff]
        %v1577 = vld [vmem:[#allocation2 + $0x10] sm:$0xff]
        %v1578 = vld [vmem:[#allocation2 + $0x18] sm:$0xff]
        %v1579 = vld [vmem:[#allocation2 + $0x20] sm:$0xff]
        %v1580 = vld [vmem:[#allocation2 + $0x28] sm:$0xff]
        %v1581 = vld [vmem:[#allocation2 + $0x30] sm:$0xff]
        %v1582 = vld [vmem:[#allocation2 + $0x38] sm:$0xff]
        %v1583 = vld [vmem:[#allocation2 + $0x40] sm:$0xff]
        %v1584 = vld [vmem:[#allocation2 + $0x48] sm:$0xff]
        %1595 = vrot.lane.b32.xlu0 %v1575, 94
        %v1596 = vpop.permute.xlu0 %1595
        %1597 = vrot.lane.b32.xlu0 %v1576, 94
        %v1598 = vpop.permute.xlu0 %1597
        %1599 = vrot.lane.b32.xlu0 %v1577, 94
        %v1600 = vpop.permute.xlu0 %1599
        %1601 = vrot.lane.b32.xlu0 %v1578, 94
        %v1602 = vpop.permute.xlu0 %1601
        %1603 = vrot.lane.b32.xlu0 %v1579, 94
        %v1604 = vpop.permute.xlu0 %1603
        %1605 = vrot.lane.b32.xlu0 %v1580, 94
        %v1606 = vpop.permute.xlu0 %1605
        %1607 = vrot.lane.b32.xlu0 %v1581, 94
        %v1608 = vpop.permute.xlu0 %1607
        %1609 = vrot.lane.b32.xlu0 %v1582, 94
        %v1610 = vpop.permute.xlu0 %1609
        %1611 = vrot.lane.b32.xlu0 %v1583, 94
        %v1612 = vpop.permute.xlu0 %1611
        %1613 = vrot.lane.b32.xlu0 %v1584, 94
        %v1614 = vpop.permute.xlu0 %1613
        %vm1615 = vcmask 769024
        %v1616 = vsel %vm1615, %v1596, %v1598
        %v1617 = vsel %vm1615, %v1598, %v1600
        %v1618 = vsel %vm1615, %v1600, %v1602
        %v1619 = vsel %vm1615, %v1602, %v1604
        %v1620 = vsel %vm1615, %v1604, %v1606
        %v1621 = vsel %vm1615, %v1606, %v1608
        %v1622 = vsel %vm1615, %v1608, %v1610
        %v1623 = vsel %vm1615, %v1610, %v1612
        %v1624 = vsel %vm1615, %v1612, %v1614
        %1635 = vst [vmem:[#allocation6 + $0xf0] sm:$0xff] %v1616
        %1636 = vst [vmem:[#allocation6 + $0xf8] sm:$0xff] %v1617
        %1637 = vst [vmem:[#allocation6 + $0x100] sm:$0xff] %v1618
        %1638 = vst [vmem:[#allocation6 + $0x108] sm:$0xff] %v1619
        %1639 = vst [vmem:[#allocation6 + $0x110] sm:$0xff] %v1620
        %1640 = vst [vmem:[#allocation6 + $0x118] sm:$0xff] %v1621
        %1641 = vst [vmem:[#allocation6 + $0x120] sm:$0xff] %v1622
        %1642 = vst [vmem:[#allocation6 + $0x128] sm:$0xff] %v1623
        %1643 = vst [vmem:[#allocation6 + $0x130] sm:$0xff] %v1624
        %1644 = vst.msk [vmem:[#allocation6 + $0x138] sm:$0xff] %vm1410, %v1614
        %v1645 = vld [vmem:[#allocation2] sm:$0xff]
        %v1646 = vld [vmem:[#allocation2 + $0x8] sm:$0xff]
        %v1647 = vld [vmem:[#allocation2 + $0x10] sm:$0xff]
        %v1648 = vld [vmem:[#allocation2 + $0x18] sm:$0xff]
        %v1649 = vld [vmem:[#allocation2 + $0x20] sm:$0xff]
        %v1650 = vld [vmem:[#allocation2 + $0x28] sm:$0xff]
        %v1651 = vld [vmem:[#allocation2 + $0x30] sm:$0xff]
        %v1652 = vld [vmem:[#allocation2 + $0x38] sm:$0xff]
        %v1653 = vld [vmem:[#allocation2 + $0x40] sm:$0xff]
        %v1654 = vld [vmem:[#allocation2 + $0x48] sm:$0xff]
        %1665 = vrot.lane.b32.xlu0 %v1645, 93
        %v1666 = vpop.permute.xlu0 %1665
        %1667 = vrot.lane.b32.xlu0 %v1646, 93
        %v1668 = vpop.permute.xlu0 %1667
        %1669 = vrot.lane.b32.xlu0 %v1647, 93
        %v1670 = vpop.permute.xlu0 %1669
        %1671 = vrot.lane.b32.xlu0 %v1648, 93
        %v1672 = vpop.permute.xlu0 %1671
        %1673 = vrot.lane.b32.xlu0 %v1649, 93
        %v1674 = vpop.permute.xlu0 %1673
        %1675 = vrot.lane.b32.xlu0 %v1650, 93
        %v1676 = vpop.permute.xlu0 %1675
        %1677 = vrot.lane.b32.xlu0 %v1651, 93
        %v1678 = vpop.permute.xlu0 %1677
        %1679 = vrot.lane.b32.xlu0 %v1652, 93
        %v1680 = vpop.permute.xlu0 %1679
        %1681 = vrot.lane.b32.xlu0 %v1653, 93
        %v1682 = vpop.permute.xlu0 %1681
        %1683 = vrot.lane.b32.xlu0 %v1654, 93
        %v1684 = vpop.permute.xlu0 %1683
        %vm1685 = vcmask 760832
        %v1686 = vsel %vm1685, %v1666, %v1668
        %v1687 = vsel %vm1685, %v1668, %v1670
        %v1688 = vsel %vm1685, %v1670, %v1672
        %v1689 = vsel %vm1685, %v1672, %v1674
        %v1690 = vsel %vm1685, %v1674, %v1676
        %v1691 = vsel %vm1685, %v1676, %v1678
        %v1692 = vsel %vm1685, %v1678, %v1680
        %v1693 = vsel %vm1685, %v1680, %v1682
        %v1694 = vsel %vm1685, %v1682, %v1684
        %1705 = vst [vmem:[#allocation6 + $0x140] sm:$0xff] %v1686
        %1706 = vst [vmem:[#allocation6 + $0x148] sm:$0xff] %v1687
        %1707 = vst [vmem:[#allocation6 + $0x150] sm:$0xff] %v1688
        %1708 = vst [vmem:[#allocation6 + $0x158] sm:$0xff] %v1689
        %1709 = vst [vmem:[#allocation6 + $0x160] sm:$0xff] %v1690
        %1710 = vst [vmem:[#allocation6 + $0x168] sm:$0xff] %v1691
        %1711 = vst [vmem:[#allocation6 + $0x170] sm:$0xff] %v1692
        %1712 = vst [vmem:[#allocation6 + $0x178] sm:$0xff] %v1693
        %1713 = vst [vmem:[#allocation6 + $0x180] sm:$0xff] %v1694
        %1714 = vst.msk [vmem:[#allocation6 + $0x188] sm:$0xff] %vm1410, %v1684
        %v1715 = vld [vmem:[#allocation2] sm:$0xff]
        %v1716 = vld [vmem:[#allocation2 + $0x8] sm:$0xff]
        %v1717 = vld [vmem:[#allocation2 + $0x10] sm:$0xff]
        %v1718 = vld [vmem:[#allocation2 + $0x18] sm:$0xff]
        %v1719 = vld [vmem:[#allocation2 + $0x20] sm:$0xff]
        %v1720 = vld [vmem:[#allocation2 + $0x28] sm:$0xff]
        %v1721 = vld [vmem:[#allocation2 + $0x30] sm:$0xff]
        %v1722 = vld [vmem:[#allocation2 + $0x38] sm:$0xff]
        %v1723 = vld [vmem:[#allocation2 + $0x40] sm:$0xff]
        %v1724 = vld [vmem:[#allocation2 + $0x48] sm:$0xff]
        %1735 = vrot.lane.b32.xlu0 %v1715, 92
        %v1736 = vpop.permute.xlu0 %1735
        %1737 = vrot.lane.b32.xlu0 %v1716, 92
        %v1738 = vpop.permute.xlu0 %1737
        %1739 = vrot.lane.b32.xlu0 %v1717, 92
        %v1740 = vpop.permute.xlu0 %1739
        %1741 = vrot.lane.b32.xlu0 %v1718, 92
        %v1742 = vpop.permute.xlu0 %1741
        %1743 = vrot.lane.b32.xlu0 %v1719, 92
        %v1744 = vpop.permute.xlu0 %1743
        %1745 = vrot.lane.b32.xlu0 %v1720, 92
        %v1746 = vpop.permute.xlu0 %1745
        %1747 = vrot.lane.b32.xlu0 %v1721, 92
        %v1748 = vpop.permute.xlu0 %1747
        %1749 = vrot.lane.b32.xlu0 %v1722, 92
        %v1750 = vpop.permute.xlu0 %1749
        %1751 = vrot.lane.b32.xlu0 %v1723, 92
        %v1752 = vpop.permute.xlu0 %1751
        %1753 = vrot.lane.b32.xlu0 %v1724, 92
        %v1754 = vpop.permute.xlu0 %1753
        %vm1755 = vcmask 752640
        %v1756 = vsel %vm1755, %v1736, %v1738
        %v1757 = vsel %vm1755, %v1738, %v1740
        %v1758 = vsel %vm1755, %v1740, %v1742
        %v1759 = vsel %vm1755, %v1742, %v1744
        %v1760 = vsel %vm1755, %v1744, %v1746
        %v1761 = vsel %vm1755, %v1746, %v1748
        %v1762 = vsel %vm1755, %v1748, %v1750
        %v1763 = vsel %vm1755, %v1750, %v1752
        %v1764 = vsel %vm1755, %v1752, %v1754
        %1775 = vst [vmem:[#allocation6 + $0x190] sm:$0xff] %v1756
        %1776 = vst [vmem:[#allocation6 + $0x198] sm:$0xff] %v1757
        %1777 = vst [vmem:[#allocation6 + $0x1a0] sm:$0xff] %v1758
        %1778 = vst [vmem:[#allocation6 + $0x1a8] sm:$0xff] %v1759
        %1779 = vst [vmem:[#allocation6 + $0x1b0] sm:$0xff] %v1760
        %1780 = vst [vmem:[#allocation6 + $0x1b8] sm:$0xff] %v1761
        %1781 = vst [vmem:[#allocation6 + $0x1c0] sm:$0xff] %v1762
        %1782 = vst [vmem:[#allocation6 + $0x1c8] sm:$0xff] %v1763
        %1783 = vst [vmem:[#allocation6 + $0x1d0] sm:$0xff] %v1764
        %1784 = vst.msk [vmem:[#allocation6 + $0x1d8] sm:$0xff] %vm1410, %v1754
        %v1785 = vld [vmem:[#allocation2] sm:$0xff]
        %v1786 = vld [vmem:[#allocation2 + $0x8] sm:$0xff]
        %v1787 = vld [vmem:[#allocation2 + $0x10] sm:$0xff]
        %v1788 = vld [vmem:[#allocation2 + $0x18] sm:$0xff]
        %v1789 = vld [vmem:[#allocation2 + $0x20] sm:$0xff]
        %v1790 = vld [vmem:[#allocation2 + $0x28] sm:$0xff]
        %v1791 = vld [vmem:[#allocation2 + $0x30] sm:$0xff]
        %v1792 = vld [vmem:[#allocation2 + $0x38] sm:$0xff]
        %v1793 = vld [vmem:[#allocation2 + $0x40] sm:$0xff]
        %v1794 = vld [vmem:[#allocation2 + $0x48] sm:$0xff]
        %1805 = vrot.lane.b32.xlu0 %v1785, 60
        %v1806 = vpop.permute.xlu0 %1805
        %1807 = vrot.lane.b32.xlu0 %v1786, 60
        %v1808 = vpop.permute.xlu0 %1807
        %1809 = vrot.lane.b32.xlu0 %v1787, 60
        %v1810 = vpop.permute.xlu0 %1809
        %1811 = vrot.lane.b32.xlu0 %v1788, 60
        %v1812 = vpop.permute.xlu0 %1811
        %1813 = vrot.lane.b32.xlu0 %v1789, 60
        %v1814 = vpop.permute.xlu0 %1813
        %1815 = vrot.lane.b32.xlu0 %v1790, 60
        %v1816 = vpop.permute.xlu0 %1815
        %1817 = vrot.lane.b32.xlu0 %v1791, 60
        %v1818 = vpop.permute.xlu0 %1817
        %1819 = vrot.lane.b32.xlu0 %v1792, 60
        %v1820 = vpop.permute.xlu0 %1819
        %1821 = vrot.lane.b32.xlu0 %v1793, 60
        %v1822 = vpop.permute.xlu0 %1821
        %1823 = vrot.lane.b32.xlu0 %v1794, 60
        %v1824 = vpop.permute.xlu0 %1823
        %vm1825 = vcmask 490496
        %v1826 = vsel %vm1825, %v1806, %v1808
        %v1827 = vsel %vm1825, %v1808, %v1810
        %v1828 = vsel %vm1825, %v1810, %v1812
        %v1829 = vsel %vm1825, %v1812, %v1814
        %v1830 = vsel %vm1825, %v1814, %v1816
        %v1831 = vsel %vm1825, %v1816, %v1818
        %v1832 = vsel %vm1825, %v1818, %v1820
        %v1833 = vsel %vm1825, %v1820, %v1822
        %v1834 = vsel %vm1825, %v1822, %v1824
        %1845 = vst [vmem:[#allocation6 + $0x1e0] sm:$0xff] %v1826
        %1846 = vst [vmem:[#allocation6 + $0x1e8] sm:$0xff] %v1827
        %1847 = vst [vmem:[#allocation6 + $0x1f0] sm:$0xff] %v1828
        %1848 = vst [vmem:[#allocation6 + $0x1f8] sm:$0xff] %v1829
        %1849 = vst [vmem:[#allocation6 + $0x200] sm:$0xff] %v1830
        %1850 = vst [vmem:[#allocation6 + $0x208] sm:$0xff] %v1831
        %1851 = vst [vmem:[#allocation6 + $0x210] sm:$0xff] %v1832
        %1852 = vst [vmem:[#allocation6 + $0x218] sm:$0xff] %v1833
        %1853 = vst [vmem:[#allocation6 + $0x220] sm:$0xff] %v1834
        %1854 = vst.msk [vmem:[#allocation6 + $0x228] sm:$0xff] %vm1410, %v1824
        %v1855 = vld [vmem:[#allocation2] sm:$0xff]
        %v1856 = vld [vmem:[#allocation2 + $0x8] sm:$0xff]
        %v1857 = vld [vmem:[#allocation2 + $0x10] sm:$0xff]
        %v1858 = vld [vmem:[#allocation2 + $0x18] sm:$0xff]
        %v1859 = vld [vmem:[#allocation2 + $0x20] sm:$0xff]
        %v1860 = vld [vmem:[#allocation2 + $0x28] sm:$0xff]
        %v1861 = vld [vmem:[#allocation2 + $0x30] sm:$0xff]
        %v1862 = vld [vmem:[#allocation2 + $0x38] sm:$0xff]
        %v1863 = vld [vmem:[#allocation2 + $0x40] sm:$0xff]
        %v1864 = vld [vmem:[#allocation2 + $0x48] sm:$0xff]
        %1875 = vrot.lane.b32.xlu0 %v1855, 59
        %v1876 = vpop.permute.xlu0 %1875
        %1877 = vrot.lane.b32.xlu0 %v1856, 59
        %v1878 = vpop.permute.xlu0 %1877
        %1879 = vrot.lane.b32.xlu0 %v1857, 59
        %v1880 = vpop.permute.xlu0 %1879
        %1881 = vrot.lane.b32.xlu0 %v1858, 59
        %v1882 = vpop.permute.xlu0 %1881
        %1883 = vrot.lane.b32.xlu0 %v1859, 59
        %v1884 = vpop.permute.xlu0 %1883
        %1885 = vrot.lane.b32.xlu0 %v1860, 59
        %v1886 = vpop.permute.xlu0 %1885
        %1887 = vrot.lane.b32.xlu0 %v1861, 59
        %v1888 = vpop.permute.xlu0 %1887
        %1889 = vrot.lane.b32.xlu0 %v1862, 59
        %v1890 = vpop.permute.xlu0 %1889
        %1891 = vrot.lane.b32.xlu0 %v1863, 59
        %v1892 = vpop.permute.xlu0 %1891
        %1893 = vrot.lane.b32.xlu0 %v1864, 59
        %v1894 = vpop.permute.xlu0 %1893
        %vm1895 = vcmask 482304
        %v1896 = vsel %vm1895, %v1876, %v1878
        %v1897 = vsel %vm1895, %v1878, %v1880
        %v1898 = vsel %vm1895, %v1880, %v1882
        %v1899 = vsel %vm1895, %v1882, %v1884
        %v1900 = vsel %vm1895, %v1884, %v1886
        %v1901 = vsel %vm1895, %v1886, %v1888
        %v1902 = vsel %vm1895, %v1888, %v1890
        %v1903 = vsel %vm1895, %v1890, %v1892
        %v1904 = vsel %vm1895, %v1892, %v1894
        %1915 = vst [vmem:[#allocation6 + $0x230] sm:$0xff] %v1896
        %1916 = vst [vmem:[#allocation6 + $0x238] sm:$0xff] %v1897
        %1917 = vst [vmem:[#allocation6 + $0x240] sm:$0xff] %v1898
        %1918 = vst [vmem:[#allocation6 + $0x248] sm:$0xff] %v1899
        %1919 = vst [vmem:[#allocation6 + $0x250] sm:$0xff] %v1900
        %1920 = vst [vmem:[#allocation6 + $0x258] sm:$0xff] %v1901
        %1921 = vst [vmem:[#allocation6 + $0x260] sm:$0xff] %v1902
        %1922 = vst [vmem:[#allocation6 + $0x268] sm:$0xff] %v1903
        %1923 = vst [vmem:[#allocation6 + $0x270] sm:$0xff] %v1904
        %1924 = vst.msk [vmem:[#allocation6 + $0x278] sm:$0xff] %vm1410, %v1894
        %v1925 = vld [vmem:[#allocation2] sm:$0xff]
        %v1926 = vld [vmem:[#allocation2 + $0x8] sm:$0xff]
        %v1927 = vld [vmem:[#allocation2 + $0x10] sm:$0xff]
        %v1928 = vld [vmem:[#allocation2 + $0x18] sm:$0xff]
        %v1929 = vld [vmem:[#allocation2 + $0x20] sm:$0xff]
        %v1930 = vld [vmem:[#allocation2 + $0x28] sm:$0xff]
        %v1931 = vld [vmem:[#allocation2 + $0x30] sm:$0xff]
        %v1932 = vld [vmem:[#allocation2 + $0x38] sm:$0xff]
        %v1933 = vld [vmem:[#allocation2 + $0x40] sm:$0xff]
        %v1934 = vld [vmem:[#allocation2 + $0x48] sm:$0xff]
        %1945 = vrot.lane.b32.xlu0 %v1925, 58
        %v1946 = vpop.permute.xlu0 %1945
        %1947 = vrot.lane.b32.xlu0 %v1926, 58
        %v1948 = vpop.permute.xlu0 %1947
        %1949 = vrot.lane.b32.xlu0 %v1927, 58
        %v1950 = vpop.permute.xlu0 %1949
        %1951 = vrot.lane.b32.xlu0 %v1928, 58
        %v1952 = vpop.permute.xlu0 %1951
        %1953 = vrot.lane.b32.xlu0 %v1929, 58
        %v1954 = vpop.permute.xlu0 %1953
        %1955 = vrot.lane.b32.xlu0 %v1930, 58
        %v1956 = vpop.permute.xlu0 %1955
        %1957 = vrot.lane.b32.xlu0 %v1931, 58
        %v1958 = vpop.permute.xlu0 %1957
        %1959 = vrot.lane.b32.xlu0 %v1932, 58
        %v1960 = vpop.permute.xlu0 %1959
        %1961 = vrot.lane.b32.xlu0 %v1933, 58
        %v1962 = vpop.permute.xlu0 %1961
        %1963 = vrot.lane.b32.xlu0 %v1934, 58
        %v1964 = vpop.permute.xlu0 %1963
        %vm1965 = vcmask 474112
        %v1966 = vsel %vm1965, %v1946, %v1948
        %v1967 = vsel %vm1965, %v1948, %v1950
        %v1968 = vsel %vm1965, %v1950, %v1952
        %v1969 = vsel %vm1965, %v1952, %v1954
        %v1970 = vsel %vm1965, %v1954, %v1956
        %v1971 = vsel %vm1965, %v1956, %v1958
        %v1972 = vsel %vm1965, %v1958, %v1960
        %v1973 = vsel %vm1965, %v1960, %v1962
        %v1974 = vsel %vm1965, %v1962, %v1964
        %1985 = vst [vmem:[#allocation6 + $0x280] sm:$0xff] %v1966
        %1986 = vst [vmem:[#allocation6 + $0x288] sm:$0xff] %v1967
        %1987 = vst [vmem:[#allocation6 + $0x290] sm:$0xff] %v1968
        %1988 = vst [vmem:[#allocation6 + $0x298] sm:$0xff] %v1969
        %1989 = vst [vmem:[#allocation6 + $0x2a0] sm:$0xff] %v1970
        %1990 = vst [vmem:[#allocation6 + $0x2a8] sm:$0xff] %v1971
        %1991 = vst [vmem:[#allocation6 + $0x2b0] sm:$0xff] %v1972
        %1992 = vst [vmem:[#allocation6 + $0x2b8] sm:$0xff] %v1973
        %1993 = vst [vmem:[#allocation6 + $0x2c0] sm:$0xff] %v1974
        %1994 = vst.msk [vmem:[#allocation6 + $0x2c8] sm:$0xff] %vm1410, %v1964
        %v1995 = vld [vmem:[#allocation6] sm:$0xff]
        %v1996 = vld [vmem:[#allocation6 + $0x8] sm:$0xff]
        %v1997 = vld [vmem:[#allocation6 + $0x10] sm:$0xff]
        %v1998 = vld [vmem:[#allocation6 + $0x18] sm:$0xff]
        %v1999 = vld [vmem:[#allocation6 + $0x20] sm:$0xff]
        %v2000 = vld [vmem:[#allocation6 + $0x28] sm:$0xff]
        %v2001 = vld [vmem:[#allocation6 + $0x30] sm:$0xff]
        %v2002 = vld [vmem:[#allocation6 + $0x38] sm:$0xff]
        %v2003 = vld [vmem:[#allocation6 + $0x40] sm:$0xff]
        %v2004 = vld [vmem:[#allocation6 + $0x48] sm:$0xff]
        %v2005 = vld [vmem:[#allocation6 + $0x50] sm:$0xff]
        %v2006 = vld [vmem:[#allocation6 + $0x58] sm:$0xff]
        %v2007 = vld [vmem:[#allocation6 + $0x60] sm:$0xff]
        %v2008 = vld [vmem:[#allocation6 + $0x68] sm:$0xff]
        %v2009 = vld [vmem:[#allocation6 + $0x70] sm:$0xff]
        %v2010 = vld [vmem:[#allocation6 + $0x78] sm:$0xff]
        %v2011 = vld [vmem:[#allocation6 + $0x80] sm:$0xff]
        %v2012 = vld [vmem:[#allocation6 + $0x88] sm:$0xff]
        %v2013 = vld [vmem:[#allocation6 + $0x90] sm:$0xff]
        %v2014 = vld [vmem:[#allocation6 + $0x98] sm:$0xff]
        %v2015 = vld [vmem:[#allocation6 + $0xa0] sm:$0xff]
        %v2016 = vld [vmem:[#allocation6 + $0xa8] sm:$0xff]
        %v2017 = vld [vmem:[#allocation6 + $0xb0] sm:$0xff]
        %v2018 = vld [vmem:[#allocation6 + $0xb8] sm:$0xff]
        %v2019 = vld [vmem:[#allocation6 + $0xc0] sm:$0xff]
        %v2020 = vld [vmem:[#allocation6 + $0xc8] sm:$0xff]
        %v2021 = vld [vmem:[#allocation6 + $0xd0] sm:$0xff]
        %v2022 = vld [vmem:[#allocation6 + $0xd8] sm:$0xff]
        %v2023 = vld [vmem:[#allocation6 + $0xe0] sm:$0xff]
        %v2024 = vld [vmem:[#allocation6 + $0xe8] sm:$0xff]
        %v2025 = vld [vmem:[#allocation6 + $0xf0] sm:$0xff]
        %v2026 = vld [vmem:[#allocation6 + $0xf8] sm:$0xff]
        %v2027 = vld [vmem:[#allocation6 + $0x100] sm:$0xff]
        %v2028 = vld [vmem:[#allocation6 + $0x108] sm:$0xff]
        %v2029 = vld [vmem:[#allocation6 + $0x110] sm:$0xff]
        %v2030 = vld [vmem:[#allocation6 + $0x118] sm:$0xff]
        %v2031 = vld [vmem:[#allocation6 + $0x120] sm:$0xff]
        %v2032 = vld [vmem:[#allocation6 + $0x128] sm:$0xff]
        %v2033 = vld [vmem:[#allocation6 + $0x130] sm:$0xff]
        %v2034 = vld [vmem:[#allocation6 + $0x138] sm:$0xff]
        %v2035 = vld [vmem:[#allocation6 + $0x140] sm:$0xff]
        %v2036 = vld [vmem:[#allocation6 + $0x148] sm:$0xff]
        %v2037 = vld [vmem:[#allocation6 + $0x150] sm:$0xff]
        %v2038 = vld [vmem:[#allocation6 + $0x158] sm:$0xff]
        %v2039 = vld [vmem:[#allocation6 + $0x160] sm:$0xff]
        %v2040 = vld [vmem:[#allocation6 + $0x168] sm:$0xff]
        %v2041 = vld [vmem:[#allocation6 + $0x170] sm:$0xff]
        %v2042 = vld [vmem:[#allocation6 + $0x178] sm:$0xff]
        %v2043 = vld [vmem:[#allocation6 + $0x180] sm:$0xff]
        %v2044 = vld [vmem:[#allocation6 + $0x188] sm:$0xff]
        %v2045 = vld [vmem:[#allocation6 + $0x190] sm:$0xff]
        %v2046 = vld [vmem:[#allocation6 + $0x198] sm:$0xff]
        %v2047 = vld [vmem:[#allocation6 + $0x1a0] sm:$0xff]
        %v2048 = vld [vmem:[#allocation6 + $0x1a8] sm:$0xff]
        %v2049 = vld [vmem:[#allocation6 + $0x1b0] sm:$0xff]
        %v2050 = vld [vmem:[#allocation6 + $0x1b8] sm:$0xff]
        %v2051 = vld [vmem:[#allocation6 + $0x1c0] sm:$0xff]
        %v2052 = vld [vmem:[#allocation6 + $0x1c8] sm:$0xff]
        %v2053 = vld [vmem:[#allocation6 + $0x1d0] sm:$0xff]
        %v2054 = vld [vmem:[#allocation6 + $0x1d8] sm:$0xff]
        %v2055 = vld [vmem:[#allocation6 + $0x1e0] sm:$0xff]
        %v2056 = vld [vmem:[#allocation6 + $0x1e8] sm:$0xff]
        %v2057 = vld [vmem:[#allocation6 + $0x1f0] sm:$0xff]
        %v2058 = vld [vmem:[#allocation6 + $0x1f8] sm:$0xff]
        %v2059 = vld [vmem:[#allocation6 + $0x200] sm:$0xff]
        %v2060 = vld [vmem:[#allocation6 + $0x208] sm:$0xff]
        %v2061 = vld [vmem:[#allocation6 + $0x210] sm:$0xff]
        %v2062 = vld [vmem:[#allocation6 + $0x218] sm:$0xff]
        %v2063 = vld [vmem:[#allocation6 + $0x220] sm:$0xff]
        %v2064 = vld [vmem:[#allocation6 + $0x228] sm:$0xff]
        %v2065 = vld [vmem:[#allocation6 + $0x230] sm:$0xff]
        %v2066 = vld [vmem:[#allocation6 + $0x238] sm:$0xff]
        %v2067 = vld [vmem:[#allocation6 + $0x240] sm:$0xff]
        %v2068 = vld [vmem:[#allocation6 + $0x248] sm:$0xff]
        %v2069 = vld [vmem:[#allocation6 + $0x250] sm:$0xff]
        %v2070 = vld [vmem:[#allocation6 + $0x258] sm:$0xff]
        %v2071 = vld [vmem:[#allocation6 + $0x260] sm:$0xff]
        %v2072 = vld [vmem:[#allocation6 + $0x268] sm:$0xff]
        %v2073 = vld [vmem:[#allocation6 + $0x270] sm:$0xff]
        %v2074 = vld [vmem:[#allocation6 + $0x278] sm:$0xff]
        %v2075 = vld [vmem:[#allocation6 + $0x280] sm:$0xff]
        %v2076 = vld [vmem:[#allocation6 + $0x288] sm:$0xff]
        %v2077 = vld [vmem:[#allocation6 + $0x290] sm:$0xff]
        %v2078 = vld [vmem:[#allocation6 + $0x298] sm:$0xff]
        %v2079 = vld [vmem:[#allocation6 + $0x2a0] sm:$0xff]
        %v2080 = vld [vmem:[#allocation6 + $0x2a8] sm:$0xff]
        %v2081 = vld [vmem:[#allocation6 + $0x2b0] sm:$0xff]
        %v2082 = vld [vmem:[#allocation6 + $0x2b8] sm:$0xff]
        %v2083 = vld [vmem:[#allocation6 + $0x2c0] sm:$0xff]
        %v2084 = vld [vmem:[#allocation6 + $0x2c8] sm:$0xff]
        %2086 = vset.pattern.permute.xlu0 0
        %2087 = vperm.xlu0 %2086, %v1414
        %v2088 = vpop.permute.xlu0 %2087
        %vm2090 = vcmask 588800
        %v2092 = vsel %vm2090, %v1413, 0
        %2094 = vmatprep.subr.mxu0 %v1996
        %2095 = vmatpush1.msra.mxu0 %v1995
        %2096 = vmatprep.subr.mxu0 %v2006
        %2097 = vmatpush1.msra.mxu0 %v2005
        %2098 = vmatprep.subr.mxu0 %v2016
        %2099 = vmatpush1.msra.mxu0 %v2015
        %2100 = vmatprep.subr.mxu0 %v2026
        %2101 = vmatpush1.msra.mxu0 %v2025
        %2102 = vmatprep.subr.mxu0 %v2036
        %2103 = vmatpush1.msra.mxu0 %v2035
        %2104 = vmatprep.subr.mxu0 %v2046
        %2105 = vmatpush1.msra.mxu0 %v2045
        %2106 = vmatprep.subr.mxu0 %v2056
        %2107 = vmatpush1.msra.mxu0 %v2055
        %2108 = vmatprep.subr.mxu0 %v2066
        %2109 = vmatpush1.msra.mxu0 %v2065
        %2110 = vmatprep.subr.mxu0 %v2076
        %2111 = vmatpush1.msra.mxu0 %v2075
        %2112 = vmatprep.subr.mxu0 0.0
        %2113 = vmatpush1.msra.mxu0 0.0
        %2114 = vmatprep.subr.mxu0 0.0
        %2115 = vmatpush1.msra.mxu0 0.0
        %2116 = vmatprep.subr.mxu0 0.0
        %2117 = vmatpush1.msra.mxu0 0.0
        %2118 = vmatprep.subr.mxu0 0.0
        %2119 = vmatpush1.msra.mxu0 0.0
        %2120 = vmatprep.subr.mxu0 0.0
        %2121 = vmatpush1.msra.mxu0 0.0
        %2122 = vmatprep.subr.mxu0 0.0
        %2123 = vmatpush1.msra.mxu0 0.0
        %2124 = vmatprep.subr.mxu0 0.0
        %2125 = vmatpush1.msra.mxu0 0.0
        %2126 = vmatprep.subr.mxu0 0.0
        %2127 = vmatpush1.msra.mxu0 0.0
        %2128 = vmatprep.subr.mxu0 0.0
        %2129 = vmatpush1.msra.mxu0 0.0
        %2130 = vmatprep.subr.mxu0 0.0
        %2131 = vmatpush1.msra.mxu0 0.0
        %2132 = vmatprep.subr.mxu0 0.0
        %2133 = vmatpush1.msra.mxu0 0.0
        %2134 = vmatprep.subr.mxu0 0.0
        %2135 = vmatpush1.msra.mxu0 0.0
        %2136 = vmatprep.subr.mxu0 0.0
        %2137 = vmatpush1.msra.mxu0 0.0
        %2138 = vmatprep.subr.mxu0 0.0
        %2139 = vmatpush1.msra.mxu0 0.0
        %2140 = vmatprep.subr.mxu0 0.0
        %2141 = vmatpush1.msra.mxu0 0.0
        %2142 = vmatprep.subr.mxu0 0.0
        %2143 = vmatpush1.msra.mxu0 0.0
        %2144 = vmatprep.subr.mxu0 0.0
        %2145 = vmatpush1.msra.mxu0 0.0
        %2146 = vmatprep.subr.mxu0 0.0
        %2147 = vmatpush1.msra.mxu0 0.0
        %2148 = vmatprep.subr.mxu0 0.0
        %2149 = vmatpush1.msra.mxu0 0.0
        %2150 = vmatprep.subr.mxu0 0.0
        %2151 = vmatpush1.msra.mxu0 0.0
        %2152 = vmatprep.subr.mxu0 0.0
        %2153 = vmatpush1.msra.mxu0 0.0
        %2154 = vmatprep.subr.mxu0 0.0
        %2155 = vmatpush1.msra.mxu0 0.0
        %2156 = vmatprep.subr.mxu0 0.0
        %2157 = vmatpush1.msra.mxu0 0.0
        %2158 = vmatprep.mubr.f32.mxu0 0.0
        %2159 = vmatmul.mubr.f32.gmra.mrb[0].mxu0 %v2092
        %v2160 = vpop.f32.mrb[0].mxu0
        %v2161 = vadd.f32 %v2088, %v2160
        %v2162 = vpop.f32.mrb[0].mxu0
        %v2163 = vadd.f32 %v2088, %v2162
        %2164 = vdwg.mxu0
        %2165 = vmatprep.subr.mxu0 %v1998
        %2166 = vmatpush1.msra.mxu0 %v1997
        %2167 = vmatprep.subr.mxu0 %v2008
        %2168 = vmatpush1.msra.mxu0 %v2007
        %2169 = vmatprep.subr.mxu0 %v2018
        %2170 = vmatpush1.msra.mxu0 %v2017
        %2171 = vmatprep.subr.mxu0 %v2028
        %2172 = vmatpush1.msra.mxu0 %v2027
        %2173 = vmatprep.subr.mxu0 %v2038
        %2174 = vmatpush1.msra.mxu0 %v2037
        %2175 = vmatprep.subr.mxu0 %v2048
        %2176 = vmatpush1.msra.mxu0 %v2047
        %2177 = vmatprep.subr.mxu0 %v2058
        %2178 = vmatpush1.msra.mxu0 %v2057
        %2179 = vmatprep.subr.mxu0 %v2068
        %2180 = vmatpush1.msra.mxu0 %v2067
        %2181 = vmatprep.subr.mxu0 %v2078
        %2182 = vmatpush1.msra.mxu0 %v2077
        %2183 = vmatprep.subr.mxu0 0.0
        %2184 = vmatpush1.msra.mxu0 0.0
        %2185 = vmatprep.subr.mxu0 0.0
        %2186 = vmatpush1.msra.mxu0 0.0
        %2187 = vmatprep.subr.mxu0 0.0
        %2188 = vmatpush1.msra.mxu0 0.0
        %2189 = vmatprep.subr.mxu0 0.0
        %2190 = vmatpush1.msra.mxu0 0.0
        %2191 = vmatprep.subr.mxu0 0.0
        %2192 = vmatpush1.msra.mxu0 0.0
        %2193 = vmatprep.subr.mxu0 0.0
        %2194 = vmatpush1.msra.mxu0 0.0
        %2195 = vmatprep.subr.mxu0 0.0
        %2196 = vmatpush1.msra.mxu0 0.0
        %2197 = vmatprep.subr.mxu0 0.0
        %2198 = vmatpush1.msra.mxu0 0.0
        %2199 = vmatprep.subr.mxu0 0.0
        %2200 = vmatpush1.msra.mxu0 0.0
        %2201 = vmatprep.subr.mxu0 0.0
        %2202 = vmatpush1.msra.mxu0 0.0
        %2203 = vmatprep.subr.mxu0 0.0
        %2204 = vmatpush1.msra.mxu0 0.0
        %2205 = vmatprep.subr.mxu0 0.0
        %2206 = vmatpush1.msra.mxu0 0.0
        %2207 = vmatprep.subr.mxu0 0.0
        %2208 = vmatpush1.msra.mxu0 0.0
        %2209 = vmatprep.subr.mxu0 0.0
        %2210 = vmatpush1.msra.mxu0 0.0
        %2211 = vmatprep.subr.mxu0 0.0
        %2212 = vmatpush1.msra.mxu0 0.0
        %2213 = vmatprep.subr.mxu0 0.0
        %2214 = vmatpush1.msra.mxu0 0.0
        %2215 = vmatprep.subr.mxu0 0.0
        %2216 = vmatpush1.msra.mxu0 0.0
        %2217 = vmatprep.subr.mxu0 0.0
        %2218 = vmatpush1.msra.mxu0 0.0
        %2219 = vmatprep.subr.mxu0 0.0
        %2220 = vmatpush1.msra.mxu0 0.0
        %2221 = vmatprep.subr.mxu0 0.0
        %2222 = vmatpush1.msra.mxu0 0.0
        %2223 = vmatprep.subr.mxu0 0.0
        %2224 = vmatpush1.msra.mxu0 0.0
        %2225 = vmatprep.subr.mxu0 0.0
        %2226 = vmatpush1.msra.mxu0 0.0
        %2227 = vmatprep.subr.mxu0 0.0
        %2228 = vmatpush1.msra.mxu0 0.0
        %2229 = vmatprep.mubr.f32.mxu0 0.0
        %2230 = vmatmul.mubr.f32.gmra.mrb[0].mxu0 %v2092
        %v2231 = vpop.f32.mrb[0].mxu0
        %v2232 = vadd.f32 %v2088, %v2231
        %v2233 = vpop.f32.mrb[0].mxu0
        %v2234 = vadd.f32 %v2088, %v2233
        %2235 = vdwg.mxu0
        %2236 = vmatprep.subr.mxu0 %v2000
        %2237 = vmatpush1.msra.mxu0 %v1999
        %2238 = vmatprep.subr.mxu0 %v2010
        %2239 = vmatpush1.msra.mxu0 %v2009
        %2240 = vmatprep.subr.mxu0 %v2020
        %2241 = vmatpush1.msra.mxu0 %v2019
        %2242 = vmatprep.subr.mxu0 %v2030
        %2243 = vmatpush1.msra.mxu0 %v2029
        %2244 = vmatprep.subr.mxu0 %v2040
        %2245 = vmatpush1.msra.mxu0 %v2039
        %2246 = vmatprep.subr.mxu0 %v2050
        %2247 = vmatpush1.msra.mxu0 %v2049
        %2248 = vmatprep.subr.mxu0 %v2060
        %2249 = vmatpush1.msra.mxu0 %v2059
        %2250 = vmatprep.subr.mxu0 %v2070
        %2251 = vmatpush1.msra.mxu0 %v2069
        %2252 = vmatprep.subr.mxu0 %v2080
        %2253 = vmatpush1.msra.mxu0 %v2079
        %2254 = vmatprep.subr.mxu0 0.0
        %2255 = vmatpush1.msra.mxu0 0.0
        %2256 = vmatprep.subr.mxu0 0.0
        %2257 = vmatpush1.msra.mxu0 0.0
        %2258 = vmatprep.subr.mxu0 0.0
        %2259 = vmatpush1.msra.mxu0 0.0
        %2260 = vmatprep.subr.mxu0 0.0
        %2261 = vmatpush1.msra.mxu0 0.0
        %2262 = vmatprep.subr.mxu0 0.0
        %2263 = vmatpush1.msra.mxu0 0.0
        %2264 = vmatprep.subr.mxu0 0.0
        %2265 = vmatpush1.msra.mxu0 0.0
        %2266 = vmatprep.subr.mxu0 0.0
        %2267 = vmatpush1.msra.mxu0 0.0
        %2268 = vmatprep.subr.mxu0 0.0
        %2269 = vmatpush1.msra.mxu0 0.0
        %2270 = vmatprep.subr.mxu0 0.0
        %2271 = vmatpush1.msra.mxu0 0.0
        %2272 = vmatprep.subr.mxu0 0.0
        %2273 = vmatpush1.msra.mxu0 0.0
        %2274 = vmatprep.subr.mxu0 0.0
        %2275 = vmatpush1.msra.mxu0 0.0
        %2276 = vmatprep.subr.mxu0 0.0
        %2277 = vmatpush1.msra.mxu0 0.0
        %2278 = vmatprep.subr.mxu0 0.0
        %2279 = vmatpush1.msra.mxu0 0.0
        %2280 = vmatprep.subr.mxu0 0.0
        %2281 = vmatpush1.msra.mxu0 0.0
        %2282 = vmatprep.subr.mxu0 0.0
        %2283 = vmatpush1.msra.mxu0 0.0
        %2284 = vmatprep.subr.mxu0 0.0
        %2285 = vmatpush1.msra.mxu0 0.0
        %2286 = vmatprep.subr.mxu0 0.0
        %2287 = vmatpush1.msra.mxu0 0.0
        %2288 = vmatprep.subr.mxu0 0.0
        %2289 = vmatpush1.msra.mxu0 0.0
        %2290 = vmatprep.subr.mxu0 0.0
        %2291 = vmatpush1.msra.mxu0 0.0
        %2292 = vmatprep.subr.mxu0 0.0
        %2293 = vmatpush1.msra.mxu0 0.0
        %2294 = vmatprep.subr.mxu0 0.0
        %2295 = vmatpush1.msra.mxu0 0.0
        %2296 = vmatprep.subr.mxu0 0.0
        %2297 = vmatpush1.msra.mxu0 0.0
        %2298 = vmatprep.subr.mxu0 0.0
        %2299 = vmatpush1.msra.mxu0 0.0
        %2300 = vmatprep.mubr.f32.mxu0 0.0
        %2301 = vmatmul.mubr.f32.gmra.mrb[0].mxu0 %v2092
        %v2302 = vpop.f32.mrb[0].mxu0
        %v2303 = vadd.f32 %v2088, %v2302
        %v2304 = vpop.f32.mrb[0].mxu0
        %v2305 = vadd.f32 %v2088, %v2304
        %2306 = vdwg.mxu0
        %2307 = vmatprep.subr.mxu0 %v2002
        %2308 = vmatpush1.msra.mxu0 %v2001
        %2309 = vmatprep.subr.mxu0 %v2012
        %2310 = vmatpush1.msra.mxu0 %v2011
        %2311 = vmatprep.subr.mxu0 %v2022
        %2312 = vmatpush1.msra.mxu0 %v2021
        %2313 = vmatprep.subr.mxu0 %v2032
        %2314 = vmatpush1.msra.mxu0 %v2031
        %2315 = vmatprep.subr.mxu0 %v2042
        %2316 = vmatpush1.msra.mxu0 %v2041
        %2317 = vmatprep.subr.mxu0 %v2052
        %2318 = vmatpush1.msra.mxu0 %v2051
        %2319 = vmatprep.subr.mxu0 %v2062
        %2320 = vmatpush1.msra.mxu0 %v2061
        %2321 = vmatprep.subr.mxu0 %v2072
        %2322 = vmatpush1.msra.mxu0 %v2071
        %2323 = vmatprep.subr.mxu0 %v2082
        %2324 = vmatpush1.msra.mxu0 %v2081
        %2325 = vmatprep.subr.mxu0 0.0
        %2326 = vmatpush1.msra.mxu0 0.0
        %2327 = vmatprep.subr.mxu0 0.0
        %2328 = vmatpush1.msra.mxu0 0.0
        %2329 = vmatprep.subr.mxu0 0.0
        %2330 = vmatpush1.msra.mxu0 0.0
        %2331 = vmatprep.subr.mxu0 0.0
        %2332 = vmatpush1.msra.mxu0 0.0
        %2333 = vmatprep.subr.mxu0 0.0
        %2334 = vmatpush1.msra.mxu0 0.0
        %2335 = vmatprep.subr.mxu0 0.0
        %2336 = vmatpush1.msra.mxu0 0.0
        %2337 = vmatprep.subr.mxu0 0.0
        %2338 = vmatpush1.msra.mxu0 0.0
        %2339 = vmatprep.subr.mxu0 0.0
        %2340 = vmatpush1.msra.mxu0 0.0
        %2341 = vmatprep.subr.mxu0 0.0
        %2342 = vmatpush1.msra.mxu0 0.0
        %2343 = vmatprep.subr.mxu0 0.0
        %2344 = vmatpush1.msra.mxu0 0.0
        %2345 = vmatprep.subr.mxu0 0.0
        %2346 = vmatpush1.msra.mxu0 0.0
        %2347 = vmatprep.subr.mxu0 0.0
        %2348 = vmatpush1.msra.mxu0 0.0
        %2349 = vmatprep.subr.mxu0 0.0
        %2350 = vmatpush1.msra.mxu0 0.0
        %2351 = vmatprep.subr.mxu0 0.0
        %2352 = vmatpush1.msra.mxu0 0.0
        %2353 = vmatprep.subr.mxu0 0.0
        %2354 = vmatpush1.msra.mxu0 0.0
        %2355 = vmatprep.subr.mxu0 0.0
        %2356 = vmatpush1.msra.mxu0 0.0
        %2357 = vmatprep.subr.mxu0 0.0
        %2358 = vmatpush1.msra.mxu0 0.0
        %2359 = vmatprep.subr.mxu0 0.0
        %2360 = vmatpush1.msra.mxu0 0.0
        %2361 = vmatprep.subr.mxu0 0.0
        %2362 = vmatpush1.msra.mxu0 0.0
        %2363 = vmatprep.subr.mxu0 0.0
        %2364 = vmatpush1.msra.mxu0 0.0
        %2365 = vmatprep.subr.mxu0 0.0
        %2366 = vmatpush1.msra.mxu0 0.0
        %2367 = vmatprep.subr.mxu0 0.0
        %2368 = vmatpush1.msra.mxu0 0.0
        %2369 = vmatprep.subr.mxu0 0.0
        %2370 = vmatpush1.msra.mxu0 0.0
        %2371 = vmatprep.mubr.f32.mxu0 0.0
        %2372 = vmatmul.mubr.f32.gmra.mrb[0].mxu0 %v2092
        %v2373 = vpop.f32.mrb[0].mxu0
        %v2374 = vadd.f32 %v2088, %v2373
        %v2375 = vpop.f32.mrb[0].mxu0
        %v2376 = vadd.f32 %v2088, %v2375
        %2377 = vdwg.mxu0
        %2378 = vmatprep.subr.mxu0 %v2004
        %2379 = vmatpush1.msra.mxu0 %v2003
        %2380 = vmatprep.subr.mxu0 %v2014
        %2381 = vmatpush1.msra.mxu0 %v2013
        %2382 = vmatprep.subr.mxu0 %v2024
        %2383 = vmatpush1.msra.mxu0 %v2023
        %2384 = vmatprep.subr.mxu0 %v2034
        %2385 = vmatpush1.msra.mxu0 %v2033
        %2386 = vmatprep.subr.mxu0 %v2044
        %2387 = vmatpush1.msra.mxu0 %v2043
        %2388 = vmatprep.subr.mxu0 %v2054
        %2389 = vmatpush1.msra.mxu0 %v2053
        %2390 = vmatprep.subr.mxu0 %v2064
        %2391 = vmatpush1.msra.mxu0 %v2063
        %2392 = vmatprep.subr.mxu0 %v2074
        %2393 = vmatpush1.msra.mxu0 %v2073
        %2394 = vmatprep.subr.mxu0 %v2084
        %2395 = vmatpush1.msra.mxu0 %v2083
        %2396 = vmatprep.subr.mxu0 0.0
        %2397 = vmatpush1.msra.mxu0 0.0
        %2398 = vmatprep.subr.mxu0 0.0
        %2399 = vmatpush1.msra.mxu0 0.0
        %2400 = vmatprep.subr.mxu0 0.0
        %2401 = vmatpush1.msra.mxu0 0.0
        %2402 = vmatprep.subr.mxu0 0.0
        %2403 = vmatpush1.msra.mxu0 0.0
        %2404 = vmatprep.subr.mxu0 0.0
        %2405 = vmatpush1.msra.mxu0 0.0
        %2406 = vmatprep.subr.mxu0 0.0
        %2407 = vmatpush1.msra.mxu0 0.0
        %2408 = vmatprep.subr.mxu0 0.0
        %2409 = vmatpush1.msra.mxu0 0.0
        %2410 = vmatprep.subr.mxu0 0.0
        %2411 = vmatpush1.msra.mxu0 0.0
        %2412 = vmatprep.subr.mxu0 0.0
        %2413 = vmatpush1.msra.mxu0 0.0
        %2414 = vmatprep.subr.mxu0 0.0
        %2415 = vmatpush1.msra.mxu0 0.0
        %2416 = vmatprep.subr.mxu0 0.0
        %2417 = vmatpush1.msra.mxu0 0.0
        %2418 = vmatprep.subr.mxu0 0.0
        %2419 = vmatpush1.msra.mxu0 0.0
        %2420 = vmatprep.subr.mxu0 0.0
        %2421 = vmatpush1.msra.mxu0 0.0
        %2422 = vmatprep.subr.mxu0 0.0
        %2423 = vmatpush1.msra.mxu0 0.0
        %2424 = vmatprep.subr.mxu0 0.0
        %2425 = vmatpush1.msra.mxu0 0.0
        %2426 = vmatprep.subr.mxu0 0.0
        %2427 = vmatpush1.msra.mxu0 0.0
        %2428 = vmatprep.subr.mxu0 0.0
        %2429 = vmatpush1.msra.mxu0 0.0
        %2430 = vmatprep.subr.mxu0 0.0
        %2431 = vmatpush1.msra.mxu0 0.0
        %2432 = vmatprep.subr.mxu0 0.0
        %2433 = vmatpush1.msra.mxu0 0.0
        %2434 = vmatprep.subr.mxu0 0.0
        %2435 = vmatpush1.msra.mxu0 0.0
        %2436 = vmatprep.subr.mxu0 0.0
        %2437 = vmatpush1.msra.mxu0 0.0
        %2438 = vmatprep.subr.mxu0 0.0
        %2439 = vmatpush1.msra.mxu0 0.0
        %2440 = vmatprep.subr.mxu0 0.0
        %2441 = vmatpush1.msra.mxu0 0.0
        %2442 = vmatprep.mubr.f32.mxu0 0.0
        %2443 = vmatmul.mubr.f32.gmra.mrb[0].mxu0 %v2092
        %v2444 = vpop.f32.mrb[0].mxu0
        %v2445 = vadd.f32 %v2088, %v2444
        %v2446 = vpop.f32.mrb[0].mxu0
        %v2447 = vadd.f32 %v2088, %v2446
        %2448 = vdwg.mxu0
        %v2449 = vld [vmem:[%s3] sm:$0xff]
        %v2450 = vld [vmem:[%s3 + $0x8] sm:$0xff]
        %v2451 = vld [vmem:[%s3 + $0x10] sm:$0xff]
        %v2452 = vld [vmem:[%s3 + $0x18] sm:$0xff]
        %v2453 = vld [vmem:[%s3 + $0x20] sm:$0xff]
        %v2454 = vld [vmem:[%s3 + $0x28] sm:$0xff]
        %v2455 = vld [vmem:[%s3 + $0x30] sm:$0xff]
        %v2456 = vld [vmem:[%s3 + $0x38] sm:$0xff]
        %v2457 = vld [vmem:[%s3 + $0x40] sm:$0xff]
        %v2458 = vld [vmem:[%s3 + $0x48] sm:$0xff]
        %v2459 = vld [vmem:[%s3 + $0x50] sm:$0xff]
        %v2460 = vld [vmem:[%s3 + $0x58] sm:$0xff]
        %v2461 = vld [vmem:[%s3 + $0x60] sm:$0xff]
        %v2462 = vld [vmem:[%s3 + $0x68] sm:$0xff]
        %v2463 = vld [vmem:[%s3 + $0x70] sm:$0xff]
        %v2464 = vld [vmem:[%s3 + $0x78] sm:$0xff]
        %v2465 = vld [vmem:[%s3 + $0x80] sm:$0xff]
        %v2466 = vld [vmem:[%s3 + $0x88] sm:$0xff]
        %v2467 = vld [vmem:[%s3 + $0x90] sm:$0xff]
        %v2468 = vld [vmem:[%s3 + $0x98] sm:$0xff]
        %v2469 = vld [vmem:[%s3 + $0xa0] sm:$0xff]
        %v2470 = vld [vmem:[%s3 + $0xa8] sm:$0xff]
        %v2471 = vld [vmem:[%s3 + $0xb0] sm:$0xff]
        %v2472 = vld [vmem:[%s3 + $0xb8] sm:$0xff]
        %v2473 = vld [vmem:[%s3 + $0xc0] sm:$0xff]
        %v2474 = vld [vmem:[%s3 + $0xc8] sm:$0xff]
        %v2475 = vld [vmem:[%s3 + $0xd0] sm:$0xff]
        %v2476 = vld [vmem:[%s3 + $0xd8] sm:$0xff]
        %v2477 = vld [vmem:[%s3 + $0xe0] sm:$0xff]
        %v2478 = vld [vmem:[%s3 + $0xe8] sm:$0xff]
        %v2479 = vld [vmem:[%s3 + $0xf0] sm:$0xff]
        %v2480 = vld [vmem:[%s3 + $0xf8] sm:$0xff]
        %v2481 = vld [vmem:[%s3 + $0x100] sm:$0xff]
        %v2482 = vld [vmem:[%s3 + $0x108] sm:$0xff]
        %v2483 = vld [vmem:[%s3 + $0x110] sm:$0xff]
        %v2484 = vld [vmem:[%s3 + $0x118] sm:$0xff]
        %v2485 = vld [vmem:[%s3 + $0x120] sm:$0xff]
        %v2486 = vld [vmem:[%s3 + $0x128] sm:$0xff]
        %v2487 = vld [vmem:[%s3 + $0x130] sm:$0xff]
        %v2488 = vld [vmem:[%s3 + $0x138] sm:$0xff]
        %v2489 = vld [vmem:[%s3 + $0x140] sm:$0xff]
        %v2490 = vld [vmem:[%s3 + $0x148] sm:$0xff]
        %v2491 = vld [vmem:[%s3 + $0x150] sm:$0xff]
        %v2492 = vld [vmem:[%s3 + $0x158] sm:$0xff]
        %v2493 = vld [vmem:[%s3 + $0x160] sm:$0xff]
        %v2494 = vld [vmem:[%s3 + $0x168] sm:$0xff]
        %v2495 = vld [vmem:[%s3 + $0x170] sm:$0xff]
        %v2496 = vld [vmem:[%s3 + $0x178] sm:$0xff]
        %v2497 = vld [vmem:[%s3 + $0x180] sm:$0xff]
        %v2498 = vld [vmem:[%s3 + $0x188] sm:$0xff]
        %v2499 = vld [vmem:[%s3 + $0x190] sm:$0xff]
        %v2500 = vld [vmem:[%s3 + $0x198] sm:$0xff]
        %v2501 = vld [vmem:[%s3 + $0x1a0] sm:$0xff]
        %v2502 = vld [vmem:[%s3 + $0x1a8] sm:$0xff]
        %v2503 = vld [vmem:[%s3 + $0x1b0] sm:$0xff]
        %v2504 = vld [vmem:[%s3 + $0x1b8] sm:$0xff]
        %v2505 = vld [vmem:[%s3 + $0x1c0] sm:$0xff]
        %v2506 = vld [vmem:[%s3 + $0x1c8] sm:$0xff]
        %v2507 = vld [vmem:[%s3 + $0x1d0] sm:$0xff]
        %v2508 = vld [vmem:[%s3 + $0x1d8] sm:$0xff]
        %v2509 = vld [vmem:[%s3 + $0x1e0] sm:$0xff]
        %v2510 = vld [vmem:[%s3 + $0x1e8] sm:$0xff]
        %v2511 = vld [vmem:[%s3 + $0x1f0] sm:$0xff]
        %v2512 = vld [vmem:[%s3 + $0x1f8] sm:$0xff]
        %v2513 = vld [vmem:[%s3 + $0x200] sm:$0xff]
        %v2514 = vld [vmem:[%s3 + $0x208] sm:$0xff]
        %v2515 = vld [vmem:[%s3 + $0x210] sm:$0xff]
        %v2516 = vld [vmem:[%s3 + $0x218] sm:$0xff]
        %v2517 = vld [vmem:[%s3 + $0x220] sm:$0xff]
        %v2518 = vld [vmem:[%s3 + $0x228] sm:$0xff]
        %v2519 = vld [vmem:[%s3 + $0x230] sm:$0xff]
        %v2520 = vld [vmem:[%s3 + $0x238] sm:$0xff]
        %v2521 = vld [vmem:[%s3 + $0x240] sm:$0xff]
        %v2522 = vld [vmem:[%s3 + $0x248] sm:$0xff]
        %v2523 = vld [vmem:[%s3 + $0x250] sm:$0xff]
        %v2524 = vld [vmem:[%s3 + $0x258] sm:$0xff]
        %v2525 = vld [vmem:[%s3 + $0x260] sm:$0xff]
        %v2526 = vld [vmem:[%s3 + $0x268] sm:$0xff]
        %v2527 = vld [vmem:[%s3 + $0x270] sm:$0xff]
        %v2528 = vld [vmem:[%s3 + $0x278] sm:$0xff]
        %v2529 = vld [vmem:[%s3 + $0x280] sm:$0xff]
        %v2530 = vld [vmem:[%s3 + $0x288] sm:$0xff]
        %v2531 = vld [vmem:[%s3 + $0x290] sm:$0xff]
        %v2532 = vld [vmem:[%s3 + $0x298] sm:$0xff]
        %v2533 = vld [vmem:[%s3 + $0x2a0] sm:$0xff]
        %v2534 = vld [vmem:[%s3 + $0x2a8] sm:$0xff]
        %v2535 = vld [vmem:[%s3 + $0x2b0] sm:$0xff]
        %v2536 = vld [vmem:[%s3 + $0x2b8] sm:$0xff]
        %v2537 = vld [vmem:[%s3 + $0x2c0] sm:$0xff]
        %v2538 = vld [vmem:[%s3 + $0x2c8] sm:$0xff]
        %v2539 = vld [vmem:[%s3 + $0x2d0] sm:$0xff]
        %v2540 = vld [vmem:[%s3 + $0x2d8] sm:$0xff]
        %v2541 = vld [vmem:[%s3 + $0x2e0] sm:$0xff]
        %v2542 = vld [vmem:[%s3 + $0x2e8] sm:$0xff]
        %v2543 = vld [vmem:[%s3 + $0x2f0] sm:$0xff]
        %v2544 = vld [vmem:[%s3 + $0x2f8] sm:$0xff]
        %v2545 = vld [vmem:[%s3 + $0x300] sm:$0xff]
        %v2546 = vld [vmem:[%s3 + $0x308] sm:$0xff]
        %v2547 = vld [vmem:[%s3 + $0x310] sm:$0xff]
        %v2548 = vld [vmem:[%s3 + $0x318] sm:$0xff]
        %v2549 = vld [vmem:[%s3 + $0x320] sm:$0xff]
        %v2550 = vld [vmem:[%s3 + $0x328] sm:$0xff]
        %v2551 = vld [vmem:[%s3 + $0x330] sm:$0xff]
        %v2552 = vld [vmem:[%s3 + $0x338] sm:$0xff]
        %v2553 = vld [vmem:[%s3 + $0x340] sm:$0xff]
        %v2554 = vld [vmem:[%s3 + $0x348] sm:$0xff]
        %v2555 = vld [vmem:[%s3 + $0x350] sm:$0xff]
        %v2556 = vld [vmem:[%s3 + $0x358] sm:$0xff]
        %v2557 = vld [vmem:[%s3 + $0x360] sm:$0xff]
        %v2558 = vld [vmem:[%s3 + $0x368] sm:$0xff]
        %v2559 = vld [vmem:[%s3 + $0x370] sm:$0xff]
        %v2560 = vld [vmem:[%s3 + $0x378] sm:$0xff]
        %v2561 = vld [vmem:[%s3 + $0x380] sm:$0xff]
        %v2562 = vld [vmem:[%s3 + $0x388] sm:$0xff]
        %v2563 = vld [vmem:[%s3 + $0x390] sm:$0xff]
        %v2564 = vld [vmem:[%s3 + $0x398] sm:$0xff]
        %v2565 = vld [vmem:[%s3 + $0x3a0] sm:$0xff]
        %v2566 = vld [vmem:[%s3 + $0x3a8] sm:$0xff]
        %v2567 = vld [vmem:[%s3 + $0x3b0] sm:$0xff]
        %v2568 = vld [vmem:[%s3 + $0x3b8] sm:$0xff]
        %v2569 = vld [vmem:[%s3 + $0x3c0] sm:$0xff]
        %v2570 = vld [vmem:[%s3 + $0x3c8] sm:$0xff]
        %v2571 = vld [vmem:[%s3 + $0x3d0] sm:$0xff]
        %v2572 = vld [vmem:[%s3 + $0x3d8] sm:$0xff]
        %v2573 = vld [vmem:[%s3 + $0x3e0] sm:$0xff]
        %v2574 = vld [vmem:[%s3 + $0x3e8] sm:$0xff]
        %v2575 = vld [vmem:[%s3 + $0x3f0] sm:$0xff]
        %v2576 = vld [vmem:[%s3 + $0x3f8] sm:$0xff]
        %v2577 = vld [vmem:[%s3 + $0x400] sm:$0xff]
        %v2578 = vld [vmem:[%s3 + $0x408] sm:$0xff]
        %v2579 = vld [vmem:[%s3 + $0x410] sm:$0xff]
        %v2580 = vld [vmem:[%s3 + $0x418] sm:$0xff]
        %v2581 = vld [vmem:[%s3 + $0x420] sm:$0xff]
        %v2582 = vld [vmem:[%s3 + $0x428] sm:$0xff]
        %v2583 = vld [vmem:[%s3 + $0x430] sm:$0xff]
        %v2584 = vld [vmem:[%s3 + $0x438] sm:$0xff]
        %v2585 = vld [vmem:[%s3 + $0x440] sm:$0xff]
        %v2586 = vld [vmem:[%s3 + $0x448] sm:$0xff]
        %v2587 = vld [vmem:[%s3 + $0x450] sm:$0xff]
        %v2588 = vld [vmem:[%s3 + $0x458] sm:$0xff]
        %v2589 = vld [vmem:[%s3 + $0x460] sm:$0xff]
        %v2590 = vld [vmem:[%s3 + $0x468] sm:$0xff]
        %v2591 = vld [vmem:[%s3 + $0x470] sm:$0xff]
        %v2592 = vld [vmem:[%s3 + $0x478] sm:$0xff]
        %v2593 = vld [vmem:[%s3 + $0x480] sm:$0xff]
        %v2594 = vld [vmem:[%s3 + $0x488] sm:$0xff]
        %v2595 = vld [vmem:[%s3 + $0x490] sm:$0xff]
        %v2596 = vld [vmem:[%s3 + $0x498] sm:$0xff]
        %v2597 = vld [vmem:[%s3 + $0x4a0] sm:$0xff]
        %v2598 = vld [vmem:[%s3 + $0x4a8] sm:$0xff]
        %v2599 = vld [vmem:[%s3 + $0x4b0] sm:$0xff]
        %v2600 = vld [vmem:[%s3 + $0x4b8] sm:$0xff]
        %v2601 = vld [vmem:[%s3 + $0x4c0] sm:$0xff]
        %v2602 = vld [vmem:[%s3 + $0x4c8] sm:$0xff]
        %v2603 = vld [vmem:[%s3 + $0x4d0] sm:$0xff]
        %v2604 = vld [vmem:[%s3 + $0x4d8] sm:$0xff]
        %v2605 = vld [vmem:[%s3 + $0x4e0] sm:$0xff]
        %v2606 = vld [vmem:[%s3 + $0x4e8] sm:$0xff]
        %v2607 = vld [vmem:[%s3 + $0x4f0] sm:$0xff]
        %v2608 = vld [vmem:[%s3 + $0x4f8] sm:$0xff]
        %v2609 = vld [vmem:[%s3 + $0x500] sm:$0xff]
        %v2610 = vld [vmem:[%s3 + $0x508] sm:$0xff]
        %v2611 = vld [vmem:[%s3 + $0x510] sm:$0xff]
        %v2612 = vld [vmem:[%s3 + $0x518] sm:$0xff]
        %v2613 = vld [vmem:[%s3 + $0x520] sm:$0xff]
        %v2614 = vld [vmem:[%s3 + $0x528] sm:$0xff]
        %v2615 = vld [vmem:[%s3 + $0x530] sm:$0xff]
        %v2616 = vld [vmem:[%s3 + $0x538] sm:$0xff]
        %v2617 = vld [vmem:[%s3 + $0x540] sm:$0xff]
        %v2618 = vld [vmem:[%s3 + $0x548] sm:$0xff]
        %v2619 = vld [vmem:[%s3 + $0x550] sm:$0xff]
        %v2620 = vld [vmem:[%s3 + $0x558] sm:$0xff]
        %v2621 = vld [vmem:[%s3 + $0x560] sm:$0xff]
        %v2622 = vld [vmem:[%s3 + $0x568] sm:$0xff]
        %v2623 = vld [vmem:[%s3 + $0x570] sm:$0xff]
        %v2624 = vld [vmem:[%s3 + $0x578] sm:$0xff]
        %v2625 = vld [vmem:[%s3 + $0x580] sm:$0xff]
        %v2626 = vld [vmem:[%s3 + $0x588] sm:$0xff]
        %v2627 = vld [vmem:[%s3 + $0x590] sm:$0xff]
        %v2628 = vld [vmem:[%s3 + $0x598] sm:$0xff]
        %v2629 = vld [vmem:[%s3 + $0x5a0] sm:$0xff]
        %v2630 = vld [vmem:[%s3 + $0x5a8] sm:$0xff]
        %v2631 = vld [vmem:[%s3 + $0x5b0] sm:$0xff]
        %v2632 = vld [vmem:[%s3 + $0x5b8] sm:$0xff]
        %v2633 = vld [vmem:[%s3 + $0x5c0] sm:$0xff]
        %v2634 = vld [vmem:[%s3 + $0x5c8] sm:$0xff]
        %v2635 = vld [vmem:[%s3 + $0x5d0] sm:$0xff]
        %v2636 = vld [vmem:[%s3 + $0x5d8] sm:$0xff]
        %v2637 = vld [vmem:[%s3 + $0x5e0] sm:$0xff]
        %v2638 = vld [vmem:[%s3 + $0x5e8] sm:$0xff]
        %v2639 = vld [vmem:[%s3 + $0x5f0] sm:$0xff]
        %v2640 = vld [vmem:[%s3 + $0x5f8] sm:$0xff]
        %v2641 = vld [vmem:[%s3 + $0x600] sm:$0xff]
        %v2642 = vld [vmem:[%s3 + $0x608] sm:$0xff]
        %v2643 = vld [vmem:[%s3 + $0x610] sm:$0xff]
        %v2644 = vld [vmem:[%s3 + $0x618] sm:$0xff]
        %v2645 = vld [vmem:[%s3 + $0x620] sm:$0xff]
        %v2646 = vld [vmem:[%s3 + $0x628] sm:$0xff]
        %v2647 = vld [vmem:[%s3 + $0x630] sm:$0xff]
        %v2648 = vld [vmem:[%s3 + $0x638] sm:$0xff]
        %v2649 = vld [vmem:[%s3 + $0x640] sm:$0xff]
        %v2650 = vld [vmem:[%s3 + $0x648] sm:$0xff]
        %v2651 = vld [vmem:[%s3 + $0x650] sm:$0xff]
        %v2652 = vld [vmem:[%s3 + $0x658] sm:$0xff]
        %v2653 = vld [vmem:[%s3 + $0x660] sm:$0xff]
        %v2654 = vld [vmem:[%s3 + $0x668] sm:$0xff]
        %v2655 = vld [vmem:[%s3 + $0x670] sm:$0xff]
        %v2656 = vld [vmem:[%s3 + $0x678] sm:$0xff]
        %v2657 = vld [vmem:[%s3 + $0x680] sm:$0xff]
        %v2658 = vld [vmem:[%s3 + $0x688] sm:$0xff]
        %v2659 = vld [vmem:[%s3 + $0x690] sm:$0xff]
        %v2660 = vld [vmem:[%s3 + $0x698] sm:$0xff]
        %v2661 = vld [vmem:[%s3 + $0x6a0] sm:$0xff]
        %v2662 = vld [vmem:[%s3 + $0x6a8] sm:$0xff]
        %v2663 = vld [vmem:[%s3 + $0x6b0] sm:$0xff]
        %v2664 = vld [vmem:[%s3 + $0x6b8] sm:$0xff]
        %v2665 = vld [vmem:[%s3 + $0x6c0] sm:$0xff]
        %v2666 = vld [vmem:[%s3 + $0x6c8] sm:$0xff]
        %v2667 = vld [vmem:[%s3 + $0x6d0] sm:$0xff]
        %v2668 = vld [vmem:[%s3 + $0x6d8] sm:$0xff]
        %v2669 = vld [vmem:[%s3 + $0x6e0] sm:$0xff]
        %v2670 = vld [vmem:[%s3 + $0x6e8] sm:$0xff]
        %v2671 = vld [vmem:[%s3 + $0x6f0] sm:$0xff]
        %v2672 = vld [vmem:[%s3 + $0x6f8] sm:$0xff]
        %v2673 = vld [vmem:[%s3 + $0x700] sm:$0xff]
        %v2674 = vld [vmem:[%s3 + $0x708] sm:$0xff]
        %v2675 = vld [vmem:[%s3 + $0x710] sm:$0xff]
        %v2676 = vld [vmem:[%s3 + $0x718] sm:$0xff]
        %v2677 = vld [vmem:[%s3 + $0x720] sm:$0xff]
        %v2678 = vld [vmem:[%s3 + $0x728] sm:$0xff]
        %v2679 = vld [vmem:[%s3 + $0x730] sm:$0xff]
        %v2680 = vld [vmem:[%s3 + $0x738] sm:$0xff]
        %v2681 = vld [vmem:[%s3 + $0x740] sm:$0xff]
        %v2682 = vld [vmem:[%s3 + $0x748] sm:$0xff]
        %v2683 = vld [vmem:[%s3 + $0x750] sm:$0xff]
        %v2684 = vld [vmem:[%s3 + $0x758] sm:$0xff]
        %v2685 = vld [vmem:[%s3 + $0x760] sm:$0xff]
        %v2686 = vld [vmem:[%s3 + $0x768] sm:$0xff]
        %v2687 = vld [vmem:[%s3 + $0x770] sm:$0xff]
        %v2688 = vld [vmem:[%s3 + $0x778] sm:$0xff]
        %v2689 = vld [vmem:[%s3 + $0x780] sm:$0xff]
        %v2690 = vld [vmem:[%s3 + $0x788] sm:$0xff]
        %v2691 = vld [vmem:[%s3 + $0x790] sm:$0xff]
        %v2692 = vld [vmem:[%s3 + $0x798] sm:$0xff]
        %v2693 = vld [vmem:[%s3 + $0x7a0] sm:$0xff]
        %v2694 = vld [vmem:[%s3 + $0x7a8] sm:$0xff]
        %v2695 = vld [vmem:[%s3 + $0x7b0] sm:$0xff]
        %v2696 = vld [vmem:[%s3 + $0x7b8] sm:$0xff]
        %v2697 = vld [vmem:[%s3 + $0x7c0] sm:$0xff]
        %v2698 = vld [vmem:[%s3 + $0x7c8] sm:$0xff]
        %v2699 = vld [vmem:[%s3 + $0x7d0] sm:$0xff]
        %v2700 = vld [vmem:[%s3 + $0x7d8] sm:$0xff]
        %v2701 = vld [vmem:[%s3 + $0x7e0] sm:$0xff]
        %v2702 = vld [vmem:[%s3 + $0x7e8] sm:$0xff]
        %v2703 = vld [vmem:[%s3 + $0x7f0] sm:$0xff]
        %v2704 = vld [vmem:[%s3 + $0x7f8] sm:$0xff]
        %v2705 = vld [vmem:[%s3 + $0x800] sm:$0xff]
        %v2706 = vld [vmem:[%s3 + $0x808] sm:$0xff]
        %v2707 = vld [vmem:[%s3 + $0x810] sm:$0xff]
        %v2708 = vld [vmem:[%s3 + $0x818] sm:$0xff]
        %v2709 = vld [vmem:[%s3 + $0x820] sm:$0xff]
        %v2710 = vld [vmem:[%s3 + $0x828] sm:$0xff]
        %v2711 = vld [vmem:[%s3 + $0x830] sm:$0xff]
        %v2712 = vld [vmem:[%s3 + $0x838] sm:$0xff]
        %v2713 = vld [vmem:[%s3 + $0x840] sm:$0xff]
        %v2714 = vld [vmem:[%s3 + $0x848] sm:$0xff]
        %v2715 = vld [vmem:[%s3 + $0x850] sm:$0xff]
        %v2716 = vld [vmem:[%s3 + $0x858] sm:$0xff]
        %v2717 = vld [vmem:[%s3 + $0x860] sm:$0xff]
        %v2718 = vld [vmem:[%s3 + $0x868] sm:$0xff]
        %v2719 = vld [vmem:[%s3 + $0x870] sm:$0xff]
        %v2720 = vld [vmem:[%s3 + $0x878] sm:$0xff]
        %v2721 = vld [vmem:[%s3 + $0x880] sm:$0xff]
        %v2722 = vld [vmem:[%s3 + $0x888] sm:$0xff]
        %v2723 = vld [vmem:[%s3 + $0x890] sm:$0xff]
        %v2724 = vld [vmem:[%s3 + $0x898] sm:$0xff]
        %v2725 = vld [vmem:[%s3 + $0x8a0] sm:$0xff]
        %v2726 = vld [vmem:[%s3 + $0x8a8] sm:$0xff]
        %v2727 = vld [vmem:[%s3 + $0x8b0] sm:$0xff]
        %v2728 = vld [vmem:[%s3 + $0x8b8] sm:$0xff]
        %v2729 = vld [vmem:[%s3 + $0x8c0] sm:$0xff]
        %v2730 = vld [vmem:[%s3 + $0x8c8] sm:$0xff]
        %v2731 = vld [vmem:[%s3 + $0x8d0] sm:$0xff]
        %v2732 = vld [vmem:[%s3 + $0x8d8] sm:$0xff]
        %v2733 = vld [vmem:[%s3 + $0x8e0] sm:$0xff]
        %v2734 = vld [vmem:[%s3 + $0x8e8] sm:$0xff]
        %v2735 = vld [vmem:[%s3 + $0x8f0] sm:$0xff]
        %v2736 = vld [vmem:[%s3 + $0x8f8] sm:$0xff]
        %v2737 = vld [vmem:[%s3 + $0x900] sm:$0xff]
        %v2738 = vld [vmem:[%s3 + $0x908] sm:$0xff]
        %v2739 = vld [vmem:[%s3 + $0x910] sm:$0xff]
        %v2740 = vld [vmem:[%s3 + $0x918] sm:$0xff]
        %v2741 = vld [vmem:[%s3 + $0x920] sm:$0xff]
        %v2742 = vld [vmem:[%s3 + $0x928] sm:$0xff]
        %v2743 = vld [vmem:[%s3 + $0x930] sm:$0xff]
        %v2744 = vld [vmem:[%s3 + $0x938] sm:$0xff]
        %v2745 = vld [vmem:[%s3 + $0x940] sm:$0xff]
        %v2746 = vld [vmem:[%s3 + $0x948] sm:$0xff]
        %v2747 = vld [vmem:[%s3 + $0x950] sm:$0xff]
        %v2748 = vld [vmem:[%s3 + $0x958] sm:$0xff]
        %v2749 = vld [vmem:[%s3 + $0x960] sm:$0xff]
        %v2750 = vld [vmem:[%s3 + $0x968] sm:$0xff]
        %v2751 = vld [vmem:[%s3 + $0x970] sm:$0xff]
        %v2752 = vld [vmem:[%s3 + $0x978] sm:$0xff]
        %v2753 = vld [vmem:[%s3 + $0x980] sm:$0xff]
        %v2754 = vld [vmem:[%s3 + $0x988] sm:$0xff]
        %v2755 = vld [vmem:[%s3 + $0x990] sm:$0xff]
        %v2756 = vld [vmem:[%s3 + $0x998] sm:$0xff]
        %v2757 = vld [vmem:[%s3 + $0x9a0] sm:$0xff]
        %v2758 = vld [vmem:[%s3 + $0x9a8] sm:$0xff]
        %v2759 = vld [vmem:[%s3 + $0x9b0] sm:$0xff]
        %v2760 = vld [vmem:[%s3 + $0x9b8] sm:$0xff]
        %v2761 = vld [vmem:[%s3 + $0x9c0] sm:$0xff]
        %v2762 = vld [vmem:[%s3 + $0x9c8] sm:$0xff]
        %v2763 = vld [vmem:[%s3 + $0x9d0] sm:$0xff]
        %v2764 = vld [vmem:[%s3 + $0x9d8] sm:$0xff]
        %v2765 = vld [vmem:[%s3 + $0x9e0] sm:$0xff]
        %v2766 = vld [vmem:[%s3 + $0x9e8] sm:$0xff]
        %v2767 = vld [vmem:[%s3 + $0x9f0] sm:$0xff]
        %v2768 = vld [vmem:[%s3 + $0x9f8] sm:$0xff]
        %v2769 = vld [vmem:[%s3 + $0xa00] sm:$0xff]
        %v2770 = vld [vmem:[%s3 + $0xa08] sm:$0xff]
        %v2771 = vld [vmem:[%s3 + $0xa10] sm:$0xff]
        %v2772 = vld [vmem:[%s3 + $0xa18] sm:$0xff]
        %v2773 = vld [vmem:[%s3 + $0xa20] sm:$0xff]
        %v2774 = vld [vmem:[%s3 + $0xa28] sm:$0xff]
        %v2775 = vld [vmem:[%s3 + $0xa30] sm:$0xff]
        %v2776 = vld [vmem:[%s3 + $0xa38] sm:$0xff]
        %v2777 = vld [vmem:[%s3 + $0xa40] sm:$0xff]
        %v2778 = vld [vmem:[%s3 + $0xa48] sm:$0xff]
        %v2779 = vld [vmem:[%s3 + $0xa50] sm:$0xff]
        %v2780 = vld [vmem:[%s3 + $0xa58] sm:$0xff]
        %v2781 = vld [vmem:[%s3 + $0xa60] sm:$0xff]
        %v2782 = vld [vmem:[%s3 + $0xa68] sm:$0xff]
        %v2783 = vld [vmem:[%s3 + $0xa70] sm:$0xff]
        %v2784 = vld [vmem:[%s3 + $0xa78] sm:$0xff]
        %v2785 = vld [vmem:[%s3 + $0xa80] sm:$0xff]
        %v2786 = vld [vmem:[%s3 + $0xa88] sm:$0xff]
        %v2787 = vld [vmem:[%s3 + $0xa90] sm:$0xff]
        %v2788 = vld [vmem:[%s3 + $0xa98] sm:$0xff]
        %v2789 = vld [vmem:[%s3 + $0xaa0] sm:$0xff]
        %v2790 = vld [vmem:[%s3 + $0xaa8] sm:$0xff]
        %v2791 = vld [vmem:[%s3 + $0xab0] sm:$0xff]
        %v2792 = vld [vmem:[%s3 + $0xab8] sm:$0xff]
        %v2793 = vld [vmem:[%s3 + $0xac0] sm:$0xff]
        %v2794 = vld [vmem:[%s3 + $0xac8] sm:$0xff]
        %v2795 = vld [vmem:[%s3 + $0xad0] sm:$0xff]
        %v2796 = vld [vmem:[%s3 + $0xad8] sm:$0xff]
        %v2797 = vld [vmem:[%s3 + $0xae0] sm:$0xff]
        %v2798 = vld [vmem:[%s3 + $0xae8] sm:$0xff]
        %v2799 = vld [vmem:[%s3 + $0xaf0] sm:$0xff]
        %v2800 = vld [vmem:[%s3 + $0xaf8] sm:$0xff]
        %v2801 = vld [vmem:[%s3 + $0xb00] sm:$0xff]
        %v2802 = vld [vmem:[%s3 + $0xb08] sm:$0xff]
        %v2803 = vld [vmem:[%s3 + $0xb10] sm:$0xff]
        %v2804 = vld [vmem:[%s3 + $0xb18] sm:$0xff]
        %v2805 = vld [vmem:[%s3 + $0xb20] sm:$0xff]
        %v2806 = vld [vmem:[%s3 + $0xb28] sm:$0xff]
        %v2807 = vld [vmem:[%s3 + $0xb30] sm:$0xff]
        %v2808 = vld [vmem:[%s3 + $0xb38] sm:$0xff]
        %v2809 = vld [vmem:[%s3 + $0xb40] sm:$0xff]
        %v2810 = vld [vmem:[%s3 + $0xb48] sm:$0xff]
        %v2811 = vld [vmem:[%s3 + $0xb50] sm:$0xff]
        %v2812 = vld [vmem:[%s3 + $0xb58] sm:$0xff]
        %v2813 = vld [vmem:[%s3 + $0xb60] sm:$0xff]
        %v2814 = vld [vmem:[%s3 + $0xb68] sm:$0xff]
        %v2815 = vld [vmem:[%s3 + $0xb70] sm:$0xff]
        %v2816 = vld [vmem:[%s3 + $0xb78] sm:$0xff]
        %v2817 = vld [vmem:[%s3 + $0xb80] sm:$0xff]
        %v2818 = vld [vmem:[%s3 + $0xb88] sm:$0xff]
        %v2819 = vld [vmem:[%s3 + $0xb90] sm:$0xff]
        %v2820 = vld [vmem:[%s3 + $0xb98] sm:$0xff]
        %v2821 = vld [vmem:[%s3 + $0xba0] sm:$0xff]
        %v2822 = vld [vmem:[%s3 + $0xba8] sm:$0xff]
        %v2823 = vld [vmem:[%s3 + $0xbb0] sm:$0xff]
        %v2824 = vld [vmem:[%s3 + $0xbb8] sm:$0xff]
        %v2825 = vld [vmem:[%s3 + $0xbc0] sm:$0xff]
        %v2826 = vld [vmem:[%s3 + $0xbc8] sm:$0xff]
        %v2827 = vld [vmem:[%s3 + $0xbd0] sm:$0xff]
        %v2828 = vld [vmem:[%s3 + $0xbd8] sm:$0xff]
        %v2829 = vld [vmem:[%s3 + $0xbe0] sm:$0xff]
        %v2830 = vld [vmem:[%s3 + $0xbe8] sm:$0xff]
        %v2831 = vld [vmem:[%s3 + $0xbf0] sm:$0xff]
        %v2832 = vld [vmem:[%s3 + $0xbf8] sm:$0xff]
        %v2833 = vld [vmem:[%s3 + $0xc00] sm:$0xff]
        %v2834 = vld [vmem:[%s3 + $0xc08] sm:$0xff]
        %v2835 = vld [vmem:[%s3 + $0xc10] sm:$0xff]
        %v2836 = vld [vmem:[%s3 + $0xc18] sm:$0xff]
        %v2837 = vld [vmem:[%s3 + $0xc20] sm:$0xff]
        %v2838 = vld [vmem:[%s3 + $0xc28] sm:$0xff]
        %v2839 = vld [vmem:[%s3 + $0xc30] sm:$0xff]
        %v2840 = vld [vmem:[%s3 + $0xc38] sm:$0xff]
        %v2841 = vld [vmem:[%s3 + $0xc40] sm:$0xff]
        %v2842 = vld [vmem:[%s3 + $0xc48] sm:$0xff]
        %v2843 = vld [vmem:[%s3 + $0xc50] sm:$0xff]
        %v2844 = vld [vmem:[%s3 + $0xc58] sm:$0xff]
        %v2845 = vld [vmem:[%s3 + $0xc60] sm:$0xff]
        %v2846 = vld [vmem:[%s3 + $0xc68] sm:$0xff]
        %v2847 = vld [vmem:[%s3 + $0xc70] sm:$0xff]
        %v2848 = vld [vmem:[%s3 + $0xc78] sm:$0xff]
        %v2849 = vld [vmem:[%s3 + $0xc80] sm:$0xff]
        %v2850 = vld [vmem:[%s3 + $0xc88] sm:$0xff]
        %v2851 = vld [vmem:[%s3 + $0xc90] sm:$0xff]
        %v2852 = vld [vmem:[%s3 + $0xc98] sm:$0xff]
        %v2853 = vld [vmem:[%s3 + $0xca0] sm:$0xff]
        %v2854 = vld [vmem:[%s3 + $0xca8] sm:$0xff]
        %v2855 = vld [vmem:[%s3 + $0xcb0] sm:$0xff]
        %v2856 = vld [vmem:[%s3 + $0xcb8] sm:$0xff]
        %v2857 = vld [vmem:[%s3 + $0xcc0] sm:$0xff]
        %v2858 = vld [vmem:[%s3 + $0xcc8] sm:$0xff]
        %v2859 = vld [vmem:[%s3 + $0xcd0] sm:$0xff]
        %v2860 = vld [vmem:[%s3 + $0xcd8] sm:$0xff]
        %v2861 = vld [vmem:[%s3 + $0xce0] sm:$0xff]
        %v2862 = vld [vmem:[%s3 + $0xce8] sm:$0xff]
        %v2863 = vld [vmem:[%s3 + $0xcf0] sm:$0xff]
        %v2864 = vld [vmem:[%s3 + $0xcf8] sm:$0xff]
        %v2865 = vld [vmem:[%s3 + $0xd00] sm:$0xff]
        %v2866 = vld [vmem:[%s3 + $0xd08] sm:$0xff]
        %v2867 = vld [vmem:[%s3 + $0xd10] sm:$0xff]
        %v2868 = vld [vmem:[%s3 + $0xd18] sm:$0xff]
        %v2869 = vld [vmem:[%s3 + $0xd20] sm:$0xff]
        %v2870 = vld [vmem:[%s3 + $0xd28] sm:$0xff]
        %v2871 = vld [vmem:[%s3 + $0xd30] sm:$0xff]
        %v2872 = vld [vmem:[%s3 + $0xd38] sm:$0xff]
        %v2873 = vld [vmem:[%s3 + $0xd40] sm:$0xff]
        %v2874 = vld [vmem:[%s3 + $0xd48] sm:$0xff]
        %v2875 = vld [vmem:[%s3 + $0xd50] sm:$0xff]
        %v2876 = vld [vmem:[%s3 + $0xd58] sm:$0xff]
        %v2877 = vld [vmem:[%s3 + $0xd60] sm:$0xff]
        %v2878 = vld [vmem:[%s3 + $0xd68] sm:$0xff]
        %v2879 = vld [vmem:[%s3 + $0xd70] sm:$0xff]
        %v2880 = vld [vmem:[%s3 + $0xd78] sm:$0xff]
        %v2881 = vld [vmem:[%s3 + $0xd80] sm:$0xf]
        %v2882 = vld [vmem:[%s3 + $0xd88] sm:$0xf]
        %v2883 = vld [vmem:[%s3 + $0xd90] sm:$0xf]
        %v2885 = vsel %vm1410, %v2447, 0
        %vm2887 = vcmask 1043456
        %v2889 = vsel %vm2887, %v2881, 0
        %v2892 = vsel %vm2887, %v2882, 0
        %v2895 = vsel %vm2887, %v2883, 0
        %2897 = vmatprep.subr.mxu0 %v2450
        %2898 = vmatpush1.msra.mxu0 %v2449
        %2899 = vmatprep.subr.mxu0 %v2453
        %2900 = vmatpush1.msra.mxu0 %v2452
        %2901 = vmatprep.subr.mxu0 %v2456
        %2902 = vmatpush1.msra.mxu0 %v2455
        %2903 = vmatprep.subr.mxu0 %v2459
        %2904 = vmatpush1.msra.mxu0 %v2458
        %2905 = vmatprep.subr.mxu0 %v2462
        %2906 = vmatpush1.msra.mxu0 %v2461
        %2907 = vmatprep.subr.mxu0 %v2465
        %2908 = vmatpush1.msra.mxu0 %v2464
        %2909 = vmatprep.subr.mxu0 %v2468
        %2910 = vmatpush1.msra.mxu0 %v2467
        %2911 = vmatprep.subr.mxu0 %v2471
        %2912 = vmatpush1.msra.mxu0 %v2470
        %2913 = vmatprep.subr.mxu0 %v2474
        %2914 = vmatpush1.msra.mxu0 %v2473
        %2915 = vmatprep.subr.mxu0 %v2477
        %2916 = vmatpush1.msra.mxu0 %v2476
        %2917 = vmatprep.subr.mxu0 %v2480
        %2918 = vmatpush1.msra.mxu0 %v2479
        %2919 = vmatprep.subr.mxu0 %v2483
        %2920 = vmatpush1.msra.mxu0 %v2482
        %2921 = vmatprep.subr.mxu0 %v2486
        %2922 = vmatpush1.msra.mxu0 %v2485
        %2923 = vmatprep.subr.mxu0 %v2489
        %2924 = vmatpush1.msra.mxu0 %v2488
        %2925 = vmatprep.subr.mxu0 %v2492
        %2926 = vmatpush1.msra.mxu0 %v2491
        %2927 = vmatprep.subr.mxu0 %v2495
        %2928 = vmatpush1.msra.mxu0 %v2494
        %2929 = vmatprep.subr.mxu0 %v2498
        %2930 = vmatpush1.msra.mxu0 %v2497
        %2931 = vmatprep.subr.mxu0 %v2501
        %2932 = vmatpush1.msra.mxu0 %v2500
        %2933 = vmatprep.subr.mxu0 %v2504
        %2934 = vmatpush1.msra.mxu0 %v2503
        %2935 = vmatprep.subr.mxu0 %v2507
        %2936 = vmatpush1.msra.mxu0 %v2506
        %2937 = vmatprep.subr.mxu0 %v2510
        %2938 = vmatpush1.msra.mxu0 %v2509
        %2939 = vmatprep.subr.mxu0 %v2513
        %2940 = vmatpush1.msra.mxu0 %v2512
        %2941 = vmatprep.subr.mxu0 %v2516
        %2942 = vmatpush1.msra.mxu0 %v2515
        %2943 = vmatprep.subr.mxu0 %v2519
        %2944 = vmatpush1.msra.mxu0 %v2518
        %2945 = vmatprep.subr.mxu0 %v2522
        %2946 = vmatpush1.msra.mxu0 %v2521
        %2947 = vmatprep.subr.mxu0 %v2525
        %2948 = vmatpush1.msra.mxu0 %v2524
        %2949 = vmatprep.subr.mxu0 %v2528
        %2950 = vmatpush1.msra.mxu0 %v2527
        %2951 = vmatprep.subr.mxu0 %v2531
        %2952 = vmatpush1.msra.mxu0 %v2530
        %2953 = vmatprep.subr.mxu0 %v2534
        %2954 = vmatpush1.msra.mxu0 %v2533
        %2955 = vmatprep.subr.mxu0 %v2537
        %2956 = vmatpush1.msra.mxu0 %v2536
        %2957 = vmatprep.subr.mxu0 %v2540
        %2958 = vmatpush1.msra.mxu0 %v2539
        %2959 = vmatprep.subr.mxu0 %v2543
        %2960 = vmatpush1.msra.mxu0 %v2542
        %2961 = vmatprep.mubr.f32.mxu0 %v2163
        %2962 = vmatmul.mubr.f32.gmra.mrb[0].mxu0 %v2161
        %v2963 = vpop.f32.mrb[0].mxu0
        %v2964 = vadd.f32 0.0, %v2963
        %v2965 = vpop.f32.mrb[0].mxu0
        %v2966 = vadd.f32 0.0, %v2965
        %2967 = vdwg.mxu0
        %2968 = vmatprep.subr.mxu0 %v2546
        %2969 = vmatpush1.msra.mxu0 %v2545
        %2970 = vmatprep.subr.mxu0 %v2549
        %2971 = vmatpush1.msra.mxu0 %v2548
        %2972 = vmatprep.subr.mxu0 %v2552
        %2973 = vmatpush1.msra.mxu0 %v2551
        %2974 = vmatprep.subr.mxu0 %v2555
        %2975 = vmatpush1.msra.mxu0 %v2554
        %2976 = vmatprep.subr.mxu0 %v2558
        %2977 = vmatpush1.msra.mxu0 %v2557
        %2978 = vmatprep.subr.mxu0 %v2561
        %2979 = vmatpush1.msra.mxu0 %v2560
        %2980 = vmatprep.subr.mxu0 %v2564
        %2981 = vmatpush1.msra.mxu0 %v2563
        %2982 = vmatprep.subr.mxu0 %v2567
        %2983 = vmatpush1.msra.mxu0 %v2566
        %2984 = vmatprep.subr.mxu0 %v2570
        %2985 = vmatpush1.msra.mxu0 %v2569
        %2986 = vmatprep.subr.mxu0 %v2573
        %2987 = vmatpush1.msra.mxu0 %v2572
        %2988 = vmatprep.subr.mxu0 %v2576
        %2989 = vmatpush1.msra.mxu0 %v2575
        %2990 = vmatprep.subr.mxu0 %v2579
        %2991 = vmatpush1.msra.mxu0 %v2578
        %2992 = vmatprep.subr.mxu0 %v2582
        %2993 = vmatpush1.msra.mxu0 %v2581
        %2994 = vmatprep.subr.mxu0 %v2585
        %2995 = vmatpush1.msra.mxu0 %v2584
        %2996 = vmatprep.subr.mxu0 %v2588
        %2997 = vmatpush1.msra.mxu0 %v2587
        %2998 = vmatprep.subr.mxu0 %v2591
        %2999 = vmatpush1.msra.mxu0 %v2590
        %3000 = vmatprep.subr.mxu0 %v2594
        %3001 = vmatpush1.msra.mxu0 %v2593
        %3002 = vmatprep.subr.mxu0 %v2597
        %3003 = vmatpush1.msra.mxu0 %v2596
        %3004 = vmatprep.subr.mxu0 %v2600
        %3005 = vmatpush1.msra.mxu0 %v2599
        %3006 = vmatprep.subr.mxu0 %v2603
        %3007 = vmatpush1.msra.mxu0 %v2602
        %3008 = vmatprep.subr.mxu0 %v2606
        %3009 = vmatpush1.msra.mxu0 %v2605
        %3010 = vmatprep.subr.mxu0 %v2609
        %3011 = vmatpush1.msra.mxu0 %v2608
        %3012 = vmatprep.subr.mxu0 %v2612
        %3013 = vmatpush1.msra.mxu0 %v2611
        %3014 = vmatprep.subr.mxu0 %v2615
        %3015 = vmatpush1.msra.mxu0 %v2614
        %3016 = vmatprep.subr.mxu0 %v2618
        %3017 = vmatpush1.msra.mxu0 %v2617
        %3018 = vmatprep.subr.mxu0 %v2621
        %3019 = vmatpush1.msra.mxu0 %v2620
        %3020 = vmatprep.subr.mxu0 %v2624
        %3021 = vmatpush1.msra.mxu0 %v2623
        %3022 = vmatprep.subr.mxu0 %v2627
        %3023 = vmatpush1.msra.mxu0 %v2626
        %3024 = vmatprep.subr.mxu0 %v2630
        %3025 = vmatpush1.msra.mxu0 %v2629
        %3026 = vmatprep.subr.mxu0 %v2633
        %3027 = vmatpush1.msra.mxu0 %v2632
        %3028 = vmatprep.subr.mxu0 %v2636
        %3029 = vmatpush1.msra.mxu0 %v2635
        %3030 = vmatprep.subr.mxu0 %v2639
        %3031 = vmatpush1.msra.mxu0 %v2638
        %3032 = vmatprep.mubr.f32.mxu0 %v2234
        %3033 = vmatmul.mubr.f32.gmra.mrb[0].mxu0 %v2232
        %v3034 = vpop.f32.mrb[0].mxu0
        %v3035 = vadd.f32 %v2964, %v3034
        %v3036 = vpop.f32.mrb[0].mxu0
        %v3037 = vadd.f32 %v2966, %v3036
        %3038 = vdwg.mxu0
        %3039 = vmatprep.subr.mxu0 %v2642
        %3040 = vmatpush1.msra.mxu0 %v2641
        %3041 = vmatprep.subr.mxu0 %v2645
        %3042 = vmatpush1.msra.mxu0 %v2644
        %3043 = vmatprep.subr.mxu0 %v2648
        %3044 = vmatpush1.msra.mxu0 %v2647
        %3045 = vmatprep.subr.mxu0 %v2651
        %3046 = vmatpush1.msra.mxu0 %v2650
        %3047 = vmatprep.subr.mxu0 %v2654
        %3048 = vmatpush1.msra.mxu0 %v2653
        %3049 = vmatprep.subr.mxu0 %v2657
        %3050 = vmatpush1.msra.mxu0 %v2656
        %3051 = vmatprep.subr.mxu0 %v2660
        %3052 = vmatpush1.msra.mxu0 %v2659
        %3053 = vmatprep.subr.mxu0 %v2663
        %3054 = vmatpush1.msra.mxu0 %v2662
        %3055 = vmatprep.subr.mxu0 %v2666
        %3056 = vmatpush1.msra.mxu0 %v2665
        %3057 = vmatprep.subr.mxu0 %v2669
        %3058 = vmatpush1.msra.mxu0 %v2668
        %3059 = vmatprep.subr.mxu0 %v2672
        %3060 = vmatpush1.msra.mxu0 %v2671
        %3061 = vmatprep.subr.mxu0 %v2675
        %3062 = vmatpush1.msra.mxu0 %v2674
        %3063 = vmatprep.subr.mxu0 %v2678
        %3064 = vmatpush1.msra.mxu0 %v2677
        %3065 = vmatprep.subr.mxu0 %v2681
        %3066 = vmatpush1.msra.mxu0 %v2680
        %3067 = vmatprep.subr.mxu0 %v2684
        %3068 = vmatpush1.msra.mxu0 %v2683
        %3069 = vmatprep.subr.mxu0 %v2687
        %3070 = vmatpush1.msra.mxu0 %v2686
        %3071 = vmatprep.subr.mxu0 %v2690
        %3072 = vmatpush1.msra.mxu0 %v2689
        %3073 = vmatprep.subr.mxu0 %v2693
        %3074 = vmatpush1.msra.mxu0 %v2692
        %3075 = vmatprep.subr.mxu0 %v2696
        %3076 = vmatpush1.msra.mxu0 %v2695
        %3077 = vmatprep.subr.mxu0 %v2699
        %3078 = vmatpush1.msra.mxu0 %v2698
        %3079 = vmatprep.subr.mxu0 %v2702
        %3080 = vmatpush1.msra.mxu0 %v2701
        %3081 = vmatprep.subr.mxu0 %v2705
        %3082 = vmatpush1.msra.mxu0 %v2704
        %3083 = vmatprep.subr.mxu0 %v2708
        %3084 = vmatpush1.msra.mxu0 %v2707
        %3085 = vmatprep.subr.mxu0 %v2711
        %3086 = vmatpush1.msra.mxu0 %v2710
        %3087 = vmatprep.subr.mxu0 %v2714
        %3088 = vmatpush1.msra.mxu0 %v2713
        %3089 = vmatprep.subr.mxu0 %v2717
        %3090 = vmatpush1.msra.mxu0 %v2716
        %3091 = vmatprep.subr.mxu0 %v2720
        %3092 = vmatpush1.msra.mxu0 %v2719
        %3093 = vmatprep.subr.mxu0 %v2723
        %3094 = vmatpush1.msra.mxu0 %v2722
        %3095 = vmatprep.subr.mxu0 %v2726
        %3096 = vmatpush1.msra.mxu0 %v2725
        %3097 = vmatprep.subr.mxu0 %v2729
        %3098 = vmatpush1.msra.mxu0 %v2728
        %3099 = vmatprep.subr.mxu0 %v2732
        %3100 = vmatpush1.msra.mxu0 %v2731
        %3101 = vmatprep.subr.mxu0 %v2735
        %3102 = vmatpush1.msra.mxu0 %v2734
        %3103 = vmatprep.mubr.f32.mxu0 %v2305
        %3104 = vmatmul.mubr.f32.gmra.mrb[0].mxu0 %v2303
        %v3105 = vpop.f32.mrb[0].mxu0
        %v3106 = vadd.f32 %v3035, %v3105
        %v3107 = vpop.f32.mrb[0].mxu0
        %v3108 = vadd.f32 %v3037, %v3107
        %3109 = vdwg.mxu0
        %3110 = vmatprep.subr.mxu0 %v2738
        %3111 = vmatpush1.msra.mxu0 %v2737
        %3112 = vmatprep.subr.mxu0 %v2741
        %3113 = vmatpush1.msra.mxu0 %v2740
        %3114 = vmatprep.subr.mxu0 %v2744
        %3115 = vmatpush1.msra.mxu0 %v2743
        %3116 = vmatprep.subr.mxu0 %v2747
        %3117 = vmatpush1.msra.mxu0 %v2746
        %3118 = vmatprep.subr.mxu0 %v2750
        %3119 = vmatpush1.msra.mxu0 %v2749
        %3120 = vmatprep.subr.mxu0 %v2753
        %3121 = vmatpush1.msra.mxu0 %v2752
        %3122 = vmatprep.subr.mxu0 %v2756
        %3123 = vmatpush1.msra.mxu0 %v2755
        %3124 = vmatprep.subr.mxu0 %v2759
        %3125 = vmatpush1.msra.mxu0 %v2758
        %3126 = vmatprep.subr.mxu0 %v2762
        %3127 = vmatpush1.msra.mxu0 %v2761
        %3128 = vmatprep.subr.mxu0 %v2765
        %3129 = vmatpush1.msra.mxu0 %v2764
        %3130 = vmatprep.subr.mxu0 %v2768
        %3131 = vmatpush1.msra.mxu0 %v2767
        %3132 = vmatprep.subr.mxu0 %v2771
        %3133 = vmatpush1.msra.mxu0 %v2770
        %3134 = vmatprep.subr.mxu0 %v2774
        %3135 = vmatpush1.msra.mxu0 %v2773
        %3136 = vmatprep.subr.mxu0 %v2777
        %3137 = vmatpush1.msra.mxu0 %v2776
        %3138 = vmatprep.subr.mxu0 %v2780
        %3139 = vmatpush1.msra.mxu0 %v2779
        %3140 = vmatprep.subr.mxu0 %v2783
        %3141 = vmatpush1.msra.mxu0 %v2782
        %3142 = vmatprep.subr.mxu0 %v2786
        %3143 = vmatpush1.msra.mxu0 %v2785
        %3144 = vmatprep.subr.mxu0 %v2789
        %3145 = vmatpush1.msra.mxu0 %v2788
        %3146 = vmatprep.subr.mxu0 %v2792
        %3147 = vmatpush1.msra.mxu0 %v2791
        %3148 = vmatprep.subr.mxu0 %v2795
        %3149 = vmatpush1.msra.mxu0 %v2794
        %3150 = vmatprep.subr.mxu0 %v2798
        %3151 = vmatpush1.msra.mxu0 %v2797
        %3152 = vmatprep.subr.mxu0 %v2801
        %3153 = vmatpush1.msra.mxu0 %v2800
        %3154 = vmatprep.subr.mxu0 %v2804
        %3155 = vmatpush1.msra.mxu0 %v2803
        %3156 = vmatprep.subr.mxu0 %v2807
        %3157 = vmatpush1.msra.mxu0 %v2806
        %3158 = vmatprep.subr.mxu0 %v2810
        %3159 = vmatpush1.msra.mxu0 %v2809
        %3160 = vmatprep.subr.mxu0 %v2813
        %3161 = vmatpush1.msra.mxu0 %v2812
        %3162 = vmatprep.subr.mxu0 %v2816
        %3163 = vmatpush1.msra.mxu0 %v2815
        %3164 = vmatprep.subr.mxu0 %v2819
        %3165 = vmatpush1.msra.mxu0 %v2818
        %3166 = vmatprep.subr.mxu0 %v2822
        %3167 = vmatpush1.msra.mxu0 %v2821
        %3168 = vmatprep.subr.mxu0 %v2825
        %3169 = vmatpush1.msra.mxu0 %v2824
        %3170 = vmatprep.subr.mxu0 %v2828
        %3171 = vmatpush1.msra.mxu0 %v2827
        %3172 = vmatprep.subr.mxu0 %v2831
        %3173 = vmatpush1.msra.mxu0 %v2830
        %3174 = vmatprep.mubr.f32.mxu0 %v2376
        %3175 = vmatmul.mubr.f32.gmra.mrb[0].mxu0 %v2374
        %v3176 = vpop.f32.mrb[0].mxu0
        %v3177 = vadd.f32 %v3106, %v3176
        %v3178 = vpop.f32.mrb[0].mxu0
        %v3179 = vadd.f32 %v3108, %v3178
        %3180 = vdwg.mxu0
        %3181 = vmatprep.subr.mxu0 %v2834
        %3182 = vmatpush1.msra.mxu0 %v2833
        %3183 = vmatprep.subr.mxu0 %v2837
        %3184 = vmatpush1.msra.mxu0 %v2836
        %3185 = vmatprep.subr.mxu0 %v2840
        %3186 = vmatpush1.msra.mxu0 %v2839
        %3187 = vmatprep.subr.mxu0 %v2843
        %3188 = vmatpush1.msra.mxu0 %v2842
        %3189 = vmatprep.subr.mxu0 %v2846
        %3190 = vmatpush1.msra.mxu0 %v2845
        %3191 = vmatprep.subr.mxu0 %v2849
        %3192 = vmatpush1.msra.mxu0 %v2848
        %3193 = vmatprep.subr.mxu0 %v2852
        %3194 = vmatpush1.msra.mxu0 %v2851
        %3195 = vmatprep.subr.mxu0 %v2855
        %3196 = vmatpush1.msra.mxu0 %v2854
        %3197 = vmatprep.subr.mxu0 %v2858
        %3198 = vmatpush1.msra.mxu0 %v2857
        %3199 = vmatprep.subr.mxu0 %v2861
        %3200 = vmatpush1.msra.mxu0 %v2860
        %3201 = vmatprep.subr.mxu0 %v2864
        %3202 = vmatpush1.msra.mxu0 %v2863
        %3203 = vmatprep.subr.mxu0 %v2867
        %3204 = vmatpush1.msra.mxu0 %v2866
        %3205 = vmatprep.subr.mxu0 %v2870
        %3206 = vmatpush1.msra.mxu0 %v2869
        %3207 = vmatprep.subr.mxu0 %v2873
        %3208 = vmatpush1.msra.mxu0 %v2872
        %3209 = vmatprep.subr.mxu0 %v2876
        %3210 = vmatpush1.msra.mxu0 %v2875
        %3211 = vmatprep.subr.mxu0 %v2879
        %3212 = vmatpush1.msra.mxu0 %v2878
        %3213 = vmatprep.subr.mxu0 %v2892
        %3214 = vmatpush1.msra.mxu0 %v2889
        %3215 = vmatprep.subr.mxu0 0.0
        %3216 = vmatpush1.msra.mxu0 0.0
        %3217 = vmatprep.subr.mxu0 0.0
        %3218 = vmatpush1.msra.mxu0 0.0
        %3219 = vmatprep.subr.mxu0 0.0
        %3220 = vmatpush1.msra.mxu0 0.0
        %3221 = vmatprep.subr.mxu0 0.0
        %3222 = vmatpush1.msra.mxu0 0.0
        %3223 = vmatprep.subr.mxu0 0.0
        %3224 = vmatpush1.msra.mxu0 0.0
        %3225 = vmatprep.subr.mxu0 0.0
        %3226 = vmatpush1.msra.mxu0 0.0
        %3227 = vmatprep.subr.mxu0 0.0
        %3228 = vmatpush1.msra.mxu0 0.0
        %3229 = vmatprep.subr.mxu0 0.0
        %3230 = vmatpush1.msra.mxu0 0.0
        %3231 = vmatprep.subr.mxu0 0.0
        %3232 = vmatpush1.msra.mxu0 0.0
        %3233 = vmatprep.subr.mxu0 0.0
        %3234 = vmatpush1.msra.mxu0 0.0
        %3235 = vmatprep.subr.mxu0 0.0
        %3236 = vmatpush1.msra.mxu0 0.0
        %3237 = vmatprep.subr.mxu0 0.0
        %3238 = vmatpush1.msra.mxu0 0.0
        %3239 = vmatprep.subr.mxu0 0.0
        %3240 = vmatpush1.msra.mxu0 0.0
        %3241 = vmatprep.subr.mxu0 0.0
        %3242 = vmatpush1.msra.mxu0 0.0
        %3243 = vmatprep.subr.mxu0 0.0
        %3244 = vmatpush1.msra.mxu0 0.0
        %3245 = vmatprep.mubr.f32.mxu0 %v2885
        %3246 = vmatmul.mubr.f32.gmra.mrb[0].mxu0 %v2445
        %v3247 = vpop.f32.mrb[0].mxu0
        %v3248 = vadd.f32 %v3177, %v3247
        %v3249 = vpop.f32.mrb[0].mxu0
        %v3250 = vadd.f32 %v3179, %v3249
        %3251 = vdwg.mxu0
        %3252 = vmatprep.subr.mxu0 0.0
        %3253 = vmatpush1.msra.mxu0 %v2451
        %3254 = vmatprep.subr.mxu0 0.0
        %3255 = vmatpush1.msra.mxu0 %v2454
        %3256 = vmatprep.subr.mxu0 0.0
        %3257 = vmatpush1.msra.mxu0 %v2457
        %3258 = vmatprep.subr.mxu0 0.0
        %3259 = vmatpush1.msra.mxu0 %v2460
        %3260 = vmatprep.subr.mxu0 0.0
        %3261 = vmatpush1.msra.mxu0 %v2463
        %3262 = vmatprep.subr.mxu0 0.0
        %3263 = vmatpush1.msra.mxu0 %v2466
        %3264 = vmatprep.subr.mxu0 0.0
        %3265 = vmatpush1.msra.mxu0 %v2469
        %3266 = vmatprep.subr.mxu0 0.0
        %3267 = vmatpush1.msra.mxu0 %v2472
        %3268 = vmatprep.subr.mxu0 0.0
        %3269 = vmatpush1.msra.mxu0 %v2475
        %3270 = vmatprep.subr.mxu0 0.0
        %3271 = vmatpush1.msra.mxu0 %v2478
        %3272 = vmatprep.subr.mxu0 0.0
        %3273 = vmatpush1.msra.mxu0 %v2481
        %3274 = vmatprep.subr.mxu0 0.0
        %3275 = vmatpush1.msra.mxu0 %v2484
        %3276 = vmatprep.subr.mxu0 0.0
        %3277 = vmatpush1.msra.mxu0 %v2487
        %3278 = vmatprep.subr.mxu0 0.0
        %3279 = vmatpush1.msra.mxu0 %v2490
        %3280 = vmatprep.subr.mxu0 0.0
        %3281 = vmatpush1.msra.mxu0 %v2493
        %3282 = vmatprep.subr.mxu0 0.0
        %3283 = vmatpush1.msra.mxu0 %v2496
        %3284 = vmatprep.subr.mxu0 0.0
        %3285 = vmatpush1.msra.mxu0 %v2499
        %3286 = vmatprep.subr.mxu0 0.0
        %3287 = vmatpush1.msra.mxu0 %v2502
        %3288 = vmatprep.subr.mxu0 0.0
        %3289 = vmatpush1.msra.mxu0 %v2505
        %3290 = vmatprep.subr.mxu0 0.0
        %3291 = vmatpush1.msra.mxu0 %v2508
        %3292 = vmatprep.subr.mxu0 0.0
        %3293 = vmatpush1.msra.mxu0 %v2511
        %3294 = vmatprep.subr.mxu0 0.0
        %3295 = vmatpush1.msra.mxu0 %v2514
        %3296 = vmatprep.subr.mxu0 0.0
        %3297 = vmatpush1.msra.mxu0 %v2517
        %3298 = vmatprep.subr.mxu0 0.0
        %3299 = vmatpush1.msra.mxu0 %v2520
        %3300 = vmatprep.subr.mxu0 0.0
        %3301 = vmatpush1.msra.mxu0 %v2523
        %3302 = vmatprep.subr.mxu0 0.0
        %3303 = vmatpush1.msra.mxu0 %v2526
        %3304 = vmatprep.subr.mxu0 0.0
        %3305 = vmatpush1.msra.mxu0 %v2529
        %3306 = vmatprep.subr.mxu0 0.0
        %3307 = vmatpush1.msra.mxu0 %v2532
        %3308 = vmatprep.subr.mxu0 0.0
        %3309 = vmatpush1.msra.mxu0 %v2535
        %3310 = vmatprep.subr.mxu0 0.0
        %3311 = vmatpush1.msra.mxu0 %v2538
        %3312 = vmatprep.subr.mxu0 0.0
        %3313 = vmatpush1.msra.mxu0 %v2541
        %3314 = vmatprep.subr.mxu0 0.0
        %3315 = vmatpush1.msra.mxu0 %v2544
        %3316 = vmatprep.mubr.f32.mxu0 %v2163
        %3317 = vmatmul.mubr.f32.gmra.mrb[0].mxu0 %v2161
        %v3318 = vpop.f32.mrb[0].mxu0
        %v3319 = vadd.f32 0.0, %v3318
        %v3320 = vpop.f32.mrb[0].mxu0
        %3321 = vdwg.mxu0
        %3322 = vmatprep.subr.mxu0 0.0
        %3323 = vmatpush1.msra.mxu0 %v2547
        %3324 = vmatprep.subr.mxu0 0.0
        %3325 = vmatpush1.msra.mxu0 %v2550
        %3326 = vmatprep.subr.mxu0 0.0
        %3327 = vmatpush1.msra.mxu0 %v2553
        %3328 = vmatprep.subr.mxu0 0.0
        %3329 = vmatpush1.msra.mxu0 %v2556
        %3330 = vmatprep.subr.mxu0 0.0
        %3331 = vmatpush1.msra.mxu0 %v2559
        %3332 = vmatprep.subr.mxu0 0.0
        %3333 = vmatpush1.msra.mxu0 %v2562
        %3334 = vmatprep.subr.mxu0 0.0
        %3335 = vmatpush1.msra.mxu0 %v2565
        %3336 = vmatprep.subr.mxu0 0.0
        %3337 = vmatpush1.msra.mxu0 %v2568
        %3338 = vmatprep.subr.mxu0 0.0
        %3339 = vmatpush1.msra.mxu0 %v2571
        %3340 = vmatprep.subr.mxu0 0.0
        %3341 = vmatpush1.msra.mxu0 %v2574
        %3342 = vmatprep.subr.mxu0 0.0
        %3343 = vmatpush1.msra.mxu0 %v2577
        %3344 = vmatprep.subr.mxu0 0.0
        %3345 = vmatpush1.msra.mxu0 %v2580
        %3346 = vmatprep.subr.mxu0 0.0
        %3347 = vmatpush1.msra.mxu0 %v2583
        %3348 = vmatprep.subr.mxu0 0.0
        %3349 = vmatpush1.msra.mxu0 %v2586
        %3350 = vmatprep.subr.mxu0 0.0
        %3351 = vmatpush1.msra.mxu0 %v2589
        %3352 = vmatprep.subr.mxu0 0.0
        %3353 = vmatpush1.msra.mxu0 %v2592
        %3354 = vmatprep.subr.mxu0 0.0
        %3355 = vmatpush1.msra.mxu0 %v2595
        %3356 = vmatprep.subr.mxu0 0.0
        %3357 = vmatpush1.msra.mxu0 %v2598
        %3358 = vmatprep.subr.mxu0 0.0
        %3359 = vmatpush1.msra.mxu0 %v2601
        %3360 = vmatprep.subr.mxu0 0.0
        %3361 = vmatpush1.msra.mxu0 %v2604
        %3362 = vmatprep.subr.mxu0 0.0
        %3363 = vmatpush1.msra.mxu0 %v2607
        %3364 = vmatprep.subr.mxu0 0.0
        %3365 = vmatpush1.msra.mxu0 %v2610
        %3366 = vmatprep.subr.mxu0 0.0
        %3367 = vmatpush1.msra.mxu0 %v2613
        %3368 = vmatprep.subr.mxu0 0.0
        %3369 = vmatpush1.msra.mxu0 %v2616
        %3370 = vmatprep.subr.mxu0 0.0
        %3371 = vmatpush1.msra.mxu0 %v2619
        %3372 = vmatprep.subr.mxu0 0.0
        %3373 = vmatpush1.msra.mxu0 %v2622
        %3374 = vmatprep.subr.mxu0 0.0
        %3375 = vmatpush1.msra.mxu0 %v2625
        %3376 = vmatprep.subr.mxu0 0.0
        %3377 = vmatpush1.msra.mxu0 %v2628
        %3378 = vmatprep.subr.mxu0 0.0
        %3379 = vmatpush1.msra.mxu0 %v2631
        %3380 = vmatprep.subr.mxu0 0.0
        %3381 = vmatpush1.msra.mxu0 %v2634
        %3382 = vmatprep.subr.mxu0 0.0
        %3383 = vmatpush1.msra.mxu0 %v2637
        %3384 = vmatprep.subr.mxu0 0.0
        %3385 = vmatpush1.msra.mxu0 %v2640
        %3386 = vmatprep.mubr.f32.mxu0 %v2234
        %3387 = vmatmul.mubr.f32.gmra.mrb[0].mxu0 %v2232
        %v3388 = vpop.f32.mrb[0].mxu0
        %v3389 = vadd.f32 %v3319, %v3388
        %v3390 = vpop.f32.mrb[0].mxu0
        %3391 = vdwg.mxu0
        %3392 = vmatprep.subr.mxu0 0.0
        %3393 = vmatpush1.msra.mxu0 %v2643
        %3394 = vmatprep.subr.mxu0 0.0
        %3395 = vmatpush1.msra.mxu0 %v2646
        %3396 = vmatprep.subr.mxu0 0.0
        %3397 = vmatpush1.msra.mxu0 %v2649
        %3398 = vmatprep.subr.mxu0 0.0
        %3399 = vmatpush1.msra.mxu0 %v2652
        %3400 = vmatprep.subr.mxu0 0.0
        %3401 = vmatpush1.msra.mxu0 %v2655
        %3402 = vmatprep.subr.mxu0 0.0
        %3403 = vmatpush1.msra.mxu0 %v2658
        %3404 = vmatprep.subr.mxu0 0.0
        %3405 = vmatpush1.msra.mxu0 %v2661
        %3406 = vmatprep.subr.mxu0 0.0
        %3407 = vmatpush1.msra.mxu0 %v2664
        %3408 = vmatprep.subr.mxu0 0.0
        %3409 = vmatpush1.msra.mxu0 %v2667
        %3410 = vmatprep.subr.mxu0 0.0
        %3411 = vmatpush1.msra.mxu0 %v2670
        %3412 = vmatprep.subr.mxu0 0.0
        %3413 = vmatpush1.msra.mxu0 %v2673
        %3414 = vmatprep.subr.mxu0 0.0
        %3415 = vmatpush1.msra.mxu0 %v2676
        %3416 = vmatprep.subr.mxu0 0.0
        %3417 = vmatpush1.msra.mxu0 %v2679
        %3418 = vmatprep.subr.mxu0 0.0
        %3419 = vmatpush1.msra.mxu0 %v2682
        %3420 = vmatprep.subr.mxu0 0.0
        %3421 = vmatpush1.msra.mxu0 %v2685
        %3422 = vmatprep.subr.mxu0 0.0
        %3423 = vmatpush1.msra.mxu0 %v2688
        %3424 = vmatprep.subr.mxu0 0.0
        %3425 = vmatpush1.msra.mxu0 %v2691
        %3426 = vmatprep.subr.mxu0 0.0
        %3427 = vmatpush1.msra.mxu0 %v2694
        %3428 = vmatprep.subr.mxu0 0.0
        %3429 = vmatpush1.msra.mxu0 %v2697
        %3430 = vmatprep.subr.mxu0 0.0
        %3431 = vmatpush1.msra.mxu0 %v2700
        %3432 = vmatprep.subr.mxu0 0.0
        %3433 = vmatpush1.msra.mxu0 %v2703
        %3434 = vmatprep.subr.mxu0 0.0
        %3435 = vmatpush1.msra.mxu0 %v2706
        %3436 = vmatprep.subr.mxu0 0.0
        %3437 = vmatpush1.msra.mxu0 %v2709
        %3438 = vmatprep.subr.mxu0 0.0
        %3439 = vmatpush1.msra.mxu0 %v2712
        %3440 = vmatprep.subr.mxu0 0.0
        %3441 = vmatpush1.msra.mxu0 %v2715
        %3442 = vmatprep.subr.mxu0 0.0
        %3443 = vmatpush1.msra.mxu0 %v2718
        %3444 = vmatprep.subr.mxu0 0.0
        %3445 = vmatpush1.msra.mxu0 %v2721
        %3446 = vmatprep.subr.mxu0 0.0
        %3447 = vmatpush1.msra.mxu0 %v2724
        %3448 = vmatprep.subr.mxu0 0.0
        %3449 = vmatpush1.msra.mxu0 %v2727
        %3450 = vmatprep.subr.mxu0 0.0
        %3451 = vmatpush1.msra.mxu0 %v2730
        %3452 = vmatprep.subr.mxu0 0.0
        %3453 = vmatpush1.msra.mxu0 %v2733
        %3454 = vmatprep.subr.mxu0 0.0
        %3455 = vmatpush1.msra.mxu0 %v2736
        %3456 = vmatprep.mubr.f32.mxu0 %v2305
        %3457 = vmatmul.mubr.f32.gmra.mrb[0].mxu0 %v2303
        %v3458 = vpop.f32.mrb[0].mxu0
        %v3459 = vadd.f32 %v3389, %v3458
        %v3460 = vpop.f32.mrb[0].mxu0
        %3461 = vdwg.mxu0
        %3462 = vmatprep.subr.mxu0 0.0
        %3463 = vmatpush1.msra.mxu0 %v2739
        %3464 = vmatprep.subr.mxu0 0.0
        %3465 = vmatpush1.msra.mxu0 %v2742
        %3466 = vmatprep.subr.mxu0 0.0
        %3467 = vmatpush1.msra.mxu0 %v2745
        %3468 = vmatprep.subr.mxu0 0.0
        %3469 = vmatpush1.msra.mxu0 %v2748
        %3470 = vmatprep.subr.mxu0 0.0
        %3471 = vmatpush1.msra.mxu0 %v2751
        %3472 = vmatprep.subr.mxu0 0.0
        %3473 = vmatpush1.msra.mxu0 %v2754
        %3474 = vmatprep.subr.mxu0 0.0
        %3475 = vmatpush1.msra.mxu0 %v2757
        %3476 = vmatprep.subr.mxu0 0.0
        %3477 = vmatpush1.msra.mxu0 %v2760
        %3478 = vmatprep.subr.mxu0 0.0
        %3479 = vmatpush1.msra.mxu0 %v2763
        %3480 = vmatprep.subr.mxu0 0.0
        %3481 = vmatpush1.msra.mxu0 %v2766
        %3482 = vmatprep.subr.mxu0 0.0
        %3483 = vmatpush1.msra.mxu0 %v2769
        %3484 = vmatprep.subr.mxu0 0.0
        %3485 = vmatpush1.msra.mxu0 %v2772
        %3486 = vmatprep.subr.mxu0 0.0
        %3487 = vmatpush1.msra.mxu0 %v2775
        %3488 = vmatprep.subr.mxu0 0.0
        %3489 = vmatpush1.msra.mxu0 %v2778
        %3490 = vmatprep.subr.mxu0 0.0
        %3491 = vmatpush1.msra.mxu0 %v2781
        %3492 = vmatprep.subr.mxu0 0.0
        %3493 = vmatpush1.msra.mxu0 %v2784
        %3494 = vmatprep.subr.mxu0 0.0
        %3495 = vmatpush1.msra.mxu0 %v2787
        %3496 = vmatprep.subr.mxu0 0.0
        %3497 = vmatpush1.msra.mxu0 %v2790
        %3498 = vmatprep.subr.mxu0 0.0
        %3499 = vmatpush1.msra.mxu0 %v2793
        %3500 = vmatprep.subr.mxu0 0.0
        %3501 = vmatpush1.msra.mxu0 %v2796
        %3502 = vmatprep.subr.mxu0 0.0
        %3503 = vmatpush1.msra.mxu0 %v2799
        %3504 = vmatprep.subr.mxu0 0.0
        %3505 = vmatpush1.msra.mxu0 %v2802
        %3506 = vmatprep.subr.mxu0 0.0
        %3507 = vmatpush1.msra.mxu0 %v2805
        %3508 = vmatprep.subr.mxu0 0.0
        %3509 = vmatpush1.msra.mxu0 %v2808
        %3510 = vmatprep.subr.mxu0 0.0
        %3511 = vmatpush1.msra.mxu0 %v2811
        %3512 = vmatprep.subr.mxu0 0.0
        %3513 = vmatpush1.msra.mxu0 %v2814
        %3514 = vmatprep.subr.mxu0 0.0
        %3515 = vmatpush1.msra.mxu0 %v2817
        %3516 = vmatprep.subr.mxu0 0.0
        %3517 = vmatpush1.msra.mxu0 %v2820
        %3518 = vmatprep.subr.mxu0 0.0
        %3519 = vmatpush1.msra.mxu0 %v2823
        %3520 = vmatprep.subr.mxu0 0.0
        %3521 = vmatpush1.msra.mxu0 %v2826
        %3522 = vmatprep.subr.mxu0 0.0
        %3523 = vmatpush1.msra.mxu0 %v2829
        %3524 = vmatprep.subr.mxu0 0.0
        %3525 = vmatpush1.msra.mxu0 %v2832
        %3526 = vmatprep.mubr.f32.mxu0 %v2376
        %3527 = vmatmul.mubr.f32.gmra.mrb[0].mxu0 %v2374
        %v3528 = vpop.f32.mrb[0].mxu0
        %v3529 = vadd.f32 %v3459, %v3528
        %v3530 = vpop.f32.mrb[0].mxu0
        %3531 = vdwg.mxu0
        %3532 = vmatprep.subr.mxu0 0.0
        %3533 = vmatpush1.msra.mxu0 %v2835
        %3534 = vmatprep.subr.mxu0 0.0
        %3535 = vmatpush1.msra.mxu0 %v2838
        %3536 = vmatprep.subr.mxu0 0.0
        %3537 = vmatpush1.msra.mxu0 %v2841
        %3538 = vmatprep.subr.mxu0 0.0
        %3539 = vmatpush1.msra.mxu0 %v2844
        %3540 = vmatprep.subr.mxu0 0.0
        %3541 = vmatpush1.msra.mxu0 %v2847
        %3542 = vmatprep.subr.mxu0 0.0
        %3543 = vmatpush1.msra.mxu0 %v2850
        %3544 = vmatprep.subr.mxu0 0.0
        %3545 = vmatpush1.msra.mxu0 %v2853
        %3546 = vmatprep.subr.mxu0 0.0
        %3547 = vmatpush1.msra.mxu0 %v2856
        %3548 = vmatprep.subr.mxu0 0.0
        %3549 = vmatpush1.msra.mxu0 %v2859
        %3550 = vmatprep.subr.mxu0 0.0
        %3551 = vmatpush1.msra.mxu0 %v2862
        %3552 = vmatprep.subr.mxu0 0.0
        %3553 = vmatpush1.msra.mxu0 %v2865
        %3554 = vmatprep.subr.mxu0 0.0
        %3555 = vmatpush1.msra.mxu0 %v2868
        %3556 = vmatprep.subr.mxu0 0.0
        %3557 = vmatpush1.msra.mxu0 %v2871
        %3558 = vmatprep.subr.mxu0 0.0
        %3559 = vmatpush1.msra.mxu0 %v2874
        %3560 = vmatprep.subr.mxu0 0.0
        %3561 = vmatpush1.msra.mxu0 %v2877
        %3562 = vmatprep.subr.mxu0 0.0
        %3563 = vmatpush1.msra.mxu0 %v2880
        %3564 = vmatprep.subr.mxu0 0.0
        %3565 = vmatpush1.msra.mxu0 %v2895
        %3566 = vmatprep.subr.mxu0 0.0
        %3567 = vmatpush1.msra.mxu0 0.0
        %3568 = vmatprep.subr.mxu0 0.0
        %3569 = vmatpush1.msra.mxu0 0.0
        %3570 = vmatprep.subr.mxu0 0.0
        %3571 = vmatpush1.msra.mxu0 0.0
        %3572 = vmatprep.subr.mxu0 0.0
        %3573 = vmatpush1.msra.mxu0 0.0
        %3574 = vmatprep.subr.mxu0 0.0
        %3575 = vmatpush1.msra.mxu0 0.0
        %3576 = vmatprep.subr.mxu0 0.0
        %3577 = vmatpush1.msra.mxu0 0.0
        %3578 = vmatprep.subr.mxu0 0.0
        %3579 = vmatpush1.msra.mxu0 0.0
        %3580 = vmatprep.subr.mxu0 0.0
        %3581 = vmatpush1.msra.mxu0 0.0
        %3582 = vmatprep.subr.mxu0 0.0
        %3583 = vmatpush1.msra.mxu0 0.0
        %3584 = vmatprep.subr.mxu0 0.0
        %3585 = vmatpush1.msra.mxu0 0.0
        %3586 = vmatprep.subr.mxu0 0.0
        %3587 = vmatpush1.msra.mxu0 0.0
        %3588 = vmatprep.subr.mxu0 0.0
        %3589 = vmatpush1.msra.mxu0 0.0
        %3590 = vmatprep.subr.mxu0 0.0
        %3591 = vmatpush1.msra.mxu0 0.0
        %3592 = vmatprep.subr.mxu0 0.0
        %3593 = vmatpush1.msra.mxu0 0.0
        %3594 = vmatprep.subr.mxu0 0.0
        %3595 = vmatpush1.msra.mxu0 0.0
        %3596 = vmatprep.mubr.f32.mxu0 %v2885
        %3597 = vmatmul.mubr.f32.gmra.mrb[0].mxu0 %v2445
        %v3598 = vpop.f32.mrb[0].mxu0
        %v3599 = vadd.f32 %v3529, %v3598
        %v3600 = vpop.f32.mrb[0].mxu0
        %3601 = vdwg.mxu0
        %3605 = vrot.lane.b32.xlu0 %v3248, 19
        %v3606 = vpop.permute.xlu0 %3605
        %3607 = vrot.lane.b32.xlu0 %v3250, 19
        %v3608 = vpop.permute.xlu0 %3607
        %3609 = vrot.lane.b32.xlu0 %v3599, 19
        %v3610 = vpop.permute.xlu0 %3609
        %vm3611 = vcmask 154624
        %v3612 = vsel %vm3611, %v3606, %v3608
        %v3613 = vsel %vm3611, %v3608, %v3610
        %vm3617 = vcmask 1047704
        %3618 = vst.msk [vmem:[#allocation3] sm:$0xff] %vm3617, %v3606
        %3619 = vst [vmem:[#allocation3 + $0x8] sm:$0xff] %v3612
        %vm3620 = vcmask 711680
        %3621 = vst.msk [vmem:[#allocation3 + $0x10] sm:$0xff] %vm3620, %v3613
        %s3622 = scalar_lea.vmem %s1, 8
        %v3623 = vld [vmem:[%s3622] sm:$0xff]
        %s3624 = scalar_lea.vmem %s2, 8
        %v3625 = vld [vmem:[%s3624] sm:$0xff]
        %v3626 = vld [vmem:[#allocation3] sm:$0xff]
        %v3627 = vld [vmem:[#allocation3 + $0x8] sm:$0xff]
        %v3628 = vld [vmem:[#allocation3 + $0x10] sm:$0xff]
        %3629 = vst [vmem:[#allocation6] sm:$0xff] %v3626
        %3630 = vst [vmem:[#allocation6 + $0x8] sm:$0xff] %v3627
        %vm3631 = vcmask 556032
        %3632 = vst.msk [vmem:[#allocation6 + $0x10] sm:$0xff] %vm3631, %v3628
        %v3633 = vld [vmem:[#allocation3] sm:$0xff]
        %v3634 = vld [vmem:[#allocation3 + $0x8] sm:$0xff]
        %v3635 = vld [vmem:[#allocation3 + $0x10] sm:$0xff]
        %3639 = vrot.lane.b32.xlu0 %v3633, 127
        %v3640 = vpop.permute.xlu0 %3639
        %3641 = vrot.lane.b32.xlu0 %v3634, 127
        %v3642 = vpop.permute.xlu0 %3641
        %3643 = vrot.lane.b32.xlu0 %v3635, 127
        %v3644 = vpop.permute.xlu0 %3643
        %v3645 = vsel %vm1475, %v3640, %v3642
        %v3646 = vsel %vm1475, %v3642, %v3644
        %3650 = vst [vmem:[#allocation6 + $0x50] sm:$0xff] %v3645
        %3651 = vst [vmem:[#allocation6 + $0x58] sm:$0xff] %v3646
        %3652 = vst.msk [vmem:[#allocation6 + $0x60] sm:$0xff] %vm3631, %v3644
        %v3653 = vld [vmem:[#allocation3] sm:$0xff]
        %v3654 = vld [vmem:[#allocation3 + $0x8] sm:$0xff]
        %v3655 = vld [vmem:[#allocation3 + $0x10] sm:$0xff]
        %3659 = vrot.lane.b32.xlu0 %v3653, 126
        %v3660 = vpop.permute.xlu0 %3659
        %3661 = vrot.lane.b32.xlu0 %v3654, 126
        %v3662 = vpop.permute.xlu0 %3661
        %3663 = vrot.lane.b32.xlu0 %v3655, 126
        %v3664 = vpop.permute.xlu0 %3663
        %v3665 = vsel %vm1545, %v3660, %v3662
        %v3666 = vsel %vm1545, %v3662, %v3664
        %3670 = vst [vmem:[#allocation6 + $0xa0] sm:$0xff] %v3665
        %3671 = vst [vmem:[#allocation6 + $0xa8] sm:$0xff] %v3666
        %3672 = vst.msk [vmem:[#allocation6 + $0xb0] sm:$0xff] %vm3631, %v3664
        %v3673 = vld [vmem:[#allocation3] sm:$0xff]
        %v3674 = vld [vmem:[#allocation3 + $0x8] sm:$0xff]
        %v3675 = vld [vmem:[#allocation3 + $0x10] sm:$0xff]
        %3679 = vrot.lane.b32.xlu0 %v3673, 110
        %v3680 = vpop.permute.xlu0 %3679
        %3681 = vrot.lane.b32.xlu0 %v3674, 110
        %v3682 = vpop.permute.xlu0 %3681
        %3683 = vrot.lane.b32.xlu0 %v3675, 110
        %v3684 = vpop.permute.xlu0 %3683
        %vm3685 = vcmask 900096
        %v3686 = vsel %vm3685, %v3680, %v3682
        %v3687 = vsel %vm3685, %v3682, %v3684
        %3691 = vst [vmem:[#allocation6 + $0xf0] sm:$0xff] %v3686
        %3692 = vst [vmem:[#allocation6 + $0xf8] sm:$0xff] %v3687
        %3693 = vst.msk [vmem:[#allocation6 + $0x100] sm:$0xff] %vm3631, %v3684
        %v3694 = vld [vmem:[#allocation3] sm:$0xff]
        %v3695 = vld [vmem:[#allocation3 + $0x8] sm:$0xff]
        %v3696 = vld [vmem:[#allocation3 + $0x10] sm:$0xff]
        %3700 = vrot.lane.b32.xlu0 %v3694, 109
        %v3701 = vpop.permute.xlu0 %3700
        %3702 = vrot.lane.b32.xlu0 %v3695, 109
        %v3703 = vpop.permute.xlu0 %3702
        %3704 = vrot.lane.b32.xlu0 %v3696, 109
        %v3705 = vpop.permute.xlu0 %3704
        %vm3706 = vcmask 891904
        %v3707 = vsel %vm3706, %v3701, %v3703
        %v3708 = vsel %vm3706, %v3703, %v3705
        %3712 = vst [vmem:[#allocation6 + $0x140] sm:$0xff] %v3707
        %3713 = vst [vmem:[#allocation6 + $0x148] sm:$0xff] %v3708
        %3714 = vst.msk [vmem:[#allocation6 + $0x150] sm:$0xff] %vm3631, %v3705
        %v3715 = vld [vmem:[#allocation3] sm:$0xff]
        %v3716 = vld [vmem:[#allocation3 + $0x8] sm:$0xff]
        %v3717 = vld [vmem:[#allocation3 + $0x10] sm:$0xff]
        %3721 = vrot.lane.b32.xlu0 %v3715, 108
        %v3722 = vpop.permute.xlu0 %3721
        %3723 = vrot.lane.b32.xlu0 %v3716, 108
        %v3724 = vpop.permute.xlu0 %3723
        %3725 = vrot.lane.b32.xlu0 %v3717, 108
        %v3726 = vpop.permute.xlu0 %3725
        %vm3727 = vcmask 883712
        %v3728 = vsel %vm3727, %v3722, %v3724
        %v3729 = vsel %vm3727, %v3724, %v3726
        %3733 = vst [vmem:[#allocation6 + $0x190] sm:$0xff] %v3728
        %3734 = vst [vmem:[#allocation6 + $0x198] sm:$0xff] %v3729
        %3735 = vst.msk [vmem:[#allocation6 + $0x1a0] sm:$0xff] %vm3631, %v3726
        %v3736 = vld [vmem:[#allocation3] sm:$0xff]
        %v3737 = vld [vmem:[#allocation3 + $0x8] sm:$0xff]
        %v3738 = vld [vmem:[#allocation3 + $0x10] sm:$0xff]
        %3742 = vrot.lane.b32.xlu0 %v3736, 92
        %v3743 = vpop.permute.xlu0 %3742
        %3744 = vrot.lane.b32.xlu0 %v3737, 92
        %v3745 = vpop.permute.xlu0 %3744
        %3746 = vrot.lane.b32.xlu0 %v3738, 92
        %v3747 = vpop.permute.xlu0 %3746
        %v3748 = vsel %vm1755, %v3743, %v3745
        %v3749 = vsel %vm1755, %v3745, %v3747
        %3753 = vst [vmem:[#allocation6 + $0x1e0] sm:$0xff] %v3748
        %3754 = vst [vmem:[#allocation6 + $0x1e8] sm:$0xff] %v3749
        %3755 = vst.msk [vmem:[#allocation6 + $0x1f0] sm:$0xff] %vm3631, %v3747
        %v3756 = vld [vmem:[#allocation3] sm:$0xff]
        %v3757 = vld [vmem:[#allocation3 + $0x8] sm:$0xff]
        %v3758 = vld [vmem:[#allocation3 + $0x10] sm:$0xff]
        %3762 = vrot.lane.b32.xlu0 %v3756, 91
        %v3763 = vpop.permute.xlu0 %3762
        %3764 = vrot.lane.b32.xlu0 %v3757, 91
        %v3765 = vpop.permute.xlu0 %3764
        %3766 = vrot.lane.b32.xlu0 %v3758, 91
        %v3767 = vpop.permute.xlu0 %3766
        %vm3768 = vcmask 744448
        %v3769 = vsel %vm3768, %v3763, %v3765
        %v3770 = vsel %vm3768, %v3765, %v3767
        %3774 = vst [vmem:[#allocation6 + $0x230] sm:$0xff] %v3769
        %3775 = vst [vmem:[#allocation6 + $0x238] sm:$0xff] %v3770
        %3776 = vst.msk [vmem:[#allocation6 + $0x240] sm:$0xff] %vm3631, %v3767
        %v3777 = vld [vmem:[#allocation3] sm:$0xff]
        %v3778 = vld [vmem:[#allocation3 + $0x8] sm:$0xff]
        %v3779 = vld [vmem:[#allocation3 + $0x10] sm:$0xff]
        %3783 = vrot.lane.b32.xlu0 %v3777, 90
        %v3784 = vpop.permute.xlu0 %3783
        %3785 = vrot.lane.b32.xlu0 %v3778, 90
        %v3786 = vpop.permute.xlu0 %3785
        %3787 = vrot.lane.b32.xlu0 %v3779, 90
        %v3788 = vpop.permute.xlu0 %3787
        %vm3789 = vcmask 736256
        %v3790 = vsel %vm3789, %v3784, %v3786
        %v3791 = vsel %vm3789, %v3786, %v3788
        %3795 = vst [vmem:[#allocation6 + $0x280] sm:$0xff] %v3790
        %3796 = vst [vmem:[#allocation6 + $0x288] sm:$0xff] %v3791
        %3797 = vst.msk [vmem:[#allocation6 + $0x290] sm:$0xff] %vm3631, %v3788
        %v3798 = vld [vmem:[#allocation6] sm:$0xff]
        %v3799 = vld [vmem:[#allocation6 + $0x8] sm:$0xff]
        %v3800 = vld [vmem:[#allocation6 + $0x10] sm:$0xff]
        %v3801 = vld [vmem:[#allocation6 + $0x50] sm:$0xff]
        %v3802 = vld [vmem:[#allocation6 + $0x58] sm:$0xff]
        %v3803 = vld [vmem:[#allocation6 + $0x60] sm:$0xff]
        %v3804 = vld [vmem:[#allocation6 + $0xa0] sm:$0xff]
        %v3805 = vld [vmem:[#allocation6 + $0xa8] sm:$0xff]
        %v3806 = vld [vmem:[#allocation6 + $0xb0] sm:$0xff]
        %v3807 = vld [vmem:[#allocation6 + $0xf0] sm:$0xff]
        %v3808 = vld [vmem:[#allocation6 + $0xf8] sm:$0xff]
        %v3809 = vld [vmem:[#allocation6 + $0x100] sm:$0xff]
        %v3810 = vld [vmem:[#allocation6 + $0x140] sm:$0xff]
        %v3811 = vld [vmem:[#allocation6 + $0x148] sm:$0xff]
        %v3812 = vld [vmem:[#allocation6 + $0x150] sm:$0xff]
        %v3813 = vld [vmem:[#allocation6 + $0x190] sm:$0xff]
        %v3814 = vld [vmem:[#allocation6 + $0x198] sm:$0xff]
        %v3815 = vld [vmem:[#allocation6 + $0x1a0] sm:$0xff]
        %v3816 = vld [vmem:[#allocation6 + $0x1e0] sm:$0xff]
        %v3817 = vld [vmem:[#allocation6 + $0x1e8] sm:$0xff]
        %v3818 = vld [vmem:[#allocation6 + $0x1f0] sm:$0xff]
        %v3819 = vld [vmem:[#allocation6 + $0x230] sm:$0xff]
        %v3820 = vld [vmem:[#allocation6 + $0x238] sm:$0xff]
        %v3821 = vld [vmem:[#allocation6 + $0x240] sm:$0xff]
        %v3822 = vld [vmem:[#allocation6 + $0x280] sm:$0xff]
        %v3823 = vld [vmem:[#allocation6 + $0x288] sm:$0xff]
        %v3824 = vld [vmem:[#allocation6 + $0x290] sm:$0xff]
        %3826 = vset.pattern.permute.xlu0 0
        %3827 = vperm.xlu0 %3826, %v3625
        %v3828 = vpop.permute.xlu0 %3827
        %v3831 = vsel %vm2090, %v3623, 0
        %3833 = vmatprep.subr.mxu0 %v3799
        %3834 = vmatpush1.msra.mxu0 %v3798
        %3835 = vmatprep.subr.mxu0 %v3802
        %3836 = vmatpush1.msra.mxu0 %v3801
        %3837 = vmatprep.subr.mxu0 %v3805
        %3838 = vmatpush1.msra.mxu0 %v3804
        %3839 = vmatprep.subr.mxu0 %v3808
        %3840 = vmatpush1.msra.mxu0 %v3807
        %3841 = vmatprep.subr.mxu0 %v3811
        %3842 = vmatpush1.msra.mxu0 %v3810
        %3843 = vmatprep.subr.mxu0 %v3814
        %3844 = vmatpush1.msra.mxu0 %v3813
        %3845 = vmatprep.subr.mxu0 %v3817
        %3846 = vmatpush1.msra.mxu0 %v3816
        %3847 = vmatprep.subr.mxu0 %v3820
        %3848 = vmatpush1.msra.mxu0 %v3819
        %3849 = vmatprep.subr.mxu0 %v3823
        %3850 = vmatpush1.msra.mxu0 %v3822
        %3851 = vmatprep.subr.mxu0 0.0
        %3852 = vmatpush1.msra.mxu0 0.0
        %3853 = vmatprep.subr.mxu0 0.0
        %3854 = vmatpush1.msra.mxu0 0.0
        %3855 = vmatprep.subr.mxu0 0.0
        %3856 = vmatpush1.msra.mxu0 0.0
        %3857 = vmatprep.subr.mxu0 0.0
        %3858 = vmatpush1.msra.mxu0 0.0
        %3859 = vmatprep.subr.mxu0 0.0
        %3860 = vmatpush1.msra.mxu0 0.0
        %3861 = vmatprep.subr.mxu0 0.0
        %3862 = vmatpush1.msra.mxu0 0.0
        %3863 = vmatprep.subr.mxu0 0.0
        %3864 = vmatpush1.msra.mxu0 0.0
        %3865 = vmatprep.subr.mxu0 0.0
        %3866 = vmatpush1.msra.mxu0 0.0
        %3867 = vmatprep.subr.mxu0 0.0
        %3868 = vmatpush1.msra.mxu0 0.0
        %3869 = vmatprep.subr.mxu0 0.0
        %3870 = vmatpush1.msra.mxu0 0.0
        %3871 = vmatprep.subr.mxu0 0.0
        %3872 = vmatpush1.msra.mxu0 0.0
        %3873 = vmatprep.subr.mxu0 0.0
        %3874 = vmatpush1.msra.mxu0 0.0
        %3875 = vmatprep.subr.mxu0 0.0
        %3876 = vmatpush1.msra.mxu0 0.0
        %3877 = vmatprep.subr.mxu0 0.0
        %3878 = vmatpush1.msra.mxu0 0.0
        %3879 = vmatprep.subr.mxu0 0.0
        %3880 = vmatpush1.msra.mxu0 0.0
        %3881 = vmatprep.subr.mxu0 0.0
        %3882 = vmatpush1.msra.mxu0 0.0
        %3883 = vmatprep.subr.mxu0 0.0
        %3884 = vmatpush1.msra.mxu0 0.0
        %3885 = vmatprep.subr.mxu0 0.0
        %3886 = vmatpush1.msra.mxu0 0.0
        %3887 = vmatprep.subr.mxu0 0.0
        %3888 = vmatpush1.msra.mxu0 0.0
        %3889 = vmatprep.subr.mxu0 0.0
        %3890 = vmatpush1.msra.mxu0 0.0
        %3891 = vmatprep.subr.mxu0 0.0
        %3892 = vmatpush1.msra.mxu0 0.0
        %3893 = vmatprep.subr.mxu0 0.0
        %3894 = vmatpush1.msra.mxu0 0.0
        %3895 = vmatprep.subr.mxu0 0.0
        %3896 = vmatpush1.msra.mxu0 0.0
        %3897 = vmatprep.mubr.f32.mxu0 0.0
        %3898 = vmatmul.mubr.f32.gmra.mrb[0].mxu0 %v3831
        %v3899 = vpop.f32.mrb[0].mxu0
        %v3900 = vadd.f32 %v3828, %v3899
        %v3901 = vpop.f32.mrb[0].mxu0
        %v3902 = vadd.f32 %v3828, %v3901
        %3903 = vdwg.mxu0
        %3904 = vmatprep.subr.mxu0 0.0
        %3905 = vmatpush1.msra.mxu0 %v3800
        %3906 = vmatprep.subr.mxu0 0.0
        %3907 = vmatpush1.msra.mxu0 %v3803
        %3908 = vmatprep.subr.mxu0 0.0
        %3909 = vmatpush1.msra.mxu0 %v3806
        %3910 = vmatprep.subr.mxu0 0.0
        %3911 = vmatpush1.msra.mxu0 %v3809
        %3912 = vmatprep.subr.mxu0 0.0
        %3913 = vmatpush1.msra.mxu0 %v3812
        %3914 = vmatprep.subr.mxu0 0.0
        %3915 = vmatpush1.msra.mxu0 %v3815
        %3916 = vmatprep.subr.mxu0 0.0
        %3917 = vmatpush1.msra.mxu0 %v3818
        %3918 = vmatprep.subr.mxu0 0.0
        %3919 = vmatpush1.msra.mxu0 %v3821
        %3920 = vmatprep.subr.mxu0 0.0
        %3921 = vmatpush1.msra.mxu0 %v3824
        %3922 = vmatprep.subr.mxu0 0.0
        %3923 = vmatpush1.msra.mxu0 0.0
        %3924 = vmatprep.subr.mxu0 0.0
        %3925 = vmatpush1.msra.mxu0 0.0
        %3926 = vmatprep.subr.mxu0 0.0
        %3927 = vmatpush1.msra.mxu0 0.0
        %3928 = vmatprep.subr.mxu0 0.0
        %3929 = vmatpush1.msra.mxu0 0.0
        %3930 = vmatprep.subr.mxu0 0.0
        %3931 = vmatpush1.msra.mxu0 0.0
        %3932 = vmatprep.subr.mxu0 0.0
        %3933 = vmatpush1.msra.mxu0 0.0
        %3934 = vmatprep.subr.mxu0 0.0
        %3935 = vmatpush1.msra.mxu0 0.0
        %3936 = vmatprep.subr.mxu0 0.0
        %3937 = vmatpush1.msra.mxu0 0.0
        %3938 = vmatprep.subr.mxu0 0.0
        %3939 = vmatpush1.msra.mxu0 0.0
        %3940 = vmatprep.subr.mxu0 0.0
        %3941 = vmatpush1.msra.mxu0 0.0
        %3942 = vmatprep.subr.mxu0 0.0
        %3943 = vmatpush1.msra.mxu0 0.0
        %3944 = vmatprep.subr.mxu0 0.0
        %3945 = vmatpush1.msra.mxu0 0.0
        %3946 = vmatprep.subr.mxu0 0.0
        %3947 = vmatpush1.msra.mxu0 0.0
        %3948 = vmatprep.subr.mxu0 0.0
        %3949 = vmatpush1.msra.mxu0 0.0
        %3950 = vmatprep.subr.mxu0 0.0
        %3951 = vmatpush1.msra.mxu0 0.0
        %3952 = vmatprep.subr.mxu0 0.0
        %3953 = vmatpush1.msra.mxu0 0.0
        %3954 = vmatprep.subr.mxu0 0.0
        %3955 = vmatpush1.msra.mxu0 0.0
        %3956 = vmatprep.subr.mxu0 0.0
        %3957 = vmatpush1.msra.mxu0 0.0
        %3958 = vmatprep.subr.mxu0 0.0
        %3959 = vmatpush1.msra.mxu0 0.0
        %3960 = vmatprep.subr.mxu0 0.0
        %3961 = vmatpush1.msra.mxu0 0.0
        %3962 = vmatprep.subr.mxu0 0.0
        %3963 = vmatpush1.msra.mxu0 0.0
        %3964 = vmatprep.subr.mxu0 0.0
        %3965 = vmatpush1.msra.mxu0 0.0
        %3966 = vmatprep.subr.mxu0 0.0
        %3967 = vmatpush1.msra.mxu0 0.0
        %3968 = vmatprep.mubr.f32.mxu0 0.0
        %3969 = vmatmul.mubr.f32.gmra.mrb[0].mxu0 %v3831
        %v3970 = vpop.f32.mrb[0].mxu0
        %v3971 = vadd.f32 %v3828, %v3970
        %v3972 = vpop.f32.mrb[0].mxu0
        %3973 = vdwg.mxu0
        %v3975 = vlaneseq
        %v3976 = vshrl.u32 %v3975, 7
        %v3977 = vsub.s32 0, %v3976
        %v3978 = vrot.slane %v1412, %v3977
        %v3979 = vlaneseq
        %v3980 = vshrl.u32 %v3979, 7
        %v3981 = vsub.s32 1, %v3980
        %v3982 = vrot.slane %v1412, %v3981
        %v3983 = vlaneseq
        %v3984 = vshrl.u32 %v3983, 7
        %v3985 = vsub.s32 2, %v3984
        %v3986 = vrot.slane %v1412, %v3985
        %v3990 = vmul.f32 %v3900, %v3978
        %v3991 = vmul.f32 %v3902, %v3982
        %v3992 = vmul.f32 %v3971, %v3986
        %3996 = vrot.lane.b32.xlu0 %v3990, 19
        %v3997 = vpop.permute.xlu0 %3996
        %3998 = vrot.lane.b32.xlu0 %v3991, 19
        %v3999 = vpop.permute.xlu0 %3998
        %4000 = vrot.lane.b32.xlu0 %v3992, 19
        %v4001 = vpop.permute.xlu0 %4000
        %v4002 = vsel %vm3611, %v3997, %v3999
        %v4003 = vsel %vm3611, %v3999, %v4001
        %4007 = vst.msk [vmem:[#allocation4] sm:$0xff] %vm3617, %v3997
        %4008 = vst [vmem:[#allocation4 + $0x8] sm:$0xff] %v4002
        %4009 = vst.msk [vmem:[#allocation4 + $0x10] sm:$0xff] %vm3620, %v4003
        %s4010 = scalar_lea.vmem %s1, 16
        %v4011 = vld [vmem:[%s4010] sm:$0xff]
        %s4012 = scalar_lea.vmem %s2, 16
        %v4013 = vld [vmem:[%s4012] sm:$0xff]
        %v4014 = vld [vmem:[#allocation4] sm:$0xff]
        %v4015 = vld [vmem:[#allocation4 + $0x8] sm:$0xff]
        %v4016 = vld [vmem:[#allocation4 + $0x10] sm:$0xff]
        %4017 = vst [vmem:[#allocation6] sm:$0xff] %v4014
        %4018 = vst [vmem:[#allocation6 + $0x8] sm:$0xff] %v4015
        %4019 = vst.msk [vmem:[#allocation6 + $0x10] sm:$0xff] %vm3631, %v4016
        %v4020 = vld [vmem:[#allocation4] sm:$0xff]
        %v4021 = vld [vmem:[#allocation4 + $0x8] sm:$0xff]
        %v4022 = vld [vmem:[#allocation4 + $0x10] sm:$0xff]
        %4026 = vrot.lane.b32.xlu0 %v4020, 127
        %v4027 = vpop.permute.xlu0 %4026
        %4028 = vrot.lane.b32.xlu0 %v4021, 127
        %v4029 = vpop.permute.xlu0 %4028
        %4030 = vrot.lane.b32.xlu0 %v4022, 127
        %v4031 = vpop.permute.xlu0 %4030
        %v4032 = vsel %vm1475, %v4027, %v4029
        %v4033 = vsel %vm1475, %v4029, %v4031
        %4037 = vst [vmem:[#allocation6 + $0x50] sm:$0xff] %v4032
        %4038 = vst [vmem:[#allocation6 + $0x58] sm:$0xff] %v4033
        %4039 = vst.msk [vmem:[#allocation6 + $0x60] sm:$0xff] %vm3631, %v4031
        %v4040 = vld [vmem:[#allocation4] sm:$0xff]
        %v4041 = vld [vmem:[#allocation4 + $0x8] sm:$0xff]
        %v4042 = vld [vmem:[#allocation4 + $0x10] sm:$0xff]
        %4046 = vrot.lane.b32.xlu0 %v4040, 126
        %v4047 = vpop.permute.xlu0 %4046
        %4048 = vrot.lane.b32.xlu0 %v4041, 126
        %v4049 = vpop.permute.xlu0 %4048
        %4050 = vrot.lane.b32.xlu0 %v4042, 126
        %v4051 = vpop.permute.xlu0 %4050
        %v4052 = vsel %vm1545, %v4047, %v4049
        %v4053 = vsel %vm1545, %v4049, %v4051
        %4057 = vst [vmem:[#allocation6 + $0xa0] sm:$0xff] %v4052
        %4058 = vst [vmem:[#allocation6 + $0xa8] sm:$0xff] %v4053
        %4059 = vst.msk [vmem:[#allocation6 + $0xb0] sm:$0xff] %vm3631, %v4051
        %v4060 = vld [vmem:[#allocation4] sm:$0xff]
        %v4061 = vld [vmem:[#allocation4 + $0x8] sm:$0xff]
        %v4062 = vld [vmem:[#allocation4 + $0x10] sm:$0xff]
        %4066 = vrot.lane.b32.xlu0 %v4060, 110
        %v4067 = vpop.permute.xlu0 %4066
        %4068 = vrot.lane.b32.xlu0 %v4061, 110
        %v4069 = vpop.permute.xlu0 %4068
        %4070 = vrot.lane.b32.xlu0 %v4062, 110
        %v4071 = vpop.permute.xlu0 %4070
        %v4072 = vsel %vm3685, %v4067, %v4069
        %v4073 = vsel %vm3685, %v4069, %v4071
        %4077 = vst [vmem:[#allocation6 + $0xf0] sm:$0xff] %v4072
        %4078 = vst [vmem:[#allocation6 + $0xf8] sm:$0xff] %v4073
        %4079 = vst.msk [vmem:[#allocation6 + $0x100] sm:$0xff] %vm3631, %v4071
        %v4080 = vld [vmem:[#allocation4] sm:$0xff]
        %v4081 = vld [vmem:[#allocation4 + $0x8] sm:$0xff]
        %v4082 = vld [vmem:[#allocation4 + $0x10] sm:$0xff]
        %4086 = vrot.lane.b32.xlu0 %v4080, 109
        %v4087 = vpop.permute.xlu0 %4086
        %4088 = vrot.lane.b32.xlu0 %v4081, 109
        %v4089 = vpop.permute.xlu0 %4088
        %4090 = vrot.lane.b32.xlu0 %v4082, 109
        %v4091 = vpop.permute.xlu0 %4090
        %v4092 = vsel %vm3706, %v4087, %v4089
        %v4093 = vsel %vm3706, %v4089, %v4091
        %4097 = vst [vmem:[#allocation6 + $0x140] sm:$0xff] %v4092
        %4098 = vst [vmem:[#allocation6 + $0x148] sm:$0xff] %v4093
        %4099 = vst.msk [vmem:[#allocation6 + $0x150] sm:$0xff] %vm3631, %v4091
        %v4100 = vld [vmem:[#allocation4] sm:$0xff]
        %v4101 = vld [vmem:[#allocation4 + $0x8] sm:$0xff]
        %v4102 = vld [vmem:[#allocation4 + $0x10] sm:$0xff]
        %4106 = vrot.lane.b32.xlu0 %v4100, 108
        %v4107 = vpop.permute.xlu0 %4106
        %4108 = vrot.lane.b32.xlu0 %v4101, 108
        %v4109 = vpop.permute.xlu0 %4108
        %4110 = vrot.lane.b32.xlu0 %v4102, 108
        %v4111 = vpop.permute.xlu0 %4110
        %v4112 = vsel %vm3727, %v4107, %v4109
        %v4113 = vsel %vm3727, %v4109, %v4111
        %4117 = vst [vmem:[#allocation6 + $0x190] sm:$0xff] %v4112
        %4118 = vst [vmem:[#allocation6 + $0x198] sm:$0xff] %v4113
        %4119 = vst.msk [vmem:[#allocation6 + $0x1a0] sm:$0xff] %vm3631, %v4111
        %v4120 = vld [vmem:[#allocation4] sm:$0xff]
        %v4121 = vld [vmem:[#allocation4 + $0x8] sm:$0xff]
        %v4122 = vld [vmem:[#allocation4 + $0x10] sm:$0xff]
        %4126 = vrot.lane.b32.xlu0 %v4120, 92
        %v4127 = vpop.permute.xlu0 %4126
        %4128 = vrot.lane.b32.xlu0 %v4121, 92
        %v4129 = vpop.permute.xlu0 %4128
        %4130 = vrot.lane.b32.xlu0 %v4122, 92
        %v4131 = vpop.permute.xlu0 %4130
        %v4132 = vsel %vm1755, %v4127, %v4129
        %v4133 = vsel %vm1755, %v4129, %v4131
        %4137 = vst [vmem:[#allocation6 + $0x1e0] sm:$0xff] %v4132
        %4138 = vst [vmem:[#allocation6 + $0x1e8] sm:$0xff] %v4133
        %4139 = vst.msk [vmem:[#allocation6 + $0x1f0] sm:$0xff] %vm3631, %v4131
        %v4140 = vld [vmem:[#allocation4] sm:$0xff]
        %v4141 = vld [vmem:[#allocation4 + $0x8] sm:$0xff]
        %v4142 = vld [vmem:[#allocation4 + $0x10] sm:$0xff]
        %4146 = vrot.lane.b32.xlu0 %v4140, 91
        %v4147 = vpop.permute.xlu0 %4146
        %4148 = vrot.lane.b32.xlu0 %v4141, 91
        %v4149 = vpop.permute.xlu0 %4148
        %4150 = vrot.lane.b32.xlu0 %v4142, 91
        %v4151 = vpop.permute.xlu0 %4150
        %v4152 = vsel %vm3768, %v4147, %v4149
        %v4153 = vsel %vm3768, %v4149, %v4151
        %4157 = vst [vmem:[#allocation6 + $0x230] sm:$0xff] %v4152
        %4158 = vst [vmem:[#allocation6 + $0x238] sm:$0xff] %v4153
        %4159 = vst.msk [vmem:[#allocation6 + $0x240] sm:$0xff] %vm3631, %v4151
        %v4160 = vld [vmem:[#allocation4] sm:$0xff]
        %v4161 = vld [vmem:[#allocation4 + $0x8] sm:$0xff]
        %v4162 = vld [vmem:[#allocation4 + $0x10] sm:$0xff]
        %4166 = vrot.lane.b32.xlu0 %v4160, 90
        %v4167 = vpop.permute.xlu0 %4166
        %4168 = vrot.lane.b32.xlu0 %v4161, 90
        %v4169 = vpop.permute.xlu0 %4168
        %4170 = vrot.lane.b32.xlu0 %v4162, 90
        %v4171 = vpop.permute.xlu0 %4170
        %v4172 = vsel %vm3789, %v4167, %v4169
        %v4173 = vsel %vm3789, %v4169, %v4171
        %4177 = vst [vmem:[#allocation6 + $0x280] sm:$0xff] %v4172
        %4178 = vst [vmem:[#allocation6 + $0x288] sm:$0xff] %v4173
        %4179 = vst.msk [vmem:[#allocation6 + $0x290] sm:$0xff] %vm3631, %v4171
        %v4180 = vld [vmem:[#allocation6] sm:$0xff]
        %v4181 = vld [vmem:[#allocation6 + $0x8] sm:$0xff]
        %v4182 = vld [vmem:[#allocation6 + $0x10] sm:$0xff]
        %v4183 = vld [vmem:[#allocation6 + $0x50] sm:$0xff]
        %v4184 = vld [vmem:[#allocation6 + $0x58] sm:$0xff]
        %v4185 = vld [vmem:[#allocation6 + $0x60] sm:$0xff]
        %v4186 = vld [vmem:[#allocation6 + $0xa0] sm:$0xff]
        %v4187 = vld [vmem:[#allocation6 + $0xa8] sm:$0xff]
        %v4188 = vld [vmem:[#allocation6 + $0xb0] sm:$0xff]
        %v4189 = vld [vmem:[#allocation6 + $0xf0] sm:$0xff]
        %v4190 = vld [vmem:[#allocation6 + $0xf8] sm:$0xff]
        %v4191 = vld [vmem:[#allocation6 + $0x100] sm:$0xff]
        %v4192 = vld [vmem:[#allocation6 + $0x140] sm:$0xff]
        %v4193 = vld [vmem:[#allocation6 + $0x148] sm:$0xff]
        %v4194 = vld [vmem:[#allocation6 + $0x150] sm:$0xff]
        %v4195 = vld [vmem:[#allocation6 + $0x190] sm:$0xff]
        %v4196 = vld [vmem:[#allocation6 + $0x198] sm:$0xff]
        %v4197 = vld [vmem:[#allocation6 + $0x1a0] sm:$0xff]
        %v4198 = vld [vmem:[#allocation6 + $0x1e0] sm:$0xff]
        %v4199 = vld [vmem:[#allocation6 + $0x1e8] sm:$0xff]
        %v4200 = vld [vmem:[#allocation6 + $0x1f0] sm:$0xff]
        %v4201 = vld [vmem:[#allocation6 + $0x230] sm:$0xff]
        %v4202 = vld [vmem:[#allocation6 + $0x238] sm:$0xff]
        %v4203 = vld [vmem:[#allocation6 + $0x240] sm:$0xff]
        %v4204 = vld [vmem:[#allocation6 + $0x280] sm:$0xff]
        %v4205 = vld [vmem:[#allocation6 + $0x288] sm:$0xff]
        %v4206 = vld [vmem:[#allocation6 + $0x290] sm:$0xff]
        %4208 = vset.pattern.permute.xlu0 0
        %4209 = vperm.xlu0 %4208, %v4013
        %v4210 = vpop.permute.xlu0 %4209
        %v4213 = vsel %vm2090, %v4011, 0
        %4215 = vmatprep.subr.mxu0 %v4181
        %4216 = vmatpush1.msra.mxu0 %v4180
        %4217 = vmatprep.subr.mxu0 %v4184
        %4218 = vmatpush1.msra.mxu0 %v4183
        %4219 = vmatprep.subr.mxu0 %v4187
        %4220 = vmatpush1.msra.mxu0 %v4186
        %4221 = vmatprep.subr.mxu0 %v4190
        %4222 = vmatpush1.msra.mxu0 %v4189
        %4223 = vmatprep.subr.mxu0 %v4193
        %4224 = vmatpush1.msra.mxu0 %v4192
        %4225 = vmatprep.subr.mxu0 %v4196
        %4226 = vmatpush1.msra.mxu0 %v4195
        %4227 = vmatprep.subr.mxu0 %v4199
        %4228 = vmatpush1.msra.mxu0 %v4198
        %4229 = vmatprep.subr.mxu0 %v4202
        %4230 = vmatpush1.msra.mxu0 %v4201
        %4231 = vmatprep.subr.mxu0 %v4205
        %4232 = vmatpush1.msra.mxu0 %v4204
        %4233 = vmatprep.subr.mxu0 0.0
        %4234 = vmatpush1.msra.mxu0 0.0
        %4235 = vmatprep.subr.mxu0 0.0
        %4236 = vmatpush1.msra.mxu0 0.0
        %4237 = vmatprep.subr.mxu0 0.0
        %4238 = vmatpush1.msra.mxu0 0.0
        %4239 = vmatprep.subr.mxu0 0.0
        %4240 = vmatpush1.msra.mxu0 0.0
        %4241 = vmatprep.subr.mxu0 0.0
        %4242 = vmatpush1.msra.mxu0 0.0
        %4243 = vmatprep.subr.mxu0 0.0
        %4244 = vmatpush1.msra.mxu0 0.0
        %4245 = vmatprep.subr.mxu0 0.0
        %4246 = vmatpush1.msra.mxu0 0.0
        %4247 = vmatprep.subr.mxu0 0.0
        %4248 = vmatpush1.msra.mxu0 0.0
        %4249 = vmatprep.subr.mxu0 0.0
        %4250 = vmatpush1.msra.mxu0 0.0
        %4251 = vmatprep.subr.mxu0 0.0
        %4252 = vmatpush1.msra.mxu0 0.0
        %4253 = vmatprep.subr.mxu0 0.0
        %4254 = vmatpush1.msra.mxu0 0.0
        %4255 = vmatprep.subr.mxu0 0.0
        %4256 = vmatpush1.msra.mxu0 0.0
        %4257 = vmatprep.subr.mxu0 0.0
        %4258 = vmatpush1.msra.mxu0 0.0
        %4259 = vmatprep.subr.mxu0 0.0
        %4260 = vmatpush1.msra.mxu0 0.0
        %4261 = vmatprep.subr.mxu0 0.0
        %4262 = vmatpush1.msra.mxu0 0.0
        %4263 = vmatprep.subr.mxu0 0.0
        %4264 = vmatpush1.msra.mxu0 0.0
        %4265 = vmatprep.subr.mxu0 0.0
        %4266 = vmatpush1.msra.mxu0 0.0
        %4267 = vmatprep.subr.mxu0 0.0
        %4268 = vmatpush1.msra.mxu0 0.0
        %4269 = vmatprep.subr.mxu0 0.0
        %4270 = vmatpush1.msra.mxu0 0.0
        %4271 = vmatprep.subr.mxu0 0.0
        %4272 = vmatpush1.msra.mxu0 0.0
        %4273 = vmatprep.subr.mxu0 0.0
        %4274 = vmatpush1.msra.mxu0 0.0
        %4275 = vmatprep.subr.mxu0 0.0
        %4276 = vmatpush1.msra.mxu0 0.0
        %4277 = vmatprep.subr.mxu0 0.0
        %4278 = vmatpush1.msra.mxu0 0.0
        %4279 = vmatprep.mubr.f32.mxu0 0.0
        %4280 = vmatmul.mubr.f32.gmra.mrb[0].mxu0 %v4213
        %v4281 = vpop.f32.mrb[0].mxu0
        %v4282 = vadd.f32 %v4210, %v4281
        %v4283 = vpop.f32.mrb[0].mxu0
        %v4284 = vadd.f32 %v4210, %v4283
        %4285 = vdwg.mxu0
        %4286 = vmatprep.subr.mxu0 0.0
        %4287 = vmatpush1.msra.mxu0 %v4182
        %4288 = vmatprep.subr.mxu0 0.0
        %4289 = vmatpush1.msra.mxu0 %v4185
        %4290 = vmatprep.subr.mxu0 0.0
        %4291 = vmatpush1.msra.mxu0 %v4188
        %4292 = vmatprep.subr.mxu0 0.0
        %4293 = vmatpush1.msra.mxu0 %v4191
        %4294 = vmatprep.subr.mxu0 0.0
        %4295 = vmatpush1.msra.mxu0 %v4194
        %4296 = vmatprep.subr.mxu0 0.0
        %4297 = vmatpush1.msra.mxu0 %v4197
        %4298 = vmatprep.subr.mxu0 0.0
        %4299 = vmatpush1.msra.mxu0 %v4200
        %4300 = vmatprep.subr.mxu0 0.0
        %4301 = vmatpush1.msra.mxu0 %v4203
        %4302 = vmatprep.subr.mxu0 0.0
        %4303 = vmatpush1.msra.mxu0 %v4206
        %4304 = vmatprep.subr.mxu0 0.0
        %4305 = vmatpush1.msra.mxu0 0.0
        %4306 = vmatprep.subr.mxu0 0.0
        %4307 = vmatpush1.msra.mxu0 0.0
        %4308 = vmatprep.subr.mxu0 0.0
        %4309 = vmatpush1.msra.mxu0 0.0
        %4310 = vmatprep.subr.mxu0 0.0
        %4311 = vmatpush1.msra.mxu0 0.0
        %4312 = vmatprep.subr.mxu0 0.0
        %4313 = vmatpush1.msra.mxu0 0.0
        %4314 = vmatprep.subr.mxu0 0.0
        %4315 = vmatpush1.msra.mxu0 0.0
        %4316 = vmatprep.subr.mxu0 0.0
        %4317 = vmatpush1.msra.mxu0 0.0
        %4318 = vmatprep.subr.mxu0 0.0
        %4319 = vmatpush1.msra.mxu0 0.0
        %4320 = vmatprep.subr.mxu0 0.0
        %4321 = vmatpush1.msra.mxu0 0.0
        %4322 = vmatprep.subr.mxu0 0.0
        %4323 = vmatpush1.msra.mxu0 0.0
        %4324 = vmatprep.subr.mxu0 0.0
        %4325 = vmatpush1.msra.mxu0 0.0
        %4326 = vmatprep.subr.mxu0 0.0
        %4327 = vmatpush1.msra.mxu0 0.0
        %4328 = vmatprep.subr.mxu0 0.0
        %4329 = vmatpush1.msra.mxu0 0.0
        %4330 = vmatprep.subr.mxu0 0.0
        %4331 = vmatpush1.msra.mxu0 0.0
        %4332 = vmatprep.subr.mxu0 0.0
        %4333 = vmatpush1.msra.mxu0 0.0
        %4334 = vmatprep.subr.mxu0 0.0
        %4335 = vmatpush1.msra.mxu0 0.0
        %4336 = vmatprep.subr.mxu0 0.0
        %4337 = vmatpush1.msra.mxu0 0.0
        %4338 = vmatprep.subr.mxu0 0.0
        %4339 = vmatpush1.msra.mxu0 0.0
        %4340 = vmatprep.subr.mxu0 0.0
        %4341 = vmatpush1.msra.mxu0 0.0
        %4342 = vmatprep.subr.mxu0 0.0
        %4343 = vmatpush1.msra.mxu0 0.0
        %4344 = vmatprep.subr.mxu0 0.0
        %4345 = vmatpush1.msra.mxu0 0.0
        %4346 = vmatprep.subr.mxu0 0.0
        %4347 = vmatpush1.msra.mxu0 0.0
        %4348 = vmatprep.subr.mxu0 0.0
        %4349 = vmatpush1.msra.mxu0 0.0
        %4350 = vmatprep.mubr.f32.mxu0 0.0
        %4351 = vmatmul.mubr.f32.gmra.mrb[0].mxu0 %v4213
        %v4352 = vpop.f32.mrb[0].mxu0
        %v4353 = vadd.f32 %v4210, %v4352
        %v4354 = vpop.f32.mrb[0].mxu0
        %4355 = vdwg.mxu0
        %v4356 = vmax.f32 %v4282, 0.0
        %v4357 = vmax.f32 %v4284, 0.0
        %v4358 = vmax.f32 %v4353, 0.0
        %v4359 = vmul.f32 %v4356, %v3978
        %v4360 = vmul.f32 %v4357, %v3982
        %v4361 = vmul.f32 %v4358, %v3986
        %4365 = vrot.lane.b32.xlu0 %v4359, 19
        %v4366 = vpop.permute.xlu0 %4365
        %4367 = vrot.lane.b32.xlu0 %v4360, 19
        %v4368 = vpop.permute.xlu0 %4367
        %4369 = vrot.lane.b32.xlu0 %v4361, 19
        %v4370 = vpop.permute.xlu0 %4369
        %v4371 = vsel %vm3611, %v4366, %v4368
        %v4372 = vsel %vm3611, %v4368, %v4370
        %4376 = vst.msk [vmem:[#allocation5] sm:$0xff] %vm3617, %v4366
        %4377 = vst [vmem:[#allocation5 + $0x8] sm:$0xff] %v4371
        %4378 = vst.msk [vmem:[#allocation5 + $0x10] sm:$0xff] %vm3620, %v4372
        %s4379 = scalar_lea.vmem %s1, 24
        %v4380 = vld [vmem:[%s4379] sm:$0xff]
        %s4381 = scalar_lea.vmem %s2, 24
        %v4382 = vld [vmem:[%s4381] sm:$0xff]
        %v4383 = vld [vmem:[#allocation5] sm:$0xff]
        %v4384 = vld [vmem:[#allocation5 + $0x8] sm:$0xff]
        %v4385 = vld [vmem:[#allocation5 + $0x10] sm:$0xff]
        %4386 = vst [vmem:[#allocation6] sm:$0xff] %v4383
        %4387 = vst [vmem:[#allocation6 + $0x8] sm:$0xff] %v4384
        %4388 = vst.msk [vmem:[#allocation6 + $0x10] sm:$0xff] %vm3631, %v4385
        %v4389 = vld [vmem:[#allocation5] sm:$0xff]
        %v4390 = vld [vmem:[#allocation5 + $0x8] sm:$0xff]
        %v4391 = vld [vmem:[#allocation5 + $0x10] sm:$0xff]
        %4395 = vrot.lane.b32.xlu0 %v4389, 127
        %v4396 = vpop.permute.xlu0 %4395
        %4397 = vrot.lane.b32.xlu0 %v4390, 127
        %v4398 = vpop.permute.xlu0 %4397
        %4399 = vrot.lane.b32.xlu0 %v4391, 127
        %v4400 = vpop.permute.xlu0 %4399
        %v4401 = vsel %vm1475, %v4396, %v4398
        %v4402 = vsel %vm1475, %v4398, %v4400
        %4406 = vst [vmem:[#allocation6 + $0x50] sm:$0xff] %v4401
        %4407 = vst [vmem:[#allocation6 + $0x58] sm:$0xff] %v4402
        %4408 = vst.msk [vmem:[#allocation6 + $0x60] sm:$0xff] %vm3631, %v4400
        %v4409 = vld [vmem:[#allocation5] sm:$0xff]
        %v4410 = vld [vmem:[#allocation5 + $0x8] sm:$0xff]
        %v4411 = vld [vmem:[#allocation5 + $0x10] sm:$0xff]
        %4415 = vrot.lane.b32.xlu0 %v4409, 126
        %v4416 = vpop.permute.xlu0 %4415
        %4417 = vrot.lane.b32.xlu0 %v4410, 126
        %v4418 = vpop.permute.xlu0 %4417
        %4419 = vrot.lane.b32.xlu0 %v4411, 126
        %v4420 = vpop.permute.xlu0 %4419
        %v4421 = vsel %vm1545, %v4416, %v4418
        %v4422 = vsel %vm1545, %v4418, %v4420
        %4426 = vst [vmem:[#allocation6 + $0xa0] sm:$0xff] %v4421
        %4427 = vst [vmem:[#allocation6 + $0xa8] sm:$0xff] %v4422
        %4428 = vst.msk [vmem:[#allocation6 + $0xb0] sm:$0xff] %vm3631, %v4420
        %v4429 = vld [vmem:[#allocation5] sm:$0xff]
        %v4430 = vld [vmem:[#allocation5 + $0x8] sm:$0xff]
        %v4431 = vld [vmem:[#allocation5 + $0x10] sm:$0xff]
        %4435 = vrot.lane.b32.xlu0 %v4429, 110
        %v4436 = vpop.permute.xlu0 %4435
        %4437 = vrot.lane.b32.xlu0 %v4430, 110
        %v4438 = vpop.permute.xlu0 %4437
        %4439 = vrot.lane.b32.xlu0 %v4431, 110
        %v4440 = vpop.permute.xlu0 %4439
        %v4441 = vsel %vm3685, %v4436, %v4438
        %v4442 = vsel %vm3685, %v4438, %v4440
        %4446 = vst [vmem:[#allocation6 + $0xf0] sm:$0xff] %v4441
        %4447 = vst [vmem:[#allocation6 + $0xf8] sm:$0xff] %v4442
        %4448 = vst.msk [vmem:[#allocation6 + $0x100] sm:$0xff] %vm3631, %v4440
        %v4449 = vld [vmem:[#allocation5] sm:$0xff]
        %v4450 = vld [vmem:[#allocation5 + $0x8] sm:$0xff]
        %v4451 = vld [vmem:[#allocation5 + $0x10] sm:$0xff]
        %4455 = vrot.lane.b32.xlu0 %v4449, 109
        %v4456 = vpop.permute.xlu0 %4455
        %4457 = vrot.lane.b32.xlu0 %v4450, 109
        %v4458 = vpop.permute.xlu0 %4457
        %4459 = vrot.lane.b32.xlu0 %v4451, 109
        %v4460 = vpop.permute.xlu0 %4459
        %v4461 = vsel %vm3706, %v4456, %v4458
        %v4462 = vsel %vm3706, %v4458, %v4460
        %4466 = vst [vmem:[#allocation6 + $0x140] sm:$0xff] %v4461
        %4467 = vst [vmem:[#allocation6 + $0x148] sm:$0xff] %v4462
        %4468 = vst.msk [vmem:[#allocation6 + $0x150] sm:$0xff] %vm3631, %v4460
        %v4469 = vld [vmem:[#allocation5] sm:$0xff]
        %v4470 = vld [vmem:[#allocation5 + $0x8] sm:$0xff]
        %v4471 = vld [vmem:[#allocation5 + $0x10] sm:$0xff]
        %4475 = vrot.lane.b32.xlu0 %v4469, 108
        %v4476 = vpop.permute.xlu0 %4475
        %4477 = vrot.lane.b32.xlu0 %v4470, 108
        %v4478 = vpop.permute.xlu0 %4477
        %4479 = vrot.lane.b32.xlu0 %v4471, 108
        %v4480 = vpop.permute.xlu0 %4479
        %v4481 = vsel %vm3727, %v4476, %v4478
        %v4482 = vsel %vm3727, %v4478, %v4480
        %4486 = vst [vmem:[#allocation6 + $0x190] sm:$0xff] %v4481
        %4487 = vst [vmem:[#allocation6 + $0x198] sm:$0xff] %v4482
        %4488 = vst.msk [vmem:[#allocation6 + $0x1a0] sm:$0xff] %vm3631, %v4480
        %v4489 = vld [vmem:[#allocation5] sm:$0xff]
        %v4490 = vld [vmem:[#allocation5 + $0x8] sm:$0xff]
        %v4491 = vld [vmem:[#allocation5 + $0x10] sm:$0xff]
        %4495 = vrot.lane.b32.xlu0 %v4489, 92
        %v4496 = vpop.permute.xlu0 %4495
        %4497 = vrot.lane.b32.xlu0 %v4490, 92
        %v4498 = vpop.permute.xlu0 %4497
        %4499 = vrot.lane.b32.xlu0 %v4491, 92
        %v4500 = vpop.permute.xlu0 %4499
        %v4501 = vsel %vm1755, %v4496, %v4498
        %v4502 = vsel %vm1755, %v4498, %v4500
        %4506 = vst [vmem:[#allocation6 + $0x1e0] sm:$0xff] %v4501
        %4507 = vst [vmem:[#allocation6 + $0x1e8] sm:$0xff] %v4502
        %4508 = vst.msk [vmem:[#allocation6 + $0x1f0] sm:$0xff] %vm3631, %v4500
        %v4509 = vld [vmem:[#allocation5] sm:$0xff]
        %v4510 = vld [vmem:[#allocation5 + $0x8] sm:$0xff]
        %v4511 = vld [vmem:[#allocation5 + $0x10] sm:$0xff]
        %4515 = vrot.lane.b32.xlu0 %v4509, 91
        %v4516 = vpop.permute.xlu0 %4515
        %4517 = vrot.lane.b32.xlu0 %v4510, 91
        %v4518 = vpop.permute.xlu0 %4517
        %4519 = vrot.lane.b32.xlu0 %v4511, 91
        %v4520 = vpop.permute.xlu0 %4519
        %v4521 = vsel %vm3768, %v4516, %v4518
        %v4522 = vsel %vm3768, %v4518, %v4520
        %4526 = vst [vmem:[#allocation6 + $0x230] sm:$0xff] %v4521
        %4527 = vst [vmem:[#allocation6 + $0x238] sm:$0xff] %v4522
        %4528 = vst.msk [vmem:[#allocation6 + $0x240] sm:$0xff] %vm3631, %v4520
        %v4529 = vld [vmem:[#allocation5] sm:$0xff]
        %v4530 = vld [vmem:[#allocation5 + $0x8] sm:$0xff]
        %v4531 = vld [vmem:[#allocation5 + $0x10] sm:$0xff]
        %4535 = vrot.lane.b32.xlu0 %v4529, 90
        %v4536 = vpop.permute.xlu0 %4535
        %4537 = vrot.lane.b32.xlu0 %v4530, 90
        %v4538 = vpop.permute.xlu0 %4537
        %4539 = vrot.lane.b32.xlu0 %v4531, 90
        %v4540 = vpop.permute.xlu0 %4539
        %v4541 = vsel %vm3789, %v4536, %v4538
        %v4542 = vsel %vm3789, %v4538, %v4540
        %4546 = vst [vmem:[#allocation6 + $0x280] sm:$0xff] %v4541
        %4547 = vst [vmem:[#allocation6 + $0x288] sm:$0xff] %v4542
        %4548 = vst.msk [vmem:[#allocation6 + $0x290] sm:$0xff] %vm3631, %v4540
        %v4549 = vld [vmem:[#allocation6] sm:$0xff]
        %v4550 = vld [vmem:[#allocation6 + $0x8] sm:$0xff]
        %v4551 = vld [vmem:[#allocation6 + $0x10] sm:$0xff]
        %v4552 = vld [vmem:[#allocation6 + $0x50] sm:$0xff]
        %v4553 = vld [vmem:[#allocation6 + $0x58] sm:$0xff]
        %v4554 = vld [vmem:[#allocation6 + $0x60] sm:$0xff]
        %v4555 = vld [vmem:[#allocation6 + $0xa0] sm:$0xff]
        %v4556 = vld [vmem:[#allocation6 + $0xa8] sm:$0xff]
        %v4557 = vld [vmem:[#allocation6 + $0xb0] sm:$0xff]
        %v4558 = vld [vmem:[#allocation6 + $0xf0] sm:$0xff]
        %v4559 = vld [vmem:[#allocation6 + $0xf8] sm:$0xff]
        %v4560 = vld [vmem:[#allocation6 + $0x100] sm:$0xff]
        %v4561 = vld [vmem:[#allocation6 + $0x140] sm:$0xff]
        %v4562 = vld [vmem:[#allocation6 + $0x148] sm:$0xff]
        %v4563 = vld [vmem:[#allocation6 + $0x150] sm:$0xff]
        %v4564 = vld [vmem:[#allocation6 + $0x190] sm:$0xff]
        %v4565 = vld [vmem:[#allocation6 + $0x198] sm:$0xff]
        %v4566 = vld [vmem:[#allocation6 + $0x1a0] sm:$0xff]
        %v4567 = vld [vmem:[#allocation6 + $0x1e0] sm:$0xff]
        %v4568 = vld [vmem:[#allocation6 + $0x1e8] sm:$0xff]
        %v4569 = vld [vmem:[#allocation6 + $0x1f0] sm:$0xff]
        %v4570 = vld [vmem:[#allocation6 + $0x230] sm:$0xff]
        %v4571 = vld [vmem:[#allocation6 + $0x238] sm:$0xff]
        %v4572 = vld [vmem:[#allocation6 + $0x240] sm:$0xff]
        %v4573 = vld [vmem:[#allocation6 + $0x280] sm:$0xff]
        %v4574 = vld [vmem:[#allocation6 + $0x288] sm:$0xff]
        %v4575 = vld [vmem:[#allocation6 + $0x290] sm:$0xff]
        %4577 = vset.pattern.permute.xlu0 0
        %4578 = vperm.xlu0 %4577, %v4382
        %v4579 = vpop.permute.xlu0 %4578
        %v4582 = vsel %vm2090, %v4380, 0
        %4584 = vmatprep.subr.mxu0 %v4550
        %4585 = vmatpush1.msra.mxu0 %v4549
        %4586 = vmatprep.subr.mxu0 %v4553
        %4587 = vmatpush1.msra.mxu0 %v4552
        %4588 = vmatprep.subr.mxu0 %v4556
        %4589 = vmatpush1.msra.mxu0 %v4555
        %4590 = vmatprep.subr.mxu0 %v4559
        %4591 = vmatpush1.msra.mxu0 %v4558
        %4592 = vmatprep.subr.mxu0 %v4562
        %4593 = vmatpush1.msra.mxu0 %v4561
        %4594 = vmatprep.subr.mxu0 %v4565
        %4595 = vmatpush1.msra.mxu0 %v4564
        %4596 = vmatprep.subr.mxu0 %v4568
        %4597 = vmatpush1.msra.mxu0 %v4567
        %4598 = vmatprep.subr.mxu0 %v4571
        %4599 = vmatpush1.msra.mxu0 %v4570
        %4600 = vmatprep.subr.mxu0 %v4574
        %4601 = vmatpush1.msra.mxu0 %v4573
        %4602 = vmatprep.subr.mxu0 0.0
        %4603 = vmatpush1.msra.mxu0 0.0
        %4604 = vmatprep.subr.mxu0 0.0
        %4605 = vmatpush1.msra.mxu0 0.0
        %4606 = vmatprep.subr.mxu0 0.0
        %4607 = vmatpush1.msra.mxu0 0.0
        %4608 = vmatprep.subr.mxu0 0.0
        %4609 = vmatpush1.msra.mxu0 0.0
        %4610 = vmatprep.subr.mxu0 0.0
        %4611 = vmatpush1.msra.mxu0 0.0
        %4612 = vmatprep.subr.mxu0 0.0
        %4613 = vmatpush1.msra.mxu0 0.0
        %4614 = vmatprep.subr.mxu0 0.0
        %4615 = vmatpush1.msra.mxu0 0.0
        %4616 = vmatprep.subr.mxu0 0.0
        %4617 = vmatpush1.msra.mxu0 0.0
        %4618 = vmatprep.subr.mxu0 0.0
        %4619 = vmatpush1.msra.mxu0 0.0
        %4620 = vmatprep.subr.mxu0 0.0
        %4621 = vmatpush1.msra.mxu0 0.0
        %4622 = vmatprep.subr.mxu0 0.0
        %4623 = vmatpush1.msra.mxu0 0.0
        %4624 = vmatprep.subr.mxu0 0.0
        %4625 = vmatpush1.msra.mxu0 0.0
        %4626 = vmatprep.subr.mxu0 0.0
        %4627 = vmatpush1.msra.mxu0 0.0
        %4628 = vmatprep.subr.mxu0 0.0
        %4629 = vmatpush1.msra.mxu0 0.0
        %4630 = vmatprep.subr.mxu0 0.0
        %4631 = vmatpush1.msra.mxu0 0.0
        %4632 = vmatprep.subr.mxu0 0.0
        %4633 = vmatpush1.msra.mxu0 0.0
        %4634 = vmatprep.subr.mxu0 0.0
        %4635 = vmatpush1.msra.mxu0 0.0
        %4636 = vmatprep.subr.mxu0 0.0
        %4637 = vmatpush1.msra.mxu0 0.0
        %4638 = vmatprep.subr.mxu0 0.0
        %4639 = vmatpush1.msra.mxu0 0.0
        %4640 = vmatprep.subr.mxu0 0.0
        %4641 = vmatpush1.msra.mxu0 0.0
        %4642 = vmatprep.subr.mxu0 0.0
        %4643 = vmatpush1.msra.mxu0 0.0
        %4644 = vmatprep.subr.mxu0 0.0
        %4645 = vmatpush1.msra.mxu0 0.0
        %4646 = vmatprep.subr.mxu0 0.0
        %4647 = vmatpush1.msra.mxu0 0.0
        %4648 = vmatprep.mubr.f32.mxu0 0.0
        %4649 = vmatmul.mubr.f32.gmra.mrb[0].mxu0 %v4582
        %v4650 = vpop.f32.mrb[0].mxu0
        %v4651 = vadd.f32 %v4579, %v4650
        %v4652 = vpop.f32.mrb[0].mxu0
        %v4653 = vadd.f32 %v4579, %v4652
        %4654 = vdwg.mxu0
        %4655 = vmatprep.subr.mxu0 0.0
        %4656 = vmatpush1.msra.mxu0 %v4551
        %4657 = vmatprep.subr.mxu0 0.0
        %4658 = vmatpush1.msra.mxu0 %v4554
        %4659 = vmatprep.subr.mxu0 0.0
        %4660 = vmatpush1.msra.mxu0 %v4557
        %4661 = vmatprep.subr.mxu0 0.0
        %4662 = vmatpush1.msra.mxu0 %v4560
        %4663 = vmatprep.subr.mxu0 0.0
        %4664 = vmatpush1.msra.mxu0 %v4563
        %4665 = vmatprep.subr.mxu0 0.0
        %4666 = vmatpush1.msra.mxu0 %v4566
        %4667 = vmatprep.subr.mxu0 0.0
        %4668 = vmatpush1.msra.mxu0 %v4569
        %4669 = vmatprep.subr.mxu0 0.0
        %4670 = vmatpush1.msra.mxu0 %v4572
        %4671 = vmatprep.subr.mxu0 0.0
        %4672 = vmatpush1.msra.mxu0 %v4575
        %4673 = vmatprep.subr.mxu0 0.0
        %4674 = vmatpush1.msra.mxu0 0.0
        %4675 = vmatprep.subr.mxu0 0.0
        %4676 = vmatpush1.msra.mxu0 0.0
        %4677 = vmatprep.subr.mxu0 0.0
        %4678 = vmatpush1.msra.mxu0 0.0
        %4679 = vmatprep.subr.mxu0 0.0
        %4680 = vmatpush1.msra.mxu0 0.0
        %4681 = vmatprep.subr.mxu0 0.0
        %4682 = vmatpush1.msra.mxu0 0.0
        %4683 = vmatprep.subr.mxu0 0.0
        %4684 = vmatpush1.msra.mxu0 0.0
        %4685 = vmatprep.subr.mxu0 0.0
        %4686 = vmatpush1.msra.mxu0 0.0
        %4687 = vmatprep.subr.mxu0 0.0
        %4688 = vmatpush1.msra.mxu0 0.0
        %4689 = vmatprep.subr.mxu0 0.0
        %4690 = vmatpush1.msra.mxu0 0.0
        %4691 = vmatprep.subr.mxu0 0.0
        %4692 = vmatpush1.msra.mxu0 0.0
        %4693 = vmatprep.subr.mxu0 0.0
        %4694 = vmatpush1.msra.mxu0 0.0
        %4695 = vmatprep.subr.mxu0 0.0
        %4696 = vmatpush1.msra.mxu0 0.0
        %4697 = vmatprep.subr.mxu0 0.0
        %4698 = vmatpush1.msra.mxu0 0.0
        %4699 = vmatprep.subr.mxu0 0.0
        %4700 = vmatpush1.msra.mxu0 0.0
        %4701 = vmatprep.subr.mxu0 0.0
        %4702 = vmatpush1.msra.mxu0 0.0
        %4703 = vmatprep.subr.mxu0 0.0
        %4704 = vmatpush1.msra.mxu0 0.0
        %4705 = vmatprep.subr.mxu0 0.0
        %4706 = vmatpush1.msra.mxu0 0.0
        %4707 = vmatprep.subr.mxu0 0.0
        %4708 = vmatpush1.msra.mxu0 0.0
        %4709 = vmatprep.subr.mxu0 0.0
        %4710 = vmatpush1.msra.mxu0 0.0
        %4711 = vmatprep.subr.mxu0 0.0
        %4712 = vmatpush1.msra.mxu0 0.0
        %4713 = vmatprep.subr.mxu0 0.0
        %4714 = vmatpush1.msra.mxu0 0.0
        %4715 = vmatprep.subr.mxu0 0.0
        %4716 = vmatpush1.msra.mxu0 0.0
        %4717 = vmatprep.subr.mxu0 0.0
        %4718 = vmatpush1.msra.mxu0 0.0
        %4719 = vmatprep.mubr.f32.mxu0 0.0
        %4720 = vmatmul.mubr.f32.gmra.mrb[0].mxu0 %v4582
        %v4721 = vpop.f32.mrb[0].mxu0
        %v4722 = vadd.f32 %v4579, %v4721
        %v4723 = vpop.f32.mrb[0].mxu0
        %4724 = vdwg.mxu0
        %s4725 = scalar_lea.vmem %s1, 32
        %v4726 = vld [vmem:[%s4725] sm:$0xff]
        %s4727 = scalar_lea.vmem %s2, 32
        %v4728 = vld [vmem:[%s4727] sm:$0xff]
        %v4729 = vld [vmem:[#allocation4] sm:$0xff]
        %v4730 = vld [vmem:[#allocation4 + $0x8] sm:$0xff]
        %v4731 = vld [vmem:[#allocation4 + $0x10] sm:$0xff]
        %4732 = vst [vmem:[#allocation6] sm:$0xff] %v4729
        %4733 = vst [vmem:[#allocation6 + $0x8] sm:$0xff] %v4730
        %4734 = vst.msk [vmem:[#allocation6 + $0x10] sm:$0xff] %vm3631, %v4731
        %v4735 = vld [vmem:[#allocation4] sm:$0xff]
        %v4736 = vld [vmem:[#allocation4 + $0x8] sm:$0xff]
        %v4737 = vld [vmem:[#allocation4 + $0x10] sm:$0xff]
        %4741 = vrot.lane.b32.xlu0 %v4735, 127
        %v4742 = vpop.permute.xlu0 %4741
        %4743 = vrot.lane.b32.xlu0 %v4736, 127
        %v4744 = vpop.permute.xlu0 %4743
        %4745 = vrot.lane.b32.xlu0 %v4737, 127
        %v4746 = vpop.permute.xlu0 %4745
        %v4747 = vsel %vm1475, %v4742, %v4744
        %v4748 = vsel %vm1475, %v4744, %v4746
        %4752 = vst [vmem:[#allocation6 + $0x50] sm:$0xff] %v4747
        %4753 = vst [vmem:[#allocation6 + $0x58] sm:$0xff] %v4748
        %4754 = vst.msk [vmem:[#allocation6 + $0x60] sm:$0xff] %vm3631, %v4746
        %v4755 = vld [vmem:[#allocation4] sm:$0xff]
        %v4756 = vld [vmem:[#allocation4 + $0x8] sm:$0xff]
        %v4757 = vld [vmem:[#allocation4 + $0x10] sm:$0xff]
        %4761 = vrot.lane.b32.xlu0 %v4755, 126
        %v4762 = vpop.permute.xlu0 %4761
        %4763 = vrot.lane.b32.xlu0 %v4756, 126
        %v4764 = vpop.permute.xlu0 %4763
        %4765 = vrot.lane.b32.xlu0 %v4757, 126
        %v4766 = vpop.permute.xlu0 %4765
        %v4767 = vsel %vm1545, %v4762, %v4764
        %v4768 = vsel %vm1545, %v4764, %v4766
        %4772 = vst [vmem:[#allocation6 + $0xa0] sm:$0xff] %v4767
        %4773 = vst [vmem:[#allocation6 + $0xa8] sm:$0xff] %v4768
        %4774 = vst.msk [vmem:[#allocation6 + $0xb0] sm:$0xff] %vm3631, %v4766
        %v4775 = vld [vmem:[#allocation4] sm:$0xff]
        %v4776 = vld [vmem:[#allocation4 + $0x8] sm:$0xff]
        %v4777 = vld [vmem:[#allocation4 + $0x10] sm:$0xff]
        %4781 = vrot.lane.b32.xlu0 %v4775, 110
        %v4782 = vpop.permute.xlu0 %4781
        %4783 = vrot.lane.b32.xlu0 %v4776, 110
        %v4784 = vpop.permute.xlu0 %4783
        %4785 = vrot.lane.b32.xlu0 %v4777, 110
        %v4786 = vpop.permute.xlu0 %4785
        %v4787 = vsel %vm3685, %v4782, %v4784
        %v4788 = vsel %vm3685, %v4784, %v4786
        %4792 = vst [vmem:[#allocation6 + $0xf0] sm:$0xff] %v4787
        %4793 = vst [vmem:[#allocation6 + $0xf8] sm:$0xff] %v4788
        %4794 = vst.msk [vmem:[#allocation6 + $0x100] sm:$0xff] %vm3631, %v4786
        %v4795 = vld [vmem:[#allocation4] sm:$0xff]
        %v4796 = vld [vmem:[#allocation4 + $0x8] sm:$0xff]
        %v4797 = vld [vmem:[#allocation4 + $0x10] sm:$0xff]
        %4801 = vrot.lane.b32.xlu0 %v4795, 109
        %v4802 = vpop.permute.xlu0 %4801
        %4803 = vrot.lane.b32.xlu0 %v4796, 109
        %v4804 = vpop.permute.xlu0 %4803
        %4805 = vrot.lane.b32.xlu0 %v4797, 109
        %v4806 = vpop.permute.xlu0 %4805
        %v4807 = vsel %vm3706, %v4802, %v4804
        %v4808 = vsel %vm3706, %v4804, %v4806
        %4812 = vst [vmem:[#allocation6 + $0x140] sm:$0xff] %v4807
        %4813 = vst [vmem:[#allocation6 + $0x148] sm:$0xff] %v4808
        %4814 = vst.msk [vmem:[#allocation6 + $0x150] sm:$0xff] %vm3631, %v4806
        %v4815 = vld [vmem:[#allocation4] sm:$0xff]
        %v4816 = vld [vmem:[#allocation4 + $0x8] sm:$0xff]
        %v4817 = vld [vmem:[#allocation4 + $0x10] sm:$0xff]
        %4821 = vrot.lane.b32.xlu0 %v4815, 108
        %v4822 = vpop.permute.xlu0 %4821
        %4823 = vrot.lane.b32.xlu0 %v4816, 108
        %v4824 = vpop.permute.xlu0 %4823
        %4825 = vrot.lane.b32.xlu0 %v4817, 108
        %v4826 = vpop.permute.xlu0 %4825
        %v4827 = vsel %vm3727, %v4822, %v4824
        %v4828 = vsel %vm3727, %v4824, %v4826
        %4832 = vst [vmem:[#allocation6 + $0x190] sm:$0xff] %v4827
        %4833 = vst [vmem:[#allocation6 + $0x198] sm:$0xff] %v4828
        %4834 = vst.msk [vmem:[#allocation6 + $0x1a0] sm:$0xff] %vm3631, %v4826
        %v4835 = vld [vmem:[#allocation4] sm:$0xff]
        %v4836 = vld [vmem:[#allocation4 + $0x8] sm:$0xff]
        %v4837 = vld [vmem:[#allocation4 + $0x10] sm:$0xff]
        %4841 = vrot.lane.b32.xlu0 %v4835, 92
        %v4842 = vpop.permute.xlu0 %4841
        %4843 = vrot.lane.b32.xlu0 %v4836, 92
        %v4844 = vpop.permute.xlu0 %4843
        %4845 = vrot.lane.b32.xlu0 %v4837, 92
        %v4846 = vpop.permute.xlu0 %4845
        %v4847 = vsel %vm1755, %v4842, %v4844
        %v4848 = vsel %vm1755, %v4844, %v4846
        %4852 = vst [vmem:[#allocation6 + $0x1e0] sm:$0xff] %v4847
        %4853 = vst [vmem:[#allocation6 + $0x1e8] sm:$0xff] %v4848
        %4854 = vst.msk [vmem:[#allocation6 + $0x1f0] sm:$0xff] %vm3631, %v4846
        %v4855 = vld [vmem:[#allocation4] sm:$0xff]
        %v4856 = vld [vmem:[#allocation4 + $0x8] sm:$0xff]
        %v4857 = vld [vmem:[#allocation4 + $0x10] sm:$0xff]
        %4861 = vrot.lane.b32.xlu0 %v4855, 91
        %v4862 = vpop.permute.xlu0 %4861
        %4863 = vrot.lane.b32.xlu0 %v4856, 91
        %v4864 = vpop.permute.xlu0 %4863
        %4865 = vrot.lane.b32.xlu0 %v4857, 91
        %v4866 = vpop.permute.xlu0 %4865
        %v4867 = vsel %vm3768, %v4862, %v4864
        %v4868 = vsel %vm3768, %v4864, %v4866
        %4872 = vst [vmem:[#allocation6 + $0x230] sm:$0xff] %v4867
        %4873 = vst [vmem:[#allocation6 + $0x238] sm:$0xff] %v4868
        %4874 = vst.msk [vmem:[#allocation6 + $0x240] sm:$0xff] %vm3631, %v4866
        %v4875 = vld [vmem:[#allocation4] sm:$0xff]
        %v4876 = vld [vmem:[#allocation4 + $0x8] sm:$0xff]
        %v4877 = vld [vmem:[#allocation4 + $0x10] sm:$0xff]
        %4881 = vrot.lane.b32.xlu0 %v4875, 90
        %v4882 = vpop.permute.xlu0 %4881
        %4883 = vrot.lane.b32.xlu0 %v4876, 90
        %v4884 = vpop.permute.xlu0 %4883
        %4885 = vrot.lane.b32.xlu0 %v4877, 90
        %v4886 = vpop.permute.xlu0 %4885
        %v4887 = vsel %vm3789, %v4882, %v4884
        %v4888 = vsel %vm3789, %v4884, %v4886
        %4892 = vst [vmem:[#allocation6 + $0x280] sm:$0xff] %v4887
        %4893 = vst [vmem:[#allocation6 + $0x288] sm:$0xff] %v4888
        %4894 = vst.msk [vmem:[#allocation6 + $0x290] sm:$0xff] %vm3631, %v4886
        %v4895 = vld [vmem:[#allocation6] sm:$0xff]
        %v4896 = vld [vmem:[#allocation6 + $0x8] sm:$0xff]
        %v4897 = vld [vmem:[#allocation6 + $0x10] sm:$0xff]
        %v4898 = vld [vmem:[#allocation6 + $0x50] sm:$0xff]
        %v4899 = vld [vmem:[#allocation6 + $0x58] sm:$0xff]
        %v4900 = vld [vmem:[#allocation6 + $0x60] sm:$0xff]
        %v4901 = vld [vmem:[#allocation6 + $0xa0] sm:$0xff]
        %v4902 = vld [vmem:[#allocation6 + $0xa8] sm:$0xff]
        %v4903 = vld [vmem:[#allocation6 + $0xb0] sm:$0xff]
        %v4904 = vld [vmem:[#allocation6 + $0xf0] sm:$0xff]
        %v4905 = vld [vmem:[#allocation6 + $0xf8] sm:$0xff]
        %v4906 = vld [vmem:[#allocation6 + $0x100] sm:$0xff]
        %v4907 = vld [vmem:[#allocation6 + $0x140] sm:$0xff]
        %v4908 = vld [vmem:[#allocation6 + $0x148] sm:$0xff]
        %v4909 = vld [vmem:[#allocation6 + $0x150] sm:$0xff]
        %v4910 = vld [vmem:[#allocation6 + $0x190] sm:$0xff]
        %v4911 = vld [vmem:[#allocation6 + $0x198] sm:$0xff]
        %v4912 = vld [vmem:[#allocation6 + $0x1a0] sm:$0xff]
        %v4913 = vld [vmem:[#allocation6 + $0x1e0] sm:$0xff]
        %v4914 = vld [vmem:[#allocation6 + $0x1e8] sm:$0xff]
        %v4915 = vld [vmem:[#allocation6 + $0x1f0] sm:$0xff]
        %v4916 = vld [vmem:[#allocation6 + $0x230] sm:$0xff]
        %v4917 = vld [vmem:[#allocation6 + $0x238] sm:$0xff]
        %v4918 = vld [vmem:[#allocation6 + $0x240] sm:$0xff]
        %v4919 = vld [vmem:[#allocation6 + $0x280] sm:$0xff]
        %v4920 = vld [vmem:[#allocation6 + $0x288] sm:$0xff]
        %v4921 = vld [vmem:[#allocation6 + $0x290] sm:$0xff]
        %4923 = vset.pattern.permute.xlu0 0
        %4924 = vperm.xlu0 %4923, %v4728
        %v4925 = vpop.permute.xlu0 %4924
        %v4928 = vsel %vm2090, %v4726, 0
        %4930 = vmatprep.subr.mxu0 %v4896
        %4931 = vmatpush1.msra.mxu0 %v4895
        %4932 = vmatprep.subr.mxu0 %v4899
        %4933 = vmatpush1.msra.mxu0 %v4898
        %4934 = vmatprep.subr.mxu0 %v4902
        %4935 = vmatpush1.msra.mxu0 %v4901
        %4936 = vmatprep.subr.mxu0 %v4905
        %4937 = vmatpush1.msra.mxu0 %v4904
        %4938 = vmatprep.subr.mxu0 %v4908
        %4939 = vmatpush1.msra.mxu0 %v4907
        %4940 = vmatprep.subr.mxu0 %v4911
        %4941 = vmatpush1.msra.mxu0 %v4910
        %4942 = vmatprep.subr.mxu0 %v4914
        %4943 = vmatpush1.msra.mxu0 %v4913
        %4944 = vmatprep.subr.mxu0 %v4917
        %4945 = vmatpush1.msra.mxu0 %v4916
        %4946 = vmatprep.subr.mxu0 %v4920
        %4947 = vmatpush1.msra.mxu0 %v4919
        %4948 = vmatprep.subr.mxu0 0.0
        %4949 = vmatpush1.msra.mxu0 0.0
        %4950 = vmatprep.subr.mxu0 0.0
        %4951 = vmatpush1.msra.mxu0 0.0
        %4952 = vmatprep.subr.mxu0 0.0
        %4953 = vmatpush1.msra.mxu0 0.0
        %4954 = vmatprep.subr.mxu0 0.0
        %4955 = vmatpush1.msra.mxu0 0.0
        %4956 = vmatprep.subr.mxu0 0.0
        %4957 = vmatpush1.msra.mxu0 0.0
        %4958 = vmatprep.subr.mxu0 0.0
        %4959 = vmatpush1.msra.mxu0 0.0
        %4960 = vmatprep.subr.mxu0 0.0
        %4961 = vmatpush1.msra.mxu0 0.0
        %4962 = vmatprep.subr.mxu0 0.0
        %4963 = vmatpush1.msra.mxu0 0.0
        %4964 = vmatprep.subr.mxu0 0.0
        %4965 = vmatpush1.msra.mxu0 0.0
        %4966 = vmatprep.subr.mxu0 0.0
        %4967 = vmatpush1.msra.mxu0 0.0
        %4968 = vmatprep.subr.mxu0 0.0
        %4969 = vmatpush1.msra.mxu0 0.0
        %4970 = vmatprep.subr.mxu0 0.0
        %4971 = vmatpush1.msra.mxu0 0.0
        %4972 = vmatprep.subr.mxu0 0.0
        %4973 = vmatpush1.msra.mxu0 0.0
        %4974 = vmatprep.subr.mxu0 0.0
        %4975 = vmatpush1.msra.mxu0 0.0
        %4976 = vmatprep.subr.mxu0 0.0
        %4977 = vmatpush1.msra.mxu0 0.0
        %4978 = vmatprep.subr.mxu0 0.0
        %4979 = vmatpush1.msra.mxu0 0.0
        %4980 = vmatprep.subr.mxu0 0.0
        %4981 = vmatpush1.msra.mxu0 0.0
        %4982 = vmatprep.subr.mxu0 0.0
        %4983 = vmatpush1.msra.mxu0 0.0
        %4984 = vmatprep.subr.mxu0 0.0
        %4985 = vmatpush1.msra.mxu0 0.0
        %4986 = vmatprep.subr.mxu0 0.0
        %4987 = vmatpush1.msra.mxu0 0.0
        %4988 = vmatprep.subr.mxu0 0.0
        %4989 = vmatpush1.msra.mxu0 0.0
        %4990 = vmatprep.subr.mxu0 0.0
        %4991 = vmatpush1.msra.mxu0 0.0
        %4992 = vmatprep.subr.mxu0 0.0
        %4993 = vmatpush1.msra.mxu0 0.0
        %4994 = vmatprep.mubr.f32.mxu0 0.0
        %4995 = vmatmul.mubr.f32.gmra.mrb[0].mxu0 %v4928
        %v4996 = vpop.f32.mrb[0].mxu0
        %v4997 = vadd.f32 %v4925, %v4996
        %v4998 = vpop.f32.mrb[0].mxu0
        %v4999 = vadd.f32 %v4925, %v4998
        %5000 = vdwg.mxu0
        %5001 = vmatprep.subr.mxu0 0.0
        %5002 = vmatpush1.msra.mxu0 %v4897
        %5003 = vmatprep.subr.mxu0 0.0
        %5004 = vmatpush1.msra.mxu0 %v4900
        %5005 = vmatprep.subr.mxu0 0.0
        %5006 = vmatpush1.msra.mxu0 %v4903
        %5007 = vmatprep.subr.mxu0 0.0
        %5008 = vmatpush1.msra.mxu0 %v4906
        %5009 = vmatprep.subr.mxu0 0.0
        %5010 = vmatpush1.msra.mxu0 %v4909
        %5011 = vmatprep.subr.mxu0 0.0
        %5012 = vmatpush1.msra.mxu0 %v4912
        %5013 = vmatprep.subr.mxu0 0.0
        %5014 = vmatpush1.msra.mxu0 %v4915
        %5015 = vmatprep.subr.mxu0 0.0
        %5016 = vmatpush1.msra.mxu0 %v4918
        %5017 = vmatprep.subr.mxu0 0.0
        %5018 = vmatpush1.msra.mxu0 %v4921
        %5019 = vmatprep.subr.mxu0 0.0
        %5020 = vmatpush1.msra.mxu0 0.0
        %5021 = vmatprep.subr.mxu0 0.0
        %5022 = vmatpush1.msra.mxu0 0.0
        %5023 = vmatprep.subr.mxu0 0.0
        %5024 = vmatpush1.msra.mxu0 0.0
        %5025 = vmatprep.subr.mxu0 0.0
        %5026 = vmatpush1.msra.mxu0 0.0
        %5027 = vmatprep.subr.mxu0 0.0
        %5028 = vmatpush1.msra.mxu0 0.0
        %5029 = vmatprep.subr.mxu0 0.0
        %5030 = vmatpush1.msra.mxu0 0.0
        %5031 = vmatprep.subr.mxu0 0.0
        %5032 = vmatpush1.msra.mxu0 0.0
        %5033 = vmatprep.subr.mxu0 0.0
        %5034 = vmatpush1.msra.mxu0 0.0
        %5035 = vmatprep.subr.mxu0 0.0
        %5036 = vmatpush1.msra.mxu0 0.0
        %5037 = vmatprep.subr.mxu0 0.0
        %5038 = vmatpush1.msra.mxu0 0.0
        %5039 = vmatprep.subr.mxu0 0.0
        %5040 = vmatpush1.msra.mxu0 0.0
        %5041 = vmatprep.subr.mxu0 0.0
        %5042 = vmatpush1.msra.mxu0 0.0
        %5043 = vmatprep.subr.mxu0 0.0
        %5044 = vmatpush1.msra.mxu0 0.0
        %5045 = vmatprep.subr.mxu0 0.0
        %5046 = vmatpush1.msra.mxu0 0.0
        %5047 = vmatprep.subr.mxu0 0.0
        %5048 = vmatpush1.msra.mxu0 0.0
        %5049 = vmatprep.subr.mxu0 0.0
        %5050 = vmatpush1.msra.mxu0 0.0
        %5051 = vmatprep.subr.mxu0 0.0
        %5052 = vmatpush1.msra.mxu0 0.0
        %5053 = vmatprep.subr.mxu0 0.0
        %5054 = vmatpush1.msra.mxu0 0.0
        %5055 = vmatprep.subr.mxu0 0.0
        %5056 = vmatpush1.msra.mxu0 0.0
        %5057 = vmatprep.subr.mxu0 0.0
        %5058 = vmatpush1.msra.mxu0 0.0
        %5059 = vmatprep.subr.mxu0 0.0
        %5060 = vmatpush1.msra.mxu0 0.0
        %5061 = vmatprep.subr.mxu0 0.0
        %5062 = vmatpush1.msra.mxu0 0.0
        %5063 = vmatprep.subr.mxu0 0.0
        %5064 = vmatpush1.msra.mxu0 0.0
        %5065 = vmatprep.mubr.f32.mxu0 0.0
        %5066 = vmatmul.mubr.f32.gmra.mrb[0].mxu0 %v4928
        %v5067 = vpop.f32.mrb[0].mxu0
        %v5068 = vadd.f32 %v4925, %v5067
        %v5069 = vpop.f32.mrb[0].mxu0
        %5070 = vdwg.mxu0
        %v5071 = vadd.f32 %v4651, %v4997
        %v5072 = vadd.f32 %v4653, %v4999
        %v5073 = vadd.f32 %v4722, %v5068
        %v5074 = vld [vmem:[%s4] sm:$0xff]
        %v5075 = vld [vmem:[%s4 + $0x8] sm:$0xff]
        %v5076 = vld [vmem:[%s4 + $0x10] sm:$0xff]
        %v5077 = vld [vmem:[%s4 + $0x18] sm:$0xff]
        %v5078 = vld [vmem:[%s4 + $0x20] sm:$0xff]
        %v5079 = vld [vmem:[%s4 + $0x28] sm:$0xff]
        %v5080 = vld [vmem:[%s4 + $0x30] sm:$0xff]
        %v5081 = vld [vmem:[%s4 + $0x38] sm:$0xff]
        %v5082 = vld [vmem:[%s4 + $0x40] sm:$0xff]
        %v5083 = vld [vmem:[%s4 + $0x48] sm:$0xff]
        %v5084 = vld [vmem:[%s4 + $0x50] sm:$0xff]
        %v5085 = vld [vmem:[%s4 + $0x58] sm:$0xff]
        %v5086 = vld [vmem:[%s4 + $0x60] sm:$0xff]
        %v5087 = vld [vmem:[%s4 + $0x68] sm:$0xff]
        %v5088 = vld [vmem:[%s4 + $0x70] sm:$0xff]
        %v5089 = vld [vmem:[%s4 + $0x78] sm:$0xff]
        %v5090 = vld [vmem:[%s4 + $0x80] sm:$0xff]
        %v5091 = vld [vmem:[%s4 + $0x88] sm:$0xff]
        %v5092 = vld [vmem:[%s4 + $0x90] sm:$0xff]
        %v5093 = vld [vmem:[%s4 + $0x98] sm:$0xff]
        %v5094 = vld [vmem:[%s4 + $0xa0] sm:$0xff]
        %v5095 = vld [vmem:[%s4 + $0xa8] sm:$0xff]
        %v5096 = vld [vmem:[%s4 + $0xb0] sm:$0xff]
        %v5097 = vld [vmem:[%s4 + $0xb8] sm:$0xff]
        %v5098 = vld [vmem:[%s4 + $0xc0] sm:$0xff]
        %v5099 = vld [vmem:[%s4 + $0xc8] sm:$0xff]
        %v5100 = vld [vmem:[%s4 + $0xd0] sm:$0xff]
        %v5101 = vld [vmem:[%s4 + $0xd8] sm:$0xff]
        %v5102 = vld [vmem:[%s4 + $0xe0] sm:$0xff]
        %v5103 = vld [vmem:[%s4 + $0xe8] sm:$0xff]
        %v5104 = vld [vmem:[%s4 + $0xf0] sm:$0xff]
        %v5105 = vld [vmem:[%s4 + $0xf8] sm:$0xff]
        %v5106 = vld [vmem:[%s4 + $0x100] sm:$0xff]
        %v5107 = vld [vmem:[%s4 + $0x108] sm:$0xff]
        %v5108 = vld [vmem:[%s4 + $0x110] sm:$0xff]
        %v5109 = vld [vmem:[%s4 + $0x118] sm:$0xff]
        %v5110 = vld [vmem:[%s4 + $0x120] sm:$0xff]
        %v5111 = vld [vmem:[%s4 + $0x128] sm:$0xff]
        %v5112 = vld [vmem:[%s4 + $0x130] sm:$0xff]
        %v5113 = vld [vmem:[%s4 + $0x138] sm:$0xff]
        %v5114 = vld [vmem:[%s4 + $0x140] sm:$0xff]
        %v5115 = vld [vmem:[%s4 + $0x148] sm:$0xff]
        %v5116 = vld [vmem:[%s4 + $0x150] sm:$0xff]
        %v5117 = vld [vmem:[%s4 + $0x158] sm:$0xff]
        %v5118 = vld [vmem:[%s4 + $0x160] sm:$0xff]
        %v5119 = vld [vmem:[%s4 + $0x168] sm:$0xff]
        %v5120 = vld [vmem:[%s4 + $0x170] sm:$0xff]
        %v5121 = vld [vmem:[%s4 + $0x178] sm:$0xff]
        %v5122 = vld [vmem:[%s4 + $0x180] sm:$0xff]
        %v5123 = vld [vmem:[%s4 + $0x188] sm:$0xff]
        %v5124 = vld [vmem:[%s4 + $0x190] sm:$0xff]
        %v5125 = vld [vmem:[%s4 + $0x198] sm:$0xff]
        %v5126 = vld [vmem:[%s4 + $0x1a0] sm:$0xff]
        %v5127 = vld [vmem:[%s4 + $0x1a8] sm:$0xff]
        %v5128 = vld [vmem:[%s4 + $0x1b0] sm:$0xff]
        %v5129 = vld [vmem:[%s4 + $0x1b8] sm:$0xff]
        %v5130 = vld [vmem:[%s4 + $0x1c0] sm:$0xff]
        %v5131 = vld [vmem:[%s4 + $0x1c8] sm:$0xff]
        %v5132 = vld [vmem:[%s4 + $0x1d0] sm:$0xff]
        %v5133 = vld [vmem:[%s4 + $0x1d8] sm:$0xff]
        %v5134 = vld [vmem:[%s4 + $0x1e0] sm:$0xff]
        %v5135 = vld [vmem:[%s4 + $0x1e8] sm:$0xff]
        %v5136 = vld [vmem:[%s4 + $0x1f0] sm:$0xff]
        %v5137 = vld [vmem:[%s4 + $0x1f8] sm:$0xff]
        %v5138 = vld [vmem:[%s4 + $0x200] sm:$0xff]
        %v5139 = vld [vmem:[%s4 + $0x208] sm:$0xff]
        %v5140 = vld [vmem:[%s4 + $0x210] sm:$0xff]
        %v5141 = vld [vmem:[%s4 + $0x218] sm:$0xff]
        %v5142 = vld [vmem:[%s4 + $0x220] sm:$0xff]
        %v5143 = vld [vmem:[%s4 + $0x228] sm:$0xff]
        %v5144 = vld [vmem:[%s4 + $0x230] sm:$0xff]
        %v5145 = vld [vmem:[%s4 + $0x238] sm:$0xff]
        %v5146 = vld [vmem:[%s4 + $0x240] sm:$0xff]
        %v5147 = vld [vmem:[%s4 + $0x248] sm:$0xff]
        %v5148 = vld [vmem:[%s4 + $0x250] sm:$0xff]
        %v5149 = vld [vmem:[%s4 + $0x258] sm:$0xff]
        %v5150 = vld [vmem:[%s4 + $0x260] sm:$0xff]
        %v5151 = vld [vmem:[%s4 + $0x268] sm:$0xff]
        %v5152 = vld [vmem:[%s4 + $0x270] sm:$0xff]
        %v5153 = vld [vmem:[%s4 + $0x278] sm:$0xff]
        %v5154 = vld [vmem:[%s4 + $0x280] sm:$0xf]
        %v5155 = vld [vmem:[%s4 + $0x288] sm:$0xf]
        %v5157 = vsel %vm3631, %v5073, 0
        %v5160 = vsel %vm2887, %v5154, 0
        %v5163 = vsel %vm2887, %v5155, 0
        %5165 = vmatprep.subr.mxu0 %v5075
        %5166 = vmatpush1.msra.mxu0 %v5074
        %5167 = vmatprep.subr.mxu0 %v5077
        %5168 = vmatpush1.msra.mxu0 %v5076
        %5169 = vmatprep.subr.mxu0 %v5079
        %5170 = vmatpush1.msra.mxu0 %v5078
        %5171 = vmatprep.subr.mxu0 %v5081
        %5172 = vmatpush1.msra.mxu0 %v5080
        %5173 = vmatprep.subr.mxu0 %v5083
        %5174 = vmatpush1.msra.mxu0 %v5082
        %5175 = vmatprep.subr.mxu0 %v5085
        %5176 = vmatpush1.msra.mxu0 %v5084
        %5177 = vmatprep.subr.mxu0 %v5087
        %5178 = vmatpush1.msra.mxu0 %v5086
        %5179 = vmatprep.subr.mxu0 %v5089
        %5180 = vmatpush1.msra.mxu0 %v5088
        %5181 = vmatprep.subr.mxu0 %v5091
        %5182 = vmatpush1.msra.mxu0 %v5090
        %5183 = vmatprep.subr.mxu0 %v5093
        %5184 = vmatpush1.msra.mxu0 %v5092
        %5185 = vmatprep.subr.mxu0 %v5095
        %5186 = vmatpush1.msra.mxu0 %v5094
        %5187 = vmatprep.subr.mxu0 %v5097
        %5188 = vmatpush1.msra.mxu0 %v5096
        %5189 = vmatprep.subr.mxu0 %v5099
        %5190 = vmatpush1.msra.mxu0 %v5098
        %5191 = vmatprep.subr.mxu0 %v5101
        %5192 = vmatpush1.msra.mxu0 %v5100
        %5193 = vmatprep.subr.mxu0 %v5103
        %5194 = vmatpush1.msra.mxu0 %v5102
        %5195 = vmatprep.subr.mxu0 %v5105
        %5196 = vmatpush1.msra.mxu0 %v5104
        %5197 = vmatprep.subr.mxu0 %v5107
        %5198 = vmatpush1.msra.mxu0 %v5106
        %5199 = vmatprep.subr.mxu0 %v5109
        %5200 = vmatpush1.msra.mxu0 %v5108
        %5201 = vmatprep.subr.mxu0 %v5111
        %5202 = vmatpush1.msra.mxu0 %v5110
        %5203 = vmatprep.subr.mxu0 %v5113
        %5204 = vmatpush1.msra.mxu0 %v5112
        %5205 = vmatprep.subr.mxu0 %v5115
        %5206 = vmatpush1.msra.mxu0 %v5114
        %5207 = vmatprep.subr.mxu0 %v5117
        %5208 = vmatpush1.msra.mxu0 %v5116
        %5209 = vmatprep.subr.mxu0 %v5119
        %5210 = vmatpush1.msra.mxu0 %v5118
        %5211 = vmatprep.subr.mxu0 %v5121
        %5212 = vmatpush1.msra.mxu0 %v5120
        %5213 = vmatprep.subr.mxu0 %v5123
        %5214 = vmatpush1.msra.mxu0 %v5122
        %5215 = vmatprep.subr.mxu0 %v5125
        %5216 = vmatpush1.msra.mxu0 %v5124
        %5217 = vmatprep.subr.mxu0 %v5127
        %5218 = vmatpush1.msra.mxu0 %v5126
        %5219 = vmatprep.subr.mxu0 %v5129
        %5220 = vmatpush1.msra.mxu0 %v5128
        %5221 = vmatprep.subr.mxu0 %v5131
        %5222 = vmatpush1.msra.mxu0 %v5130
        %5223 = vmatprep.subr.mxu0 %v5133
        %5224 = vmatpush1.msra.mxu0 %v5132
        %5225 = vmatprep.subr.mxu0 %v5135
        %5226 = vmatpush1.msra.mxu0 %v5134
        %5227 = vmatprep.subr.mxu0 %v5137
        %5228 = vmatpush1.msra.mxu0 %v5136
        %5229 = vmatprep.mubr.f32.mxu0 %v5072
        %5230 = vmatmul.mubr.f32.gmra.mrb[0].mxu0 %v5071
        %v5231 = vpop.f32.mrb[0].mxu0
        %v5232 = vadd.f32 0.0, %v5231
        %v5233 = vpop.f32.mrb[0].mxu0
        %v5234 = vadd.f32 0.0, %v5233
        %5235 = vdwg.mxu0
        %5236 = vmatprep.subr.mxu0 %v5139
        %5237 = vmatpush1.msra.mxu0 %v5138
        %5238 = vmatprep.subr.mxu0 %v5141
        %5239 = vmatpush1.msra.mxu0 %v5140
        %5240 = vmatprep.subr.mxu0 %v5143
        %5241 = vmatpush1.msra.mxu0 %v5142
        %5242 = vmatprep.subr.mxu0 %v5145
        %5243 = vmatpush1.msra.mxu0 %v5144
        %5244 = vmatprep.subr.mxu0 %v5147
        %5245 = vmatpush1.msra.mxu0 %v5146
        %5246 = vmatprep.subr.mxu0 %v5149
        %5247 = vmatpush1.msra.mxu0 %v5148
        %5248 = vmatprep.subr.mxu0 %v5151
        %5249 = vmatpush1.msra.mxu0 %v5150
        %5250 = vmatprep.subr.mxu0 %v5153
        %5251 = vmatpush1.msra.mxu0 %v5152
        %5252 = vmatprep.subr.mxu0 %v5163
        %5253 = vmatpush1.msra.mxu0 %v5160
        %5254 = vmatprep.subr.mxu0 0.0
        %5255 = vmatpush1.msra.mxu0 0.0
        %5256 = vmatprep.subr.mxu0 0.0
        %5257 = vmatpush1.msra.mxu0 0.0
        %5258 = vmatprep.subr.mxu0 0.0
        %5259 = vmatpush1.msra.mxu0 0.0
        %5260 = vmatprep.subr.mxu0 0.0
        %5261 = vmatpush1.msra.mxu0 0.0
        %5262 = vmatprep.subr.mxu0 0.0
        %5263 = vmatpush1.msra.mxu0 0.0
        %5264 = vmatprep.subr.mxu0 0.0
        %5265 = vmatpush1.msra.mxu0 0.0
        %5266 = vmatprep.subr.mxu0 0.0
        %5267 = vmatpush1.msra.mxu0 0.0
        %5268 = vmatprep.subr.mxu0 0.0
        %5269 = vmatpush1.msra.mxu0 0.0
        %5270 = vmatprep.subr.mxu0 0.0
        %5271 = vmatpush1.msra.mxu0 0.0
        %5272 = vmatprep.subr.mxu0 0.0
        %5273 = vmatpush1.msra.mxu0 0.0
        %5274 = vmatprep.subr.mxu0 0.0
        %5275 = vmatpush1.msra.mxu0 0.0
        %5276 = vmatprep.subr.mxu0 0.0
        %5277 = vmatpush1.msra.mxu0 0.0
        %5278 = vmatprep.subr.mxu0 0.0
        %5279 = vmatpush1.msra.mxu0 0.0
        %5280 = vmatprep.subr.mxu0 0.0
        %5281 = vmatpush1.msra.mxu0 0.0
        %5282 = vmatprep.subr.mxu0 0.0
        %5283 = vmatpush1.msra.mxu0 0.0
        %5284 = vmatprep.subr.mxu0 0.0
        %5285 = vmatpush1.msra.mxu0 0.0
        %5286 = vmatprep.subr.mxu0 0.0
        %5287 = vmatpush1.msra.mxu0 0.0
        %5288 = vmatprep.subr.mxu0 0.0
        %5289 = vmatpush1.msra.mxu0 0.0
        %5290 = vmatprep.subr.mxu0 0.0
        %5291 = vmatpush1.msra.mxu0 0.0
        %5292 = vmatprep.subr.mxu0 0.0
        %5293 = vmatpush1.msra.mxu0 0.0
        %5294 = vmatprep.subr.mxu0 0.0
        %5295 = vmatpush1.msra.mxu0 0.0
        %5296 = vmatprep.subr.mxu0 0.0
        %5297 = vmatpush1.msra.mxu0 0.0
        %5298 = vmatprep.subr.mxu0 0.0
        %5299 = vmatpush1.msra.mxu0 0.0
        %5300 = vmatprep.mubr.f32.mxu0 0.0
        %5301 = vmatmul.mubr.f32.gmra.mrb[0].mxu0 %v5157
        %v5302 = vpop.f32.mrb[0].mxu0
        %v5303 = vadd.f32 %v5232, %v5302
        %v5304 = vpop.f32.mrb[0].mxu0
        %v5305 = vadd.f32 %v5234, %v5304
        %5306 = vdwg.mxu0
        %5307 = vst [vmem:[%s244] sm:$0xff] %v5303
        %5308 = vst [vmem:[%s244 + $0x8] sm:$0xff] %v5305
        %s5309 = sand.u32 %s159, 1
        %s5310 = scalar_lea.sflag [#allocation8], %s5309
        %s5311 = sand.u32 %s159, 1
        %s5312 = smul.addr %s5311, 16
        %s5313 = scalar_lea.vmem [#allocation7], %s5312
        // Predicated region
        $region45: #{tpu_custom_call.1} parent=43 // pred_check
          %p5314 = pneg %p169
        $region46: #{tpu_custom_call.1} parent=43 // pred_check_branch
          %5316 = sbr.rel (%p5314) target = $region48
        $region47: #{tpu_custom_call.1} parent=43 // pred_region
          %s5318 = ssub.s32 256, 256
          %5319 = vsyncadd %s5310, %s5318
          %s5320 = smul.addr %s20, 2
          %s5321 = smul.addr %s5320, 128
          %s5322 = scalar_lea.hbm %s6, %s5321
          %s5324 = sshll.u32 %s5313, 4
          %s5325 = int_to_ptr.vmem [resolvable:$true] %s5324
          %5327 = dma.vmem_to_hbm [thread:$0]  %s5325, 256, %s5322, %s5310
        $region48: #{tpu_custom_call.1} parent=43 // pred_fallthru
          _
      $region44: #{tpu_custom_call.1} parent=5 // pred_fallthru
        _
      %p5328 = scmp.le.s32.totalorder 2, %s15
      // Predicated region
      $region49: #{tpu_custom_call.1} parent=5 // pred_check
        %p5329 = pneg %p5328
      $region50: #{tpu_custom_call.1} parent=5 // pred_check_branch
        %5331 = sbr.rel (%p5329) target = $region52
      $region51: #{tpu_custom_call.1} parent=5 // pred_region
        %s5332 = ssub.s32 %s15, 2
        // Predicated region
        $region53: #{tpu_custom_call.1} parent=51 // pred_check
          %p5333 = pneg %p175
        $region54: #{tpu_custom_call.1} parent=51 // pred_check_branch
          %5335 = sbr.rel (%p5333) target = $region56
        $region55: #{tpu_custom_call.1} parent=51 // pred_region
          %s5336 = sand.u32 %s160, 1
          %s5337 = scalar_lea.sflag [#allocation8], %s5336
          %s5338 = sand.u32 %s160, 1
          %s5339 = smul.addr %s5338, 16
          %s5340 = scalar_lea.vmem [#allocation7], %s5339
          %5341 = dma.done %s5337, 256
        $region56: #{tpu_custom_call.1} parent=51 // pred_fallthru
          _
      $region52: #{tpu_custom_call.1} parent=5 // pred_fallthru
        _
    $region6: #{tpu_custom_call.1} parent=1 // loop_footer
      %s19 = sadd.s32 1, %s15
    $region7: #{tpu_custom_call.1} parent=1 // loop_footer_branch
      %14 = sbr.rel target = $region3
    $region8: #{tpu_custom_call.1} parent=1 // loop_exit
      _
    %5342 = vsyncpa [#allocation8], 1
    %s5343 = scalar_lea.sflag [#allocation8], 1
    %5344 = vsyncpa %s5343, 1

</llo_original>
